<compile_context>
chip_gen: v7x
topology: tpu7x:2x2x1
jax: 0.10.0
libtpu: 0.0.40
codegen_flags: <defaults>
</compile_context>

<pallas_src>
import functools

import jax
import jax.numpy as jnp
from jax.experimental import pallas as pl
from jax.experimental.pallas import tpu as pltpu


def _basic_block_kernel(x_ref, w1_ref, b1_ref, w2_ref, b2_ref, mask_ref,
                        out_ref, *, wp):
    # x_ref   : (1, Cin, L)   zero-padded image, flattened lane-dense
    #                         (L = round_up((H+2)*(W+2), 128))
    # w1_ref  : (9, Cout, Cin)  conv1 weights, BN1 scale folded, tap = kh*3+kw
    # b1_ref  : (Cout, 1)       folded BN1 bias (f32)
    # w2_ref  : (9, Cout, Cout) conv2 weights, BN2 scale folded
    # b2_ref  : (Cout, 1)       folded BN2 bias (f32)
    # mask_ref: (1, L)          1.0 at interior (valid output) lanes, else 0.0
    # out_ref : (1, Cout, L)    output in the same padded-flat coordinates
    cout = out_ref.shape[1]
    L = x_ref.shape[2]

    x = x_ref[0]                                        # (Cin, L)
    mask = mask_ref[...]                                # (1, L), f32

    # Tap lane offsets in padded-flat coordinates: d = (kh-1)*Wp + (kw-1).
    offsets = [(kh - 1) * wp + (kw - 1) for kh in range(3) for kw in range(3)]

    def shifted(v, d):
        # shifted[:, p] == v[:, p + d] for every valid (interior) lane p;
        # wraparound lanes only land on halo/pad positions, which are never
        # extracted (and are re-masked before conv2).
        if d == 0:
            return v
        return pltpu.roll(v, shift=(-d) % L, axis=1)    # XLU lane rotate

    def conv3x3(v, w_ref, acc_init):
        # v: (C, L) in model dtype; w_ref[t]: (Cout, C).  One MXU push per tap.
        acc = acc_init                                  # (Cout, L) f32
        for t, d in enumerate(offsets):
            acc = acc + jnp.dot(w_ref[t], shifted(v, d),
                                preferred_element_type=jnp.float32)
        return acc

    # conv1 + bn1 (folded) + relu.  Mask zeroes the halo / trailing-pad lanes
    # so the activation acts as conv2's zero-padded input (never leaves vregs).
    acc1_init = jnp.broadcast_to(b1_ref[...], (cout, L)).astype(jnp.float32)
    y1 = jnp.maximum(conv3x3(x, w1_ref, acc1_init), 0.0) * mask
    y1 = y1.astype(x.dtype)                             # MXU operand dtype

    # conv2 + bn2 (folded) + identity residual + relu.  Residual (x) already
    # has zeros on the halo, so adding the full padded slab is exact on the
    # interior lanes that the wrapper extracts.
    acc2_init = (jnp.broadcast_to(b2_ref[...], (cout, L)).astype(jnp.float32)
                 + x.astype(jnp.float32))
    y2 = jnp.maximum(conv3x3(y1, w2_ref, acc2_init), 0.0)
    out_ref[0] = y2.astype(out_ref.dtype)


def _fold_bn(gamma, beta, mean, var, eps=1e-5):
    scale = gamma / jnp.sqrt(var + eps)
    bias = beta - mean * scale
    return scale, bias


def _prep_weight(w_oihw, scale, dtype):
    """OIHW (Cout, Cin, 3, 3) -> (9, Cout, Cin) with BN scale folded, tap = kh*3+kw."""
    cout, cin, kh, kw = w_oihw.shape
    w = w_oihw * scale.reshape(cout, 1, 1, 1)
    w = jnp.transpose(w, (2, 3, 0, 1)).reshape(kh * kw, cout, cin)
    return w.astype(dtype)                              # keep model dtype for MXU


@jax.jit
def basic_block_forward(x_nchw, params):
    """BasicBlock forward (stride=1, downsample=None). Input/output are NCHW."""
    N, Cin, H, W = x_nchw.shape
    Cout = params["w1"].shape[0]
    assert Cin == Cout, "identity residual requires inplanes == planes"

    Hp, Wp = H + 2, W + 2
    HWp = Hp * Wp
    L = ((HWp + 127) // 128) * 128                      # lane-dense flat extent

    dtype = x_nchw.dtype
    s1, b1 = _fold_bn(params["bn1_gamma"], params["bn1_beta"],
                      params["bn1_mean"], params["bn1_var"])
    s2, b2 = _fold_bn(params["bn2_gamma"], params["bn2_beta"],
                      params["bn2_mean"], params["bn2_var"])
    w1 = _prep_weight(params["w1"], s1, dtype)          # (9, Cout, Cin)
    w2 = _prep_weight(params["w2"], s2, dtype)          # (9, Cout, Cout)
    b1c = b1.reshape(Cout, 1).astype(jnp.float32)
    b2c = b2.reshape(Cout, 1).astype(jnp.float32)

    # Wrapper-side layout plumbing: zero halo + flatten + pad lanes to L.
    xpad = jnp.pad(x_nchw, ((0, 0), (0, 0), (1, 1), (1, 1)))
    xf = jnp.pad(xpad.reshape(N, Cin, HWp), ((0, 0), (0, 0), (0, L - HWp)))

    # Interior-lane mask (valid conv output positions in padded-flat coords).
    m2d = jnp.zeros((Hp, Wp), jnp.float32).at[1:H + 1, 1:W + 1].set(1.0)
    mask = jnp.pad(m2d.reshape(HWp), (0, L - HWp)).reshape(1, L)

    itemsize = jnp.dtype(dtype).itemsize
    flops = 2 * N * H * W * 9 * (Cin * Cout + Cout * Cout)
    bytes_accessed = (N * Cin * L * itemsize + N * Cout * L * itemsize
                      + (w1.size + w2.size) * itemsize
                      + (b1c.size + b2c.size + mask.size) * 4)

    kernel = functools.partial(_basic_block_kernel, wp=Wp)

    out = pl.pallas_call(
        kernel,
        out_shape=jax.ShapeDtypeStruct((N, Cout, L), dtype),
        grid=(N,),
        in_specs=[
            pl.BlockSpec((1, Cin, L), lambda n: (n, 0, 0)),
            pl.BlockSpec((9, Cout, Cin), lambda n: (0, 0, 0)),
            pl.BlockSpec((Cout, 1), lambda n: (0, 0)),
            pl.BlockSpec((9, Cout, Cout), lambda n: (0, 0, 0)),
            pl.BlockSpec((Cout, 1), lambda n: (0, 0)),
            pl.BlockSpec((1, L), lambda n: (0, 0)),
        ],
        out_specs=pl.BlockSpec((1, Cout, L), lambda n: (n, 0, 0)),
        compiler_params=pltpu.CompilerParams(
            dimension_semantics=("parallel",),
            vmem_limit_bytes=32 * 1024 * 1024),
        cost_estimate=pl.CostEstimate(flops=flops, transcendentals=0,
                                      bytes_accessed=bytes_accessed),
    )(xf, w1, b1c, w2, b2c, mask)

    # Extract the interior (un-pad) — wrapper-side slice, free for XLA.
    out = out[:, :, :HWp].reshape(N, Cout, Hp, Wp)[:, :, 1:H + 1, 1:W + 1]
    return out


def _reference_forward(x_nchw, params):
    """Pure-JAX reference (XLA conv) for correctness checking."""
    dn = ("NCHW", "OIHW", "NCHW")

    def conv(v, w):
        return jax.lax.conv_general_dilated(v, w, (1, 1), ((1, 1), (1, 1)),
                                            dimension_numbers=dn)

    def bcast(v):
        return v.reshape(1, -1, 1, 1)

    s1, b1 = _fold_bn(params["bn1_gamma"], params["bn1_beta"],
                      params["bn1_mean"], params["bn1_var"])
    s2, b2 = _fold_bn(params["bn2_gamma"], params["bn2_beta"],
                      params["bn2_mean"], params["bn2_var"])
    out = jnp.maximum(conv(x_nchw, params["w1"]) * bcast(s1) + bcast(b1), 0.0)
    out = jnp.maximum(conv(out, params["w2"]) * bcast(s2) + bcast(b2) + x_nchw,
                      0.0)
    return out


if __name__ == "__main__":
    key = jax.random.PRNGKey(0)
    N, C, H, W = 2, 4, 16, 16          # inplanes = planes = 4, stride = 1
    planes = C

    k_x, k_w1, k_w2 = jax.random.split(key, 3)
    x = jax.random.normal(k_x, (N, C, H, W), dtype=jnp.float32)

    # Conv weights in PyTorch OIHW layout: (planes, C, 3, 3), bias=False.
    w1 = 0.1 * jax.random.normal(k_w1, (planes, C, 3, 3), dtype=jnp.float32)
    w2 = 0.1 * jax.random.normal(k_w2, (planes, planes, 3, 3), dtype=jnp.float32)

    params = {
        "w1": w1,
        "w2": w2,
        "bn1_gamma": 1.0 + 0.1 * jnp.arange(planes, dtype=jnp.float32),
        "bn1_beta": 0.05 * jnp.arange(planes, dtype=jnp.float32),
        "bn1_mean": 0.02 * jnp.arange(planes, dtype=jnp.float32),
        "bn1_var": 1.0 + 0.03 * jnp.arange(planes, dtype=jnp.float32),
        "bn2_gamma": 1.0 - 0.05 * jnp.arange(planes, dtype=jnp.float32),
        "bn2_beta": -0.02 * jnp.arange(planes, dtype=jnp.float32),
        "bn2_mean": 0.01 * jnp.arange(planes, dtype=jnp.float32),
        "bn2_var": 1.0 + 0.02 * jnp.arange(planes, dtype=jnp.float32),
    }

    out = jax.block_until_ready(basic_block_forward(x, params))
    ref = jax.block_until_ready(_reference_forward(x, params))

    assert out.shape == (N, planes, H, W)
    assert jnp.allclose(out, ref, atol=1e-4, rtol=1e-4), "mismatch vs reference"

    print("KERNEL_OK")
</pallas_src>

<mosaic_0001>
module attributes {stable_mosaic.version = 11 : i64} {
  func.func @_basic_block_kernel(%arg0: i32, %arg1: memref<1x4x384xf32, #tpu.memory_space<vmem>>, %arg2: memref<9x4x4xf32, #tpu.memory_space<vmem>>, %arg3: memref<4x1xf32, #tpu.memory_space<vmem>>, %arg4: memref<9x4x4xf32, #tpu.memory_space<vmem>>, %arg5: memref<4x1xf32, #tpu.memory_space<vmem>>, %arg6: memref<1x384xf32, #tpu.memory_space<vmem>>, %arg7: memref<1x4x384xf32, #tpu.memory_space<vmem>>) attributes {dimension_semantics = [#tpu.dimension_semantics<parallel>], iteration_bounds = array<i64: 2>, scalar_prefetch = 0 : i64, scratch_operands = 0 : i64, tpu.core_type = #tpu.core_type<tc>, window_params = [{transform_indices = @transform_0, window_bounds = array<i64: 1, 4, 384>}, {pipeline_mode = #tpu.pipeline_mode<synchronous>, transform_indices = @transform_1, window_bounds = array<i64: 9, 4, 4>}, {pipeline_mode = #tpu.pipeline_mode<synchronous>, transform_indices = @transform_2, window_bounds = array<i64: 4, 1>}, {pipeline_mode = #tpu.pipeline_mode<synchronous>, transform_indices = @transform_3, window_bounds = array<i64: 9, 4, 4>}, {pipeline_mode = #tpu.pipeline_mode<synchronous>, transform_indices = @transform_4, window_bounds = array<i64: 4, 1>}, {pipeline_mode = #tpu.pipeline_mode<synchronous>, transform_indices = @transform_5, window_bounds = array<i64: 1, 384>}, {transform_indices = @transform_6, window_bounds = array<i64: 1, 4, 384>}]} {
    %c0 = arith.constant 0 : index
    %c0_0 = arith.constant 0 : index
    %c0_1 = arith.constant 0 : index
    %0 = vector.load %arg1[%c0, %c0_0, %c0_1] : memref<1x4x384xf32, #tpu.memory_space<vmem>>, vector<1x4x384xf32>
    %1 = vector.shape_cast %0 : vector<1x4x384xf32> to vector<4x384xf32>
    %c0_2 = arith.constant 0 : index
    %c0_3 = arith.constant 0 : index
    %2 = vector.load %arg6[%c0_2, %c0_3] : memref<1x384xf32, #tpu.memory_space<vmem>>, vector<1x384xf32>
    %c0_4 = arith.constant 0 : index
    %c0_5 = arith.constant 0 : index
    %3 = vector.load %arg3[%c0_4, %c0_5] : memref<4x1xf32, #tpu.memory_space<vmem>>, vector<4x1xf32>
    %4 = vector.shape_cast %3 : vector<4x1xf32> to vector<4x1xf32>
    %5 = vector.broadcast %4 : vector<4x1xf32> to vector<4x384xf32>
    %c0_6 = arith.constant 0 : index
    %c0_7 = arith.constant 0 : index
    %c0_8 = arith.constant 0 : index
    %6 = vector.load %arg2[%c0_6, %c0_7, %c0_8] : memref<9x4x4xf32, #tpu.memory_space<vmem>>, vector<1x4x4xf32>
    %7 = vector.shape_cast %6 : vector<1x4x4xf32> to vector<4x4xf32>
    %c19_i32 = arith.constant 19 : i32
    %8 = tpu.dynamic_rotate %1 by %c19_i32 dim 1 : vector<4x384xf32>, i32 -> vector<4x384xf32>
    %cst = arith.constant dense<0.000000e+00> : vector<4x384xf32>
    %9 = tpu.matmul %7, %8, %cst {dimension_numbers = #tpu.dot_dimension_numbers<[1], [0], [0], [1], [0, 0, 1, 1], [], []>} : vector<4x4xf32>, vector<4x384xf32>, vector<4x384xf32> -> vector<4x384xf32>
    %10 = arith.addf %5, %9 : vector<4x384xf32>
    %c1 = arith.constant 1 : index
    %c0_9 = arith.constant 0 : index
    %c0_10 = arith.constant 0 : index
    %11 = vector.load %arg2[%c1, %c0_9, %c0_10] : memref<9x4x4xf32, #tpu.memory_space<vmem>>, vector<1x4x4xf32>
    %12 = vector.shape_cast %11 : vector<1x4x4xf32> to vector<4x4xf32>
    %c18_i32 = arith.constant 18 : i32
    %13 = tpu.dynamic_rotate %1 by %c18_i32 dim 1 : vector<4x384xf32>, i32 -> vector<4x384xf32>
    %cst_11 = arith.constant dense<0.000000e+00> : vector<4x384xf32>
    %14 = tpu.matmul %12, %13, %cst_11 {dimension_numbers = #tpu.dot_dimension_numbers<[1], [0], [0], [1], [0, 0, 1, 1], [], []>} : vector<4x4xf32>, vector<4x384xf32>, vector<4x384xf32> -> vector<4x384xf32>
    %15 = arith.addf %10, %14 : vector<4x384xf32>
    %c2 = arith.constant 2 : index
    %c0_12 = arith.constant 0 : index
    %c0_13 = arith.constant 0 : index
    %16 = vector.load %arg2[%c2, %c0_12, %c0_13] : memref<9x4x4xf32, #tpu.memory_space<vmem>>, vector<1x4x4xf32>
    %17 = vector.shape_cast %16 : vector<1x4x4xf32> to vector<4x4xf32>
    %c17_i32 = arith.constant 17 : i32
    %18 = tpu.dynamic_rotate %1 by %c17_i32 dim 1 : vector<4x384xf32>, i32 -> vector<4x384xf32>
    %cst_14 = arith.constant dense<0.000000e+00> : vector<4x384xf32>
    %19 = tpu.matmul %17, %18, %cst_14 {dimension_numbers = #tpu.dot_dimension_numbers<[1], [0], [0], [1], [0, 0, 1, 1], [], []>} : vector<4x4xf32>, vector<4x384xf32>, vector<4x384xf32> -> vector<4x384xf32>
    %20 = arith.addf %15, %19 : vector<4x384xf32>
    %c3 = arith.constant 3 : index
    %c0_15 = arith.constant 0 : index
    %c0_16 = arith.constant 0 : index
    %21 = vector.load %arg2[%c3, %c0_15, %c0_16] : memref<9x4x4xf32, #tpu.memory_space<vmem>>, vector<1x4x4xf32>
    %22 = vector.shape_cast %21 : vector<1x4x4xf32> to vector<4x4xf32>
    %c1_i32 = arith.constant 1 : i32
    %23 = tpu.dynamic_rotate %1 by %c1_i32 dim 1 : vector<4x384xf32>, i32 -> vector<4x384xf32>
    %cst_17 = arith.constant dense<0.000000e+00> : vector<4x384xf32>
    %24 = tpu.matmul %22, %23, %cst_17 {dimension_numbers = #tpu.dot_dimension_numbers<[1], [0], [0], [1], [0, 0, 1, 1], [], []>} : vector<4x4xf32>, vector<4x384xf32>, vector<4x384xf32> -> vector<4x384xf32>
    %25 = arith.addf %20, %24 : vector<4x384xf32>
    %c4 = arith.constant 4 : index
    %c0_18 = arith.constant 0 : index
    %c0_19 = arith.constant 0 : index
    %26 = vector.load %arg2[%c4, %c0_18, %c0_19] : memref<9x4x4xf32, #tpu.memory_space<vmem>>, vector<1x4x4xf32>
    %27 = vector.shape_cast %26 : vector<1x4x4xf32> to vector<4x4xf32>
    %cst_20 = arith.constant dense<0.000000e+00> : vector<4x384xf32>
    %28 = tpu.matmul %27, %1, %cst_20 {dimension_numbers = #tpu.dot_dimension_numbers<[1], [0], [0], [1], [0, 0, 1, 1], [], []>} : vector<4x4xf32>, vector<4x384xf32>, vector<4x384xf32> -> vector<4x384xf32>
    %29 = arith.addf %25, %28 : vector<4x384xf32>
    %c5 = arith.constant 5 : index
    %c0_21 = arith.constant 0 : index
    %c0_22 = arith.constant 0 : index
    %30 = vector.load %arg2[%c5, %c0_21, %c0_22] : memref<9x4x4xf32, #tpu.memory_space<vmem>>, vector<1x4x4xf32>
    %31 = vector.shape_cast %30 : vector<1x4x4xf32> to vector<4x4xf32>
    %c383_i32 = arith.constant 383 : i32
    %32 = tpu.dynamic_rotate %1 by %c383_i32 dim 1 : vector<4x384xf32>, i32 -> vector<4x384xf32>
    %cst_23 = arith.constant dense<0.000000e+00> : vector<4x384xf32>
    %33 = tpu.matmul %31, %32, %cst_23 {dimension_numbers = #tpu.dot_dimension_numbers<[1], [0], [0], [1], [0, 0, 1, 1], [], []>} : vector<4x4xf32>, vector<4x384xf32>, vector<4x384xf32> -> vector<4x384xf32>
    %34 = arith.addf %29, %33 : vector<4x384xf32>
    %c6 = arith.constant 6 : index
    %c0_24 = arith.constant 0 : index
    %c0_25 = arith.constant 0 : index
    %35 = vector.load %arg2[%c6, %c0_24, %c0_25] : memref<9x4x4xf32, #tpu.memory_space<vmem>>, vector<1x4x4xf32>
    %36 = vector.shape_cast %35 : vector<1x4x4xf32> to vector<4x4xf32>
    %c367_i32 = arith.constant 367 : i32
    %37 = tpu.dynamic_rotate %1 by %c367_i32 dim 1 : vector<4x384xf32>, i32 -> vector<4x384xf32>
    %cst_26 = arith.constant dense<0.000000e+00> : vector<4x384xf32>
    %38 = tpu.matmul %36, %37, %cst_26 {dimension_numbers = #tpu.dot_dimension_numbers<[1], [0], [0], [1], [0, 0, 1, 1], [], []>} : vector<4x4xf32>, vector<4x384xf32>, vector<4x384xf32> -> vector<4x384xf32>
    %39 = arith.addf %34, %38 : vector<4x384xf32>
    %c7 = arith.constant 7 : index
    %c0_27 = arith.constant 0 : index
    %c0_28 = arith.constant 0 : index
    %40 = vector.load %arg2[%c7, %c0_27, %c0_28] : memref<9x4x4xf32, #tpu.memory_space<vmem>>, vector<1x4x4xf32>
    %41 = vector.shape_cast %40 : vector<1x4x4xf32> to vector<4x4xf32>
    %c366_i32 = arith.constant 366 : i32
    %42 = tpu.dynamic_rotate %1 by %c366_i32 dim 1 : vector<4x384xf32>, i32 -> vector<4x384xf32>
    %cst_29 = arith.constant dense<0.000000e+00> : vector<4x384xf32>
    %43 = tpu.matmul %41, %42, %cst_29 {dimension_numbers = #tpu.dot_dimension_numbers<[1], [0], [0], [1], [0, 0, 1, 1], [], []>} : vector<4x4xf32>, vector<4x384xf32>, vector<4x384xf32> -> vector<4x384xf32>
    %44 = arith.addf %39, %43 : vector<4x384xf32>
    %c8 = arith.constant 8 : index
    %c0_30 = arith.constant 0 : index
    %c0_31 = arith.constant 0 : index
    %45 = vector.load %arg2[%c8, %c0_30, %c0_31] : memref<9x4x4xf32, #tpu.memory_space<vmem>>, vector<1x4x4xf32>
    %46 = vector.shape_cast %45 : vector<1x4x4xf32> to vector<4x4xf32>
    %c365_i32 = arith.constant 365 : i32
    %47 = tpu.dynamic_rotate %1 by %c365_i32 dim 1 : vector<4x384xf32>, i32 -> vector<4x384xf32>
    %cst_32 = arith.constant dense<0.000000e+00> : vector<4x384xf32>
    %48 = tpu.matmul %46, %47, %cst_32 {dimension_numbers = #tpu.dot_dimension_numbers<[1], [0], [0], [1], [0, 0, 1, 1], [], []>} : vector<4x4xf32>, vector<4x384xf32>, vector<4x384xf32> -> vector<4x384xf32>
    %49 = arith.addf %44, %48 : vector<4x384xf32>
    %cst_33 = arith.constant 0.000000e+00 : f32
    %50 = vector.broadcast %cst_33 : f32 to vector<4x384xf32>
    %51 = arith.maximumf %49, %50 : vector<4x384xf32>
    %52 = vector.broadcast %2 : vector<1x384xf32> to vector<4x384xf32>
    %53 = arith.mulf %51, %52 : vector<4x384xf32>
    %c0_34 = arith.constant 0 : index
    %c0_35 = arith.constant 0 : index
    %54 = vector.load %arg5[%c0_34, %c0_35] : memref<4x1xf32, #tpu.memory_space<vmem>>, vector<4x1xf32>
    %55 = vector.shape_cast %54 : vector<4x1xf32> to vector<4x1xf32>
    %56 = vector.broadcast %55 : vector<4x1xf32> to vector<4x384xf32>
    %57 = arith.addf %56, %1 : vector<4x384xf32>
    %c0_36 = arith.constant 0 : index
    %c0_37 = arith.constant 0 : index
    %c0_38 = arith.constant 0 : index
    %58 = vector.load %arg4[%c0_36, %c0_37, %c0_38] : memref<9x4x4xf32, #tpu.memory_space<vmem>>, vector<1x4x4xf32>
    %59 = vector.shape_cast %58 : vector<1x4x4xf32> to vector<4x4xf32>
    %c19_i32_39 = arith.constant 19 : i32
    %60 = tpu.dynamic_rotate %53 by %c19_i32_39 dim 1 : vector<4x384xf32>, i32 -> vector<4x384xf32>
    %cst_40 = arith.constant dense<0.000000e+00> : vector<4x384xf32>
    %61 = tpu.matmul %59, %60, %cst_40 {dimension_numbers = #tpu.dot_dimension_numbers<[1], [0], [0], [1], [0, 0, 1, 1], [], []>} : vector<4x4xf32>, vector<4x384xf32>, vector<4x384xf32> -> vector<4x384xf32>
    %62 = arith.addf %57, %61 : vector<4x384xf32>
    %c1_41 = arith.constant 1 : index
    %c0_42 = arith.constant 0 : index
    %c0_43 = arith.constant 0 : index
    %63 = vector.load %arg4[%c1_41, %c0_42, %c0_43] : memref<9x4x4xf32, #tpu.memory_space<vmem>>, vector<1x4x4xf32>
    %64 = vector.shape_cast %63 : vector<1x4x4xf32> to vector<4x4xf32>
    %c18_i32_44 = arith.constant 18 : i32
    %65 = tpu.dynamic_rotate %53 by %c18_i32_44 dim 1 : vector<4x384xf32>, i32 -> vector<4x384xf32>
    %cst_45 = arith.constant dense<0.000000e+00> : vector<4x384xf32>
    %66 = tpu.matmul %64, %65, %cst_45 {dimension_numbers = #tpu.dot_dimension_numbers<[1], [0], [0], [1], [0, 0, 1, 1], [], []>} : vector<4x4xf32>, vector<4x384xf32>, vector<4x384xf32> -> vector<4x384xf32>
    %67 = arith.addf %62, %66 : vector<4x384xf32>
    %c2_46 = arith.constant 2 : index
    %c0_47 = arith.constant 0 : index
    %c0_48 = arith.constant 0 : index
    %68 = vector.load %arg4[%c2_46, %c0_47, %c0_48] : memref<9x4x4xf32, #tpu.memory_space<vmem>>, vector<1x4x4xf32>
    %69 = vector.shape_cast %68 : vector<1x4x4xf32> to vector<4x4xf32>
    %c17_i32_49 = arith.constant 17 : i32
    %70 = tpu.dynamic_rotate %53 by %c17_i32_49 dim 1 : vector<4x384xf32>, i32 -> vector<4x384xf32>
    %cst_50 = arith.constant dense<0.000000e+00> : vector<4x384xf32>
    %71 = tpu.matmul %69, %70, %cst_50 {dimension_numbers = #tpu.dot_dimension_numbers<[1], [0], [0], [1], [0, 0, 1, 1], [], []>} : vector<4x4xf32>, vector<4x384xf32>, vector<4x384xf32> -> vector<4x384xf32>
    %72 = arith.addf %67, %71 : vector<4x384xf32>
    %c3_51 = arith.constant 3 : index
    %c0_52 = arith.constant 0 : index
    %c0_53 = arith.constant 0 : index
    %73 = vector.load %arg4[%c3_51, %c0_52, %c0_53] : memref<9x4x4xf32, #tpu.memory_space<vmem>>, vector<1x4x4xf32>
    %74 = vector.shape_cast %73 : vector<1x4x4xf32> to vector<4x4xf32>
    %c1_i32_54 = arith.constant 1 : i32
    %75 = tpu.dynamic_rotate %53 by %c1_i32_54 dim 1 : vector<4x384xf32>, i32 -> vector<4x384xf32>
    %cst_55 = arith.constant dense<0.000000e+00> : vector<4x384xf32>
    %76 = tpu.matmul %74, %75, %cst_55 {dimension_numbers = #tpu.dot_dimension_numbers<[1], [0], [0], [1], [0, 0, 1, 1], [], []>} : vector<4x4xf32>, vector<4x384xf32>, vector<4x384xf32> -> vector<4x384xf32>
    %77 = arith.addf %72, %76 : vector<4x384xf32>
    %c4_56 = arith.constant 4 : index
    %c0_57 = arith.constant 0 : index
    %c0_58 = arith.constant 0 : index
    %78 = vector.load %arg4[%c4_56, %c0_57, %c0_58] : memref<9x4x4xf32, #tpu.memory_space<vmem>>, vector<1x4x4xf32>
    %79 = vector.shape_cast %78 : vector<1x4x4xf32> to vector<4x4xf32>
    %cst_59 = arith.constant dense<0.000000e+00> : vector<4x384xf32>
    %80 = tpu.matmul %79, %53, %cst_59 {dimension_numbers = #tpu.dot_dimension_numbers<[1], [0], [0], [1], [0, 0, 1, 1], [], []>} : vector<4x4xf32>, vector<4x384xf32>, vector<4x384xf32> -> vector<4x384xf32>
    %81 = arith.addf %77, %80 : vector<4x384xf32>
    %c5_60 = arith.constant 5 : index
    %c0_61 = arith.constant 0 : index
    %c0_62 = arith.constant 0 : index
    %82 = vector.load %arg4[%c5_60, %c0_61, %c0_62] : memref<9x4x4xf32, #tpu.memory_space<vmem>>, vector<1x4x4xf32>
    %83 = vector.shape_cast %82 : vector<1x4x4xf32> to vector<4x4xf32>
    %c383_i32_63 = arith.constant 383 : i32
    %84 = tpu.dynamic_rotate %53 by %c383_i32_63 dim 1 : vector<4x384xf32>, i32 -> vector<4x384xf32>
    %cst_64 = arith.constant dense<0.000000e+00> : vector<4x384xf32>
    %85 = tpu.matmul %83, %84, %cst_64 {dimension_numbers = #tpu.dot_dimension_numbers<[1], [0], [0], [1], [0, 0, 1, 1], [], []>} : vector<4x4xf32>, vector<4x384xf32>, vector<4x384xf32> -> vector<4x384xf32>
    %86 = arith.addf %81, %85 : vector<4x384xf32>
    %c6_65 = arith.constant 6 : index
    %c0_66 = arith.constant 0 : index
    %c0_67 = arith.constant 0 : index
    %87 = vector.load %arg4[%c6_65, %c0_66, %c0_67] : memref<9x4x4xf32, #tpu.memory_space<vmem>>, vector<1x4x4xf32>
    %88 = vector.shape_cast %87 : vector<1x4x4xf32> to vector<4x4xf32>
    %c367_i32_68 = arith.constant 367 : i32
    %89 = tpu.dynamic_rotate %53 by %c367_i32_68 dim 1 : vector<4x384xf32>, i32 -> vector<4x384xf32>
    %cst_69 = arith.constant dense<0.000000e+00> : vector<4x384xf32>
    %90 = tpu.matmul %88, %89, %cst_69 {dimension_numbers = #tpu.dot_dimension_numbers<[1], [0], [0], [1], [0, 0, 1, 1], [], []>} : vector<4x4xf32>, vector<4x384xf32>, vector<4x384xf32> -> vector<4x384xf32>
    %91 = arith.addf %86, %90 : vector<4x384xf32>
    %c7_70 = arith.constant 7 : index
    %c0_71 = arith.constant 0 : index
    %c0_72 = arith.constant 0 : index
    %92 = vector.load %arg4[%c7_70, %c0_71, %c0_72] : memref<9x4x4xf32, #tpu.memory_space<vmem>>, vector<1x4x4xf32>
    %93 = vector.shape_cast %92 : vector<1x4x4xf32> to vector<4x4xf32>
    %c366_i32_73 = arith.constant 366 : i32
    %94 = tpu.dynamic_rotate %53 by %c366_i32_73 dim 1 : vector<4x384xf32>, i32 -> vector<4x384xf32>
    %cst_74 = arith.constant dense<0.000000e+00> : vector<4x384xf32>
    %95 = tpu.matmul %93, %94, %cst_74 {dimension_numbers = #tpu.dot_dimension_numbers<[1], [0], [0], [1], [0, 0, 1, 1], [], []>} : vector<4x4xf32>, vector<4x384xf32>, vector<4x384xf32> -> vector<4x384xf32>
    %96 = arith.addf %91, %95 : vector<4x384xf32>
    %c8_75 = arith.constant 8 : index
    %c0_76 = arith.constant 0 : index
    %c0_77 = arith.constant 0 : index
    %97 = vector.load %arg4[%c8_75, %c0_76, %c0_77] : memref<9x4x4xf32, #tpu.memory_space<vmem>>, vector<1x4x4xf32>
    %98 = vector.shape_cast %97 : vector<1x4x4xf32> to vector<4x4xf32>
    %c365_i32_78 = arith.constant 365 : i32
    %99 = tpu.dynamic_rotate %53 by %c365_i32_78 dim 1 : vector<4x384xf32>, i32 -> vector<4x384xf32>
    %cst_79 = arith.constant dense<0.000000e+00> : vector<4x384xf32>
    %100 = tpu.matmul %98, %99, %cst_79 {dimension_numbers = #tpu.dot_dimension_numbers<[1], [0], [0], [1], [0, 0, 1, 1], [], []>} : vector<4x4xf32>, vector<4x384xf32>, vector<4x384xf32> -> vector<4x384xf32>
    %101 = arith.addf %96, %100 : vector<4x384xf32>
    %cst_80 = arith.constant 0.000000e+00 : f32
    %102 = vector.broadcast %cst_80 : f32 to vector<4x384xf32>
    %103 = arith.maximumf %101, %102 : vector<4x384xf32>
    %c0_81 = arith.constant 0 : index
    %c0_82 = arith.constant 0 : index
    %c0_83 = arith.constant 0 : index
    %104 = vector.load %arg7[%c0_81, %c0_82, %c0_83] : memref<1x4x384xf32, #tpu.memory_space<vmem>>, vector<1x4x384xf32>
    %105 = vector.shape_cast %104 : vector<1x4x384xf32> to vector<4x384xf32>
    %106 = vector.shape_cast %103 : vector<4x384xf32> to vector<1x4x384xf32>
    tpu.vector_store %arg7[%c0_81, %c0_82, %c0_83], %106 {strides = array<i32>} : memref<1x4x384xf32, #tpu.memory_space<vmem>>, vector<1x4x384xf32>,
    return
  }
  func.func @transform_0(%arg0: i32) -> (i32, i32, i32) {
    %c0_i32 = arith.constant 0 : i32
    %c0_i32_0 = arith.constant 0 : i32
    %c0_i32_1 = arith.constant 0 : i32
    return %arg0, %c0_i32, %c0_i32_0 : i32, i32, i32
  }
  func.func @transform_1(%arg0: i32) -> (i32, i32, i32) {
    %c0_i32 = arith.constant 0 : i32
    %c0_i32_0 = arith.constant 0 : i32
    %c0_i32_1 = arith.constant 0 : i32
    %c0_i32_2 = arith.constant 0 : i32
    return %c0_i32, %c0_i32_0, %c0_i32_1 : i32, i32, i32
  }
  func.func @transform_2(%arg0: i32) -> (i32, i32) {
    %c0_i32 = arith.constant 0 : i32
    %c0_i32_0 = arith.constant 0 : i32
    %c0_i32_1 = arith.constant 0 : i32
    return %c0_i32, %c0_i32_0 : i32, i32
  }
  func.func @transform_3(%arg0: i32) -> (i32, i32, i32) {
    %c0_i32 = arith.constant 0 : i32
    %c0_i32_0 = arith.constant 0 : i32
    %c0_i32_1 = arith.constant 0 : i32
    %c0_i32_2 = arith.constant 0 : i32
    return %c0_i32, %c0_i32_0, %c0_i32_1 : i32, i32, i32
  }
  func.func @transform_4(%arg0: i32) -> (i32, i32) {
    %c0_i32 = arith.constant 0 : i32
    %c0_i32_0 = arith.constant 0 : i32
    %c0_i32_1 = arith.constant 0 : i32
    return %c0_i32, %c0_i32_0 : i32, i32
  }
  func.func @transform_5(%arg0: i32) -> (i32, i32) {
    %c0_i32 = arith.constant 0 : i32
    %c0_i32_0 = arith.constant 0 : i32
    %c0_i32_1 = arith.constant 0 : i32
    return %c0_i32, %c0_i32_0 : i32, i32
  }
  func.func @transform_6(%arg0: i32) -> (i32, i32, i32) {
    %c0_i32 = arith.constant 0 : i32
    %c0_i32_0 = arith.constant 0 : i32
    %c0_i32_1 = arith.constant 0 : i32
    return %arg0, %c0_i32, %c0_i32_0 : i32, i32, i32
  }
}

</mosaic_0001>

<llo_original>
// kernel: basic_block_forward.1
$region0: #{basic_block_forward.1}
  #allocation0 [shape = 'u32[]', space=smem, size = 0x4, offset = 0x4, fixed_abs, tag = 'smem constant byte address 0x4 - core index']
  #allocation1 [shape = 'u32[144,128]{1,0:T(1,128)}', space=vmem, size = 0x12000, scoped, tag = 'internal scratch']
  %s0 = inlined_call_operand.vmem [shape: f32[2,4,384], index: 0, kind: input, shape index: {}]
  %s1 = inlined_call_operand.vmem [shape: f32[9,4,4], index: 1, kind: input, shape index: {}]
  %s2 = inlined_call_operand.vmem [shape: f32[4,1], index: 2, kind: input, shape index: {}]
  %s3 = inlined_call_operand.vmem [shape: f32[9,4,4], index: 3, kind: input, shape index: {}]
  %s4 = inlined_call_operand.vmem [shape: f32[4,1], index: 4, kind: input, shape index: {}]
  %s5 = inlined_call_operand.vmem [shape: f32[1,384], index: 5, kind: input, shape index: {}]
  %s6 = inlined_call_operand.vmem [shape: f32[2,4,384], index: 6, kind: output, shape index: {}]
  %s7 = sld [smem:[#allocation0]]
  $region57: #{basic_block_forward.1} parent=0
    _
  %s9 = ssub.s32 1, %s7
  %s10 = scalar_select 0, %s9, %s7
  loop: start=0, step=1, limit=4
  $region2: #{basic_block_forward.1} parent=0 // loop_pre_header
    _
  $region3: #{basic_block_forward.1} parent=0 // loop_header
    %s12 = sphi 0, %s16
    %p13 = scmp.ge.s32.totalorder %s12, 4
    %s22 = sphi 0, %s24
    %s25 = sphi 0, %s22
    %s26 = sphi 0, %s25
    %s42 = sphi 0, %s26
    %s46 = sphi 0, %s46
    %s48 = sphi 0, %s46
    %s49 = sphi 0, %s48
    %s63 = sphi 0, %s49
    %s67 = sphi 0, %s67
    %s69 = sphi 0, %s67
    %s70 = sphi 0, %s69
    %s84 = sphi 0, %s70
    %s88 = sphi 0, %s88
    %s90 = sphi 0, %s88
    %s91 = sphi 0, %s90
    %s105 = sphi 0, %s91
    %s109 = sphi 0, %s109
    %s111 = sphi 0, %s109
    %s112 = sphi 0, %s111
    %s126 = sphi 0, %s112
    %s130 = sphi 0, %s130
    %s132 = sphi 0, %s130
    %s133 = sphi 0, %s132
    %s147 = sphi 0, %s133
    %s153 = sphi 0, %s155
    %s156 = sphi 0, %s153
    %s157 = sphi 0, %s156
    %s173 = sphi 0, %s157
  $region4: #{basic_block_forward.1} parent=0 // loop_header_branch
    %15 = sbr.rel (%p13) target = $region8
  $region5: #{basic_block_forward.1} parent=0 // loop_body
    %s17 = ssub.s32 %s12, 1
    %s18 = ssub.s32 %s12, 2
    %s19 = sadd.s32 %s12, 1
    %s20 = ssub.s32 %s12, %s19
    %p21 = scmp.eq.s32.totalorder %s20, 0
    %s23 = sadd.s32 %s22, 1
    %s24 = scalar_select %p21, %s22, %s23
    %p27 = pneg %p21
    %p28 = scmp.eq.s32.totalorder %s12, 1
    %p29 = por %p27, %p28
    %p30 = scmp.ne.s32.totalorder %s22, %s25
    %p31 = scmp.eq.s32.totalorder %s12, 0
    %p32 = por %p30, %p31
    %p33 = scmp.ne.s32.totalorder %s22, %s25
    %p34 = scmp.eq.s32.totalorder %s17, 1
    %p35 = por %p33, %p34
    %p36 = scmp.ne.s32.totalorder %s25, %s26
    %p37 = scmp.eq.s32.totalorder %s17, 0
    %p38 = por %p36, %p37
    %p39 = scmp.ne.s32.totalorder %s25, %s26
    %p40 = scmp.eq.s32.totalorder %s18, 1
    %p41 = por %p39, %p40
    %p43 = scmp.ne.s32.totalorder %s26, %s42
    %p44 = scmp.eq.s32.totalorder %s18, 0
    %p45 = por %p43, %p44
    %s47 = sadd.s32 %s46, 1
    %p50 = scmp.eq.s32.totalorder %s12, 1
    %p51 = scmp.ne.s32.totalorder %s46, %s48
    %p52 = scmp.eq.s32.totalorder %s12, 0
    %p53 = por %p51, %p52
    %p54 = scmp.ne.s32.totalorder %s46, %s48
    %p55 = scmp.eq.s32.totalorder %s17, 1
    %p56 = por %p54, %p55
    %p57 = scmp.ne.s32.totalorder %s48, %s49
    %p58 = scmp.eq.s32.totalorder %s17, 0
    %p59 = por %p57, %p58
    %p60 = scmp.ne.s32.totalorder %s48, %s49
    %p61 = scmp.eq.s32.totalorder %s18, 1
    %p62 = por %p60, %p61
    %p64 = scmp.ne.s32.totalorder %s49, %s63
    %p65 = scmp.eq.s32.totalorder %s18, 0
    %p66 = por %p64, %p65
    %s68 = sadd.s32 %s67, 1
    %p71 = scmp.eq.s32.totalorder %s12, 1
    %p72 = scmp.ne.s32.totalorder %s67, %s69
    %p73 = scmp.eq.s32.totalorder %s12, 0
    %p74 = por %p72, %p73
    %p75 = scmp.ne.s32.totalorder %s67, %s69
    %p76 = scmp.eq.s32.totalorder %s17, 1
    %p77 = por %p75, %p76
    %p78 = scmp.ne.s32.totalorder %s69, %s70
    %p79 = scmp.eq.s32.totalorder %s17, 0
    %p80 = por %p78, %p79
    %p81 = scmp.ne.s32.totalorder %s69, %s70
    %p82 = scmp.eq.s32.totalorder %s18, 1
    %p83 = por %p81, %p82
    %p85 = scmp.ne.s32.totalorder %s70, %s84
    %p86 = scmp.eq.s32.totalorder %s18, 0
    %p87 = por %p85, %p86
    %s89 = sadd.s32 %s88, 1
    %p92 = scmp.eq.s32.totalorder %s12, 1
    %p93 = scmp.ne.s32.totalorder %s88, %s90
    %p94 = scmp.eq.s32.totalorder %s12, 0
    %p95 = por %p93, %p94
    %p96 = scmp.ne.s32.totalorder %s88, %s90
    %p97 = scmp.eq.s32.totalorder %s17, 1
    %p98 = por %p96, %p97
    %p99 = scmp.ne.s32.totalorder %s90, %s91
    %p100 = scmp.eq.s32.totalorder %s17, 0
    %p101 = por %p99, %p100
    %p102 = scmp.ne.s32.totalorder %s90, %s91
    %p103 = scmp.eq.s32.totalorder %s18, 1
    %p104 = por %p102, %p103
    %p106 = scmp.ne.s32.totalorder %s91, %s105
    %p107 = scmp.eq.s32.totalorder %s18, 0
    %p108 = por %p106, %p107
    %s110 = sadd.s32 %s109, 1
    %p113 = scmp.eq.s32.totalorder %s12, 1
    %p114 = scmp.ne.s32.totalorder %s109, %s111
    %p115 = scmp.eq.s32.totalorder %s12, 0
    %p116 = por %p114, %p115
    %p117 = scmp.ne.s32.totalorder %s109, %s111
    %p118 = scmp.eq.s32.totalorder %s17, 1
    %p119 = por %p117, %p118
    %p120 = scmp.ne.s32.totalorder %s111, %s112
    %p121 = scmp.eq.s32.totalorder %s17, 0
    %p122 = por %p120, %p121
    %p123 = scmp.ne.s32.totalorder %s111, %s112
    %p124 = scmp.eq.s32.totalorder %s18, 1
    %p125 = por %p123, %p124
    %p127 = scmp.ne.s32.totalorder %s112, %s126
    %p128 = scmp.eq.s32.totalorder %s18, 0
    %p129 = por %p127, %p128
    %s131 = sadd.s32 %s130, 1
    %p134 = scmp.eq.s32.totalorder %s12, 1
    %p135 = scmp.ne.s32.totalorder %s130, %s132
    %p136 = scmp.eq.s32.totalorder %s12, 0
    %p137 = por %p135, %p136
    %p138 = scmp.ne.s32.totalorder %s130, %s132
    %p139 = scmp.eq.s32.totalorder %s17, 1
    %p140 = por %p138, %p139
    %p141 = scmp.ne.s32.totalorder %s132, %s133
    %p142 = scmp.eq.s32.totalorder %s17, 0
    %p143 = por %p141, %p142
    %p144 = scmp.ne.s32.totalorder %s132, %s133
    %p145 = scmp.eq.s32.totalorder %s18, 1
    %p146 = por %p144, %p145
    %p148 = scmp.ne.s32.totalorder %s133, %s147
    %p149 = scmp.eq.s32.totalorder %s18, 0
    %p150 = por %p148, %p149
    %s151 = ssub.s32 %s12, %s19
    %p152 = scmp.eq.s32.totalorder %s151, 0
    %s154 = sadd.s32 %s153, 1
    %s155 = scalar_select %p152, %s153, %s154
    %p158 = pneg %p152
    %p159 = scmp.eq.s32.totalorder %s12, 1
    %p160 = por %p158, %p159
    %p161 = scmp.ne.s32.totalorder %s153, %s156
    %p162 = scmp.eq.s32.totalorder %s12, 0
    %p163 = por %p161, %p162
    %p164 = scmp.ne.s32.totalorder %s153, %s156
    %p165 = scmp.eq.s32.totalorder %s17, 1
    %p166 = por %p164, %p165
    %p167 = scmp.ne.s32.totalorder %s156, %s157
    %p168 = scmp.eq.s32.totalorder %s17, 0
    %p169 = por %p167, %p168
    %p170 = scmp.ne.s32.totalorder %s156, %s157
    %p171 = scmp.eq.s32.totalorder %s18, 1
    %p172 = por %p170, %p171
    %p174 = scmp.ne.s32.totalorder %s157, %s173
    %p175 = scmp.eq.s32.totalorder %s18, 0
    %p176 = por %p174, %p175
    %p177 = scmp.le.s32.totalorder 1, %s12
    %p178 = scmp.lt.s32.totalorder %s12, 3
    %p179 = pnand %p177, %p178
    %p180 = pneg %p179
    // Predicated region
    $region9: #{basic_block_forward.1} parent=5 // pred_check
      _
    $region10: #{basic_block_forward.1} parent=5 // pred_check_branch
      %182 = sbr.rel (%p179) target = $region12
    $region11: #{basic_block_forward.1} parent=5 // pred_region
      %s183 = ssub.s32 %s12, 1
      // Predicated region
      $region13: #{basic_block_forward.1} parent=11 // pred_check
        %p184 = pneg %p59
      $region14: #{basic_block_forward.1} parent=11 // pred_check_branch
        %186 = sbr.rel (%p184) target = $region16
      $region15: #{basic_block_forward.1} parent=11 // pred_region
        _
      $region16: #{basic_block_forward.1} parent=11 // pred_fallthru
        _
      // Predicated region
      $region17: #{basic_block_forward.1} parent=11 // pred_check
        %p187 = pneg %p80
      $region18: #{basic_block_forward.1} parent=11 // pred_check_branch
        %189 = sbr.rel (%p187) target = $region20
      $region19: #{basic_block_forward.1} parent=11 // pred_region
        _
      $region20: #{basic_block_forward.1} parent=11 // pred_fallthru
        _
      // Predicated region
      $region21: #{basic_block_forward.1} parent=11 // pred_check
        %p190 = pneg %p101
      $region22: #{basic_block_forward.1} parent=11 // pred_check_branch
        %192 = sbr.rel (%p190) target = $region24
      $region23: #{basic_block_forward.1} parent=11 // pred_region
        _
      $region24: #{basic_block_forward.1} parent=11 // pred_fallthru
        _
      // Predicated region
      $region25: #{basic_block_forward.1} parent=11 // pred_check
        %p193 = pneg %p122
      $region26: #{basic_block_forward.1} parent=11 // pred_check_branch
        %195 = sbr.rel (%p193) target = $region28
      $region27: #{basic_block_forward.1} parent=11 // pred_region
        _
      $region28: #{basic_block_forward.1} parent=11 // pred_fallthru
        _
      // Predicated region
      $region29: #{basic_block_forward.1} parent=11 // pred_check
        %p196 = pneg %p143
      $region30: #{basic_block_forward.1} parent=11 // pred_check_branch
        %198 = sbr.rel (%p196) target = $region32
      $region31: #{basic_block_forward.1} parent=11 // pred_region
        _
      $region32: #{basic_block_forward.1} parent=11 // pred_fallthru
        _
    $region12: #{basic_block_forward.1} parent=5 // pred_fallthru
      _
    %p199 = scmp.lt.s32.totalorder %s12, 2
    // Predicated region
    $region33: #{basic_block_forward.1} parent=5 // pred_check
      %p200 = pneg %p199
    $region34: #{basic_block_forward.1} parent=5 // pred_check_branch
      %202 = sbr.rel (%p200) target = $region36
    $region35: #{basic_block_forward.1} parent=5 // pred_region
      // Predicated region
      $region37: #{basic_block_forward.1} parent=35 // pred_check
        %p203 = pneg %p32
      $region38: #{basic_block_forward.1} parent=35 // pred_check_branch
        %205 = sbr.rel (%p203) target = $region40
      $region39: #{basic_block_forward.1} parent=35 // pred_region
        %p206 = scmp.lt.s32.totalorder %s12, 1
        %s207 = scalar_select %p206, %s12, 1
        %s208 = smul.addr %s207, 3
        %s209 = smul.addr %s208, 4
        %s210 = scalar_lea.vmem %s0, %s209
      $region40: #{basic_block_forward.1} parent=35 // pred_fallthru
        _
    $region36: #{basic_block_forward.1} parent=5 // pred_fallthru
      _
    %p211 = scmp.le.s32.totalorder 1, %s12
    %p212 = scmp.lt.s32.totalorder %s12, 3
    %p213 = pnand %p211, %p212
    %p214 = pneg %p213
    // Predicated region
    $region41: #{basic_block_forward.1} parent=5 // pred_check
      _
    $region42: #{basic_block_forward.1} parent=5 // pred_check_branch
      %216 = sbr.rel (%p213) target = $region44
    $region43: #{basic_block_forward.1} parent=5 // pred_region
      %s217 = ssub.s32 %s12, 1
      %p218 = scmp.lt.s32.totalorder %s17, 1
      %s219 = scalar_select %p218, %s17, 1
      %s220 = smul.addr %s219, 3
      %s221 = smul.addr %s220, 4
      %s222 = scalar_lea.vmem %s0, %s221
      %p223 = pneg %p38
      %p224 = pneg %p35
      %p225 = pneg %p59
      %p226 = pneg %p56
      %p227 = pneg %p80
      %p228 = pneg %p77
      %p229 = pneg %p101
      %p230 = pneg %p98
      %p231 = pneg %p122
      %p232 = pneg %p119
      %p233 = pneg %p143
      %p234 = pneg %p140
      %p235 = pneg %p169
      %p236 = pneg %p166
      %p237 = scmp.lt.s32.totalorder %s17, 1
      %s238 = scalar_select %p237, %s17, 1
      %s239 = smul.addr %s238, 3
      %s240 = smul.addr %s239, 4
      %s241 = scalar_lea.vmem %s6, %s240
      %p242 = scmp.lt.s32.totalorder %s17, 1
      %s243 = scalar_select %p242, %s17, 1
      %s244 = smul.addr %s243, 3
      %s245 = smul.addr %s244, 4
      %s246 = scalar_lea.vmem %s0, %s245
      %p247 = scmp.lt.s32.totalorder %s17, 1
      %s248 = scalar_select %p247, %s17, 1
      %s249 = smul.addr %s248, 3
      %s250 = smul.addr %s249, 4
      %s251 = scalar_lea.vmem %s6, %s250
      %v252 = vld [vmem:[%s246] sm:$0xff]
      %v253 = vld [vmem:[%s246 + $0x8] sm:$0xf]
      %v254 = vld [vmem:[%s5] sm:$0x7]
      %v255 = vld [vmem:[%s2] sm:$0xf]
      %257 = vset.pattern.permute.xlu0 0
      %258 = vperm.xlu0 %257, %v255
      %v259 = vpop.permute.xlu0 %258
      %v261 = vld [vmem:[%s1] sm:$0xf]
      %v264 = vcombine.high %v252, %v252
      %266 = vrot.lane.b32.xlu0 %v252, 19
      %v267 = vpop.permute.xlu0 %266
      %268 = vrot.lane.b32.xlu0 %v264, 19
      %v269 = vpop.permute.xlu0 %268
      %270 = vrot.lane.b32.xlu0 %v253, 19
      %v271 = vpop.permute.xlu0 %270
      %v272 = vlaneseq
      %v273 = vand.u32 %v272, 127
      %vm274 = vcmp.lt.s32.totalorder %v273, 19
      %v275 = vsel %vm274, %v269, %v271
      %v276 = vsel %vm274, %v267, %v269
      %v277 = vsel %vm274, %v271, %v267
      %vm278 = vcmask 31744
      %v280 = vsel %vm278, %v261, 0
      %vm282 = vcmask 1043456
      %v284 = vsel %vm282, %v277, 0
      %v287 = vsel %vm282, %v276, 0
      %v290 = vsel %vm282, %v275, 0
      %292 = vmatprep.subr.mxu0 %v287
      %293 = vmatpush1.msra.mxu0 %v284
      %294 = vmatprep.subr.mxu0 0.0
      %295 = vmatpush1.msra.mxu0 0.0
      %296 = vmatprep.subr.mxu0 0.0
      %297 = vmatpush1.msra.mxu0 0.0
      %298 = vmatprep.subr.mxu0 0.0
      %299 = vmatpush1.msra.mxu0 0.0
      %300 = vmatprep.subr.mxu0 0.0
      %301 = vmatpush1.msra.mxu0 0.0
      %302 = vmatprep.subr.mxu0 0.0
      %303 = vmatpush1.msra.mxu0 0.0
      %304 = vmatprep.subr.mxu0 0.0
      %305 = vmatpush1.msra.mxu0 0.0
      %306 = vmatprep.subr.mxu0 0.0
      %307 = vmatpush1.msra.mxu0 0.0
      %308 = vmatprep.subr.mxu0 0.0
      %309 = vmatpush1.msra.mxu0 0.0
      %310 = vmatprep.subr.mxu0 0.0
      %311 = vmatpush1.msra.mxu0 0.0
      %312 = vmatprep.subr.mxu0 0.0
      %313 = vmatpush1.msra.mxu0 0.0
      %314 = vmatprep.subr.mxu0 0.0
      %315 = vmatpush1.msra.mxu0 0.0
      %316 = vmatprep.subr.mxu0 0.0
      %317 = vmatpush1.msra.mxu0 0.0
      %318 = vmatprep.subr.mxu0 0.0
      %319 = vmatpush1.msra.mxu0 0.0
      %320 = vmatprep.subr.mxu0 0.0
      %321 = vmatpush1.msra.mxu0 0.0
      %322 = vmatprep.subr.mxu0 0.0
      %323 = vmatpush1.msra.mxu0 0.0
      %324 = vmatprep.subr.mxu0 0.0
      %325 = vmatpush1.msra.mxu0 0.0
      %326 = vmatprep.subr.mxu0 0.0
      %327 = vmatpush1.msra.mxu0 0.0
      %328 = vmatprep.subr.mxu0 0.0
      %329 = vmatpush1.msra.mxu0 0.0
      %330 = vmatprep.subr.mxu0 0.0
      %331 = vmatpush1.msra.mxu0 0.0
      %332 = vmatprep.subr.mxu0 0.0
      %333 = vmatpush1.msra.mxu0 0.0
      %334 = vmatprep.subr.mxu0 0.0
      %335 = vmatpush1.msra.mxu0 0.0
      %336 = vmatprep.subr.mxu0 0.0
      %337 = vmatpush1.msra.mxu0 0.0
      %338 = vmatprep.subr.mxu0 0.0
      %339 = vmatpush1.msra.mxu0 0.0
      %340 = vmatprep.subr.mxu0 0.0
      %341 = vmatpush1.msra.mxu0 0.0
      %342 = vmatprep.subr.mxu0 0.0
      %343 = vmatpush1.msra.mxu0 0.0
      %344 = vmatprep.subr.mxu0 0.0
      %345 = vmatpush1.msra.mxu0 0.0
      %346 = vmatprep.subr.mxu0 0.0
      %347 = vmatpush1.msra.mxu0 0.0
      %348 = vmatprep.subr.mxu0 0.0
      %349 = vmatpush1.msra.mxu0 0.0
      %350 = vmatprep.subr.mxu0 0.0
      %351 = vmatpush1.msra.mxu0 0.0
      %352 = vmatprep.subr.mxu0 0.0
      %353 = vmatpush1.msra.mxu0 0.0
      %354 = vmatprep.subr.mxu0 0.0
      %355 = vmatpush1.msra.mxu0 0.0
      %356 = vmatprep.mubr.f32.mxu0 0.0
      %357 = vmatmul.mubr.f32.gmra.mrb[0].mxu0 %v280
      %v358 = vpop.f32.mrb[0].mxu0
      %v359 = vadd.f32 0.0, %v358
      %v360 = vpop.f32.mrb[0].mxu0
      %v361 = vadd.f32 0.0, %v360
      %362 = vdwg.mxu0
      %363 = vmatprep.subr.mxu0 0.0
      %364 = vmatpush1.msra.mxu0 %v290
      %365 = vmatprep.subr.mxu0 0.0
      %366 = vmatpush1.msra.mxu0 0.0
      %367 = vmatprep.subr.mxu0 0.0
      %368 = vmatpush1.msra.mxu0 0.0
      %369 = vmatprep.subr.mxu0 0.0
      %370 = vmatpush1.msra.mxu0 0.0
      %371 = vmatprep.subr.mxu0 0.0
      %372 = vmatpush1.msra.mxu0 0.0
      %373 = vmatprep.subr.mxu0 0.0
      %374 = vmatpush1.msra.mxu0 0.0
      %375 = vmatprep.subr.mxu0 0.0
      %376 = vmatpush1.msra.mxu0 0.0
      %377 = vmatprep.subr.mxu0 0.0
      %378 = vmatpush1.msra.mxu0 0.0
      %379 = vmatprep.subr.mxu0 0.0
      %380 = vmatpush1.msra.mxu0 0.0
      %381 = vmatprep.subr.mxu0 0.0
      %382 = vmatpush1.msra.mxu0 0.0
      %383 = vmatprep.subr.mxu0 0.0
      %384 = vmatpush1.msra.mxu0 0.0
      %385 = vmatprep.subr.mxu0 0.0
      %386 = vmatpush1.msra.mxu0 0.0
      %387 = vmatprep.subr.mxu0 0.0
      %388 = vmatpush1.msra.mxu0 0.0
      %389 = vmatprep.subr.mxu0 0.0
      %390 = vmatpush1.msra.mxu0 0.0
      %391 = vmatprep.subr.mxu0 0.0
      %392 = vmatpush1.msra.mxu0 0.0
      %393 = vmatprep.subr.mxu0 0.0
      %394 = vmatpush1.msra.mxu0 0.0
      %395 = vmatprep.subr.mxu0 0.0
      %396 = vmatpush1.msra.mxu0 0.0
      %397 = vmatprep.subr.mxu0 0.0
      %398 = vmatpush1.msra.mxu0 0.0
      %399 = vmatprep.subr.mxu0 0.0
      %400 = vmatpush1.msra.mxu0 0.0
      %401 = vmatprep.subr.mxu0 0.0
      %402 = vmatpush1.msra.mxu0 0.0
      %403 = vmatprep.subr.mxu0 0.0
      %404 = vmatpush1.msra.mxu0 0.0
      %405 = vmatprep.subr.mxu0 0.0
      %406 = vmatpush1.msra.mxu0 0.0
      %407 = vmatprep.subr.mxu0 0.0
      %408 = vmatpush1.msra.mxu0 0.0
      %409 = vmatprep.subr.mxu0 0.0
      %410 = vmatpush1.msra.mxu0 0.0
      %411 = vmatprep.subr.mxu0 0.0
      %412 = vmatpush1.msra.mxu0 0.0
      %413 = vmatprep.subr.mxu0 0.0
      %414 = vmatpush1.msra.mxu0 0.0
      %415 = vmatprep.subr.mxu0 0.0
      %416 = vmatpush1.msra.mxu0 0.0
      %417 = vmatprep.subr.mxu0 0.0
      %418 = vmatpush1.msra.mxu0 0.0
      %419 = vmatprep.subr.mxu0 0.0
      %420 = vmatpush1.msra.mxu0 0.0
      %421 = vmatprep.subr.mxu0 0.0
      %422 = vmatpush1.msra.mxu0 0.0
      %423 = vmatprep.subr.mxu0 0.0
      %424 = vmatpush1.msra.mxu0 0.0
      %425 = vmatprep.subr.mxu0 0.0
      %426 = vmatpush1.msra.mxu0 0.0
      %427 = vmatprep.mubr.f32.mxu0 0.0
      %428 = vmatmul.mubr.f32.gmra.mrb[0].mxu0 %v280
      %v429 = vpop.f32.mrb[0].mxu0
      %v430 = vadd.f32 0.0, %v429
      %v431 = vpop.f32.mrb[0].mxu0
      %432 = vdwg.mxu0
      %v433 = vadd.f32 %v259, %v359
      %v434 = vadd.f32 %v259, %v361
      %v435 = vadd.f32 %v259, %v430
      %s436 = scalar_lea.vmem %s1, 4
      %v437 = vld [vmem:[%s436] sm:$0xf]
      %438 = vrot.lane.b32.xlu0 %v252, 18
      %v439 = vpop.permute.xlu0 %438
      %440 = vrot.lane.b32.xlu0 %v264, 18
      %v441 = vpop.permute.xlu0 %440
      %442 = vrot.lane.b32.xlu0 %v253, 18
      %v443 = vpop.permute.xlu0 %442
      %vm444 = vcmp.lt.s32.totalorder %v273, 18
      %v445 = vsel %vm444, %v441, %v443
      %v446 = vsel %vm444, %v439, %v441
      %v447 = vsel %vm444, %v443, %v439
      %v449 = vsel %vm278, %v437, 0
      %v452 = vsel %vm282, %v447, 0
      %v455 = vsel %vm282, %v446, 0
      %v458 = vsel %vm282, %v445, 0
      %460 = vmatprep.subr.mxu0 %v455
      %461 = vmatpush1.msra.mxu0 %v452
      %462 = vmatprep.subr.mxu0 0.0
      %463 = vmatpush1.msra.mxu0 0.0
      %464 = vmatprep.subr.mxu0 0.0
      %465 = vmatpush1.msra.mxu0 0.0
      %466 = vmatprep.subr.mxu0 0.0
      %467 = vmatpush1.msra.mxu0 0.0
      %468 = vmatprep.subr.mxu0 0.0
      %469 = vmatpush1.msra.mxu0 0.0
      %470 = vmatprep.subr.mxu0 0.0
      %471 = vmatpush1.msra.mxu0 0.0
      %472 = vmatprep.subr.mxu0 0.0
      %473 = vmatpush1.msra.mxu0 0.0
      %474 = vmatprep.subr.mxu0 0.0
      %475 = vmatpush1.msra.mxu0 0.0
      %476 = vmatprep.subr.mxu0 0.0
      %477 = vmatpush1.msra.mxu0 0.0
      %478 = vmatprep.subr.mxu0 0.0
      %479 = vmatpush1.msra.mxu0 0.0
      %480 = vmatprep.subr.mxu0 0.0
      %481 = vmatpush1.msra.mxu0 0.0
      %482 = vmatprep.subr.mxu0 0.0
      %483 = vmatpush1.msra.mxu0 0.0
      %484 = vmatprep.subr.mxu0 0.0
      %485 = vmatpush1.msra.mxu0 0.0
      %486 = vmatprep.subr.mxu0 0.0
      %487 = vmatpush1.msra.mxu0 0.0
      %488 = vmatprep.subr.mxu0 0.0
      %489 = vmatpush1.msra.mxu0 0.0
      %490 = vmatprep.subr.mxu0 0.0
      %491 = vmatpush1.msra.mxu0 0.0
      %492 = vmatprep.subr.mxu0 0.0
      %493 = vmatpush1.msra.mxu0 0.0
      %494 = vmatprep.subr.mxu0 0.0
      %495 = vmatpush1.msra.mxu0 0.0
      %496 = vmatprep.subr.mxu0 0.0
      %497 = vmatpush1.msra.mxu0 0.0
      %498 = vmatprep.subr.mxu0 0.0
      %499 = vmatpush1.msra.mxu0 0.0
      %500 = vmatprep.subr.mxu0 0.0
      %501 = vmatpush1.msra.mxu0 0.0
      %502 = vmatprep.subr.mxu0 0.0
      %503 = vmatpush1.msra.mxu0 0.0
      %504 = vmatprep.subr.mxu0 0.0
      %505 = vmatpush1.msra.mxu0 0.0
      %506 = vmatprep.subr.mxu0 0.0
      %507 = vmatpush1.msra.mxu0 0.0
      %508 = vmatprep.subr.mxu0 0.0
      %509 = vmatpush1.msra.mxu0 0.0
      %510 = vmatprep.subr.mxu0 0.0
      %511 = vmatpush1.msra.mxu0 0.0
      %512 = vmatprep.subr.mxu0 0.0
      %513 = vmatpush1.msra.mxu0 0.0
      %514 = vmatprep.subr.mxu0 0.0
      %515 = vmatpush1.msra.mxu0 0.0
      %516 = vmatprep.subr.mxu0 0.0
      %517 = vmatpush1.msra.mxu0 0.0
      %518 = vmatprep.subr.mxu0 0.0
      %519 = vmatpush1.msra.mxu0 0.0
      %520 = vmatprep.subr.mxu0 0.0
      %521 = vmatpush1.msra.mxu0 0.0
      %522 = vmatprep.subr.mxu0 0.0
      %523 = vmatpush1.msra.mxu0 0.0
      %524 = vmatprep.mubr.f32.mxu0 0.0
      %525 = vmatmul.mubr.f32.gmra.mrb[0].mxu0 %v449
      %v526 = vpop.f32.mrb[0].mxu0
      %v527 = vadd.f32 0.0, %v526
      %v528 = vpop.f32.mrb[0].mxu0
      %v529 = vadd.f32 0.0, %v528
      %530 = vdwg.mxu0
      %531 = vmatprep.subr.mxu0 0.0
      %532 = vmatpush1.msra.mxu0 %v458
      %533 = vmatprep.subr.mxu0 0.0
      %534 = vmatpush1.msra.mxu0 0.0
      %535 = vmatprep.subr.mxu0 0.0
      %536 = vmatpush1.msra.mxu0 0.0
      %537 = vmatprep.subr.mxu0 0.0
      %538 = vmatpush1.msra.mxu0 0.0
      %539 = vmatprep.subr.mxu0 0.0
      %540 = vmatpush1.msra.mxu0 0.0
      %541 = vmatprep.subr.mxu0 0.0
      %542 = vmatpush1.msra.mxu0 0.0
      %543 = vmatprep.subr.mxu0 0.0
      %544 = vmatpush1.msra.mxu0 0.0
      %545 = vmatprep.subr.mxu0 0.0
      %546 = vmatpush1.msra.mxu0 0.0
      %547 = vmatprep.subr.mxu0 0.0
      %548 = vmatpush1.msra.mxu0 0.0
      %549 = vmatprep.subr.mxu0 0.0
      %550 = vmatpush1.msra.mxu0 0.0
      %551 = vmatprep.subr.mxu0 0.0
      %552 = vmatpush1.msra.mxu0 0.0
      %553 = vmatprep.subr.mxu0 0.0
      %554 = vmatpush1.msra.mxu0 0.0
      %555 = vmatprep.subr.mxu0 0.0
      %556 = vmatpush1.msra.mxu0 0.0
      %557 = vmatprep.subr.mxu0 0.0
      %558 = vmatpush1.msra.mxu0 0.0
      %559 = vmatprep.subr.mxu0 0.0
      %560 = vmatpush1.msra.mxu0 0.0
      %561 = vmatprep.subr.mxu0 0.0
      %562 = vmatpush1.msra.mxu0 0.0
      %563 = vmatprep.subr.mxu0 0.0
      %564 = vmatpush1.msra.mxu0 0.0
      %565 = vmatprep.subr.mxu0 0.0
      %566 = vmatpush1.msra.mxu0 0.0
      %567 = vmatprep.subr.mxu0 0.0
      %568 = vmatpush1.msra.mxu0 0.0
      %569 = vmatprep.subr.mxu0 0.0
      %570 = vmatpush1.msra.mxu0 0.0
      %571 = vmatprep.subr.mxu0 0.0
      %572 = vmatpush1.msra.mxu0 0.0
      %573 = vmatprep.subr.mxu0 0.0
      %574 = vmatpush1.msra.mxu0 0.0
      %575 = vmatprep.subr.mxu0 0.0
      %576 = vmatpush1.msra.mxu0 0.0
      %577 = vmatprep.subr.mxu0 0.0
      %578 = vmatpush1.msra.mxu0 0.0
      %579 = vmatprep.subr.mxu0 0.0
      %580 = vmatpush1.msra.mxu0 0.0
      %581 = vmatprep.subr.mxu0 0.0
      %582 = vmatpush1.msra.mxu0 0.0
      %583 = vmatprep.subr.mxu0 0.0
      %584 = vmatpush1.msra.mxu0 0.0
      %585 = vmatprep.subr.mxu0 0.0
      %586 = vmatpush1.msra.mxu0 0.0
      %587 = vmatprep.subr.mxu0 0.0
      %588 = vmatpush1.msra.mxu0 0.0
      %589 = vmatprep.subr.mxu0 0.0
      %590 = vmatpush1.msra.mxu0 0.0
      %591 = vmatprep.subr.mxu0 0.0
      %592 = vmatpush1.msra.mxu0 0.0
      %593 = vmatprep.subr.mxu0 0.0
      %594 = vmatpush1.msra.mxu0 0.0
      %595 = vmatprep.mubr.f32.mxu0 0.0
      %596 = vmatmul.mubr.f32.gmra.mrb[0].mxu0 %v449
      %v597 = vpop.f32.mrb[0].mxu0
      %v598 = vadd.f32 0.0, %v597
      %v599 = vpop.f32.mrb[0].mxu0
      %600 = vdwg.mxu0
      %v601 = vadd.f32 %v433, %v527
      %v602 = vadd.f32 %v434, %v529
      %v603 = vadd.f32 %v435, %v598
      %s604 = scalar_lea.vmem %s1, 8
      %v605 = vld [vmem:[%s604] sm:$0xf]
      %606 = vrot.lane.b32.xlu0 %v252, 17
      %v607 = vpop.permute.xlu0 %606
      %608 = vrot.lane.b32.xlu0 %v264, 17
      %v609 = vpop.permute.xlu0 %608
      %610 = vrot.lane.b32.xlu0 %v253, 17
      %v611 = vpop.permute.xlu0 %610
      %vm612 = vcmp.lt.s32.totalorder %v273, 17
      %v613 = vsel %vm612, %v609, %v611
      %v614 = vsel %vm612, %v607, %v609
      %v615 = vsel %vm612, %v611, %v607
      %v617 = vsel %vm278, %v605, 0
      %v620 = vsel %vm282, %v615, 0
      %v623 = vsel %vm282, %v614, 0
      %v626 = vsel %vm282, %v613, 0
      %628 = vmatprep.subr.mxu0 %v623
      %629 = vmatpush1.msra.mxu0 %v620
      %630 = vmatprep.subr.mxu0 0.0
      %631 = vmatpush1.msra.mxu0 0.0
      %632 = vmatprep.subr.mxu0 0.0
      %633 = vmatpush1.msra.mxu0 0.0
      %634 = vmatprep.subr.mxu0 0.0
      %635 = vmatpush1.msra.mxu0 0.0
      %636 = vmatprep.subr.mxu0 0.0
      %637 = vmatpush1.msra.mxu0 0.0
      %638 = vmatprep.subr.mxu0 0.0
      %639 = vmatpush1.msra.mxu0 0.0
      %640 = vmatprep.subr.mxu0 0.0
      %641 = vmatpush1.msra.mxu0 0.0
      %642 = vmatprep.subr.mxu0 0.0
      %643 = vmatpush1.msra.mxu0 0.0
      %644 = vmatprep.subr.mxu0 0.0
      %645 = vmatpush1.msra.mxu0 0.0
      %646 = vmatprep.subr.mxu0 0.0
      %647 = vmatpush1.msra.mxu0 0.0
      %648 = vmatprep.subr.mxu0 0.0
      %649 = vmatpush1.msra.mxu0 0.0
      %650 = vmatprep.subr.mxu0 0.0
      %651 = vmatpush1.msra.mxu0 0.0
      %652 = vmatprep.subr.mxu0 0.0
      %653 = vmatpush1.msra.mxu0 0.0
      %654 = vmatprep.subr.mxu0 0.0
      %655 = vmatpush1.msra.mxu0 0.0
      %656 = vmatprep.subr.mxu0 0.0
      %657 = vmatpush1.msra.mxu0 0.0
      %658 = vmatprep.subr.mxu0 0.0
      %659 = vmatpush1.msra.mxu0 0.0
      %660 = vmatprep.subr.mxu0 0.0
      %661 = vmatpush1.msra.mxu0 0.0
      %662 = vmatprep.subr.mxu0 0.0
      %663 = vmatpush1.msra.mxu0 0.0
      %664 = vmatprep.subr.mxu0 0.0
      %665 = vmatpush1.msra.mxu0 0.0
      %666 = vmatprep.subr.mxu0 0.0
      %667 = vmatpush1.msra.mxu0 0.0
      %668 = vmatprep.subr.mxu0 0.0
      %669 = vmatpush1.msra.mxu0 0.0
      %670 = vmatprep.subr.mxu0 0.0
      %671 = vmatpush1.msra.mxu0 0.0
      %672 = vmatprep.subr.mxu0 0.0
      %673 = vmatpush1.msra.mxu0 0.0
      %674 = vmatprep.subr.mxu0 0.0
      %675 = vmatpush1.msra.mxu0 0.0
      %676 = vmatprep.subr.mxu0 0.0
      %677 = vmatpush1.msra.mxu0 0.0
      %678 = vmatprep.subr.mxu0 0.0
      %679 = vmatpush1.msra.mxu0 0.0
      %680 = vmatprep.subr.mxu0 0.0
      %681 = vmatpush1.msra.mxu0 0.0
      %682 = vmatprep.subr.mxu0 0.0
      %683 = vmatpush1.msra.mxu0 0.0
      %684 = vmatprep.subr.mxu0 0.0
      %685 = vmatpush1.msra.mxu0 0.0
      %686 = vmatprep.subr.mxu0 0.0
      %687 = vmatpush1.msra.mxu0 0.0
      %688 = vmatprep.subr.mxu0 0.0
      %689 = vmatpush1.msra.mxu0 0.0
      %690 = vmatprep.subr.mxu0 0.0
      %691 = vmatpush1.msra.mxu0 0.0
      %692 = vmatprep.mubr.f32.mxu0 0.0
      %693 = vmatmul.mubr.f32.gmra.mrb[0].mxu0 %v617
      %v694 = vpop.f32.mrb[0].mxu0
      %v695 = vadd.f32 0.0, %v694
      %v696 = vpop.f32.mrb[0].mxu0
      %v697 = vadd.f32 0.0, %v696
      %698 = vdwg.mxu0
      %699 = vmatprep.subr.mxu0 0.0
      %700 = vmatpush1.msra.mxu0 %v626
      %701 = vmatprep.subr.mxu0 0.0
      %702 = vmatpush1.msra.mxu0 0.0
      %703 = vmatprep.subr.mxu0 0.0
      %704 = vmatpush1.msra.mxu0 0.0
      %705 = vmatprep.subr.mxu0 0.0
      %706 = vmatpush1.msra.mxu0 0.0
      %707 = vmatprep.subr.mxu0 0.0
      %708 = vmatpush1.msra.mxu0 0.0
      %709 = vmatprep.subr.mxu0 0.0
      %710 = vmatpush1.msra.mxu0 0.0
      %711 = vmatprep.subr.mxu0 0.0
      %712 = vmatpush1.msra.mxu0 0.0
      %713 = vmatprep.subr.mxu0 0.0
      %714 = vmatpush1.msra.mxu0 0.0
      %715 = vmatprep.subr.mxu0 0.0
      %716 = vmatpush1.msra.mxu0 0.0
      %717 = vmatprep.subr.mxu0 0.0
      %718 = vmatpush1.msra.mxu0 0.0
      %719 = vmatprep.subr.mxu0 0.0
      %720 = vmatpush1.msra.mxu0 0.0
      %721 = vmatprep.subr.mxu0 0.0
      %722 = vmatpush1.msra.mxu0 0.0
      %723 = vmatprep.subr.mxu0 0.0
      %724 = vmatpush1.msra.mxu0 0.0
      %725 = vmatprep.subr.mxu0 0.0
      %726 = vmatpush1.msra.mxu0 0.0
      %727 = vmatprep.subr.mxu0 0.0
      %728 = vmatpush1.msra.mxu0 0.0
      %729 = vmatprep.subr.mxu0 0.0
      %730 = vmatpush1.msra.mxu0 0.0
      %731 = vmatprep.subr.mxu0 0.0
      %732 = vmatpush1.msra.mxu0 0.0
      %733 = vmatprep.subr.mxu0 0.0
      %734 = vmatpush1.msra.mxu0 0.0
      %735 = vmatprep.subr.mxu0 0.0
      %736 = vmatpush1.msra.mxu0 0.0
      %737 = vmatprep.subr.mxu0 0.0
      %738 = vmatpush1.msra.mxu0 0.0
      %739 = vmatprep.subr.mxu0 0.0
      %740 = vmatpush1.msra.mxu0 0.0
      %741 = vmatprep.subr.mxu0 0.0
      %742 = vmatpush1.msra.mxu0 0.0
      %743 = vmatprep.subr.mxu0 0.0
      %744 = vmatpush1.msra.mxu0 0.0
      %745 = vmatprep.subr.mxu0 0.0
      %746 = vmatpush1.msra.mxu0 0.0
      %747 = vmatprep.subr.mxu0 0.0
      %748 = vmatpush1.msra.mxu0 0.0
      %749 = vmatprep.subr.mxu0 0.0
      %750 = vmatpush1.msra.mxu0 0.0
      %751 = vmatprep.subr.mxu0 0.0
      %752 = vmatpush1.msra.mxu0 0.0
      %753 = vmatprep.subr.mxu0 0.0
      %754 = vmatpush1.msra.mxu0 0.0
      %755 = vmatprep.subr.mxu0 0.0
      %756 = vmatpush1.msra.mxu0 0.0
      %757 = vmatprep.subr.mxu0 0.0
      %758 = vmatpush1.msra.mxu0 0.0
      %759 = vmatprep.subr.mxu0 0.0
      %760 = vmatpush1.msra.mxu0 0.0
      %761 = vmatprep.subr.mxu0 0.0
      %762 = vmatpush1.msra.mxu0 0.0
      %763 = vmatprep.mubr.f32.mxu0 0.0
      %764 = vmatmul.mubr.f32.gmra.mrb[0].mxu0 %v617
      %v765 = vpop.f32.mrb[0].mxu0
      %v766 = vadd.f32 0.0, %v765
      %v767 = vpop.f32.mrb[0].mxu0
      %768 = vdwg.mxu0
      %v769 = vadd.f32 %v601, %v695
      %v770 = vadd.f32 %v602, %v697
      %v771 = vadd.f32 %v603, %v766
      %s772 = scalar_lea.vmem %s1, 12
      %v773 = vld [vmem:[%s772] sm:$0xf]
      %774 = vrot.lane.b32.xlu0 %v252, 1
      %v775 = vpop.permute.xlu0 %774
      %776 = vrot.lane.b32.xlu0 %v264, 1
      %v777 = vpop.permute.xlu0 %776
      %778 = vrot.lane.b32.xlu0 %v253, 1
      %v779 = vpop.permute.xlu0 %778
      %vm780 = vcmp.lt.s32.totalorder %v273, 1
      %v781 = vsel %vm780, %v777, %v779
      %v782 = vsel %vm780, %v775, %v777
      %v783 = vsel %vm780, %v779, %v775
      %v785 = vsel %vm278, %v773, 0
      %v788 = vsel %vm282, %v783, 0
      %v791 = vsel %vm282, %v782, 0
      %v794 = vsel %vm282, %v781, 0
      %796 = vmatprep.subr.mxu0 %v791
      %797 = vmatpush1.msra.mxu0 %v788
      %798 = vmatprep.subr.mxu0 0.0
      %799 = vmatpush1.msra.mxu0 0.0
      %800 = vmatprep.subr.mxu0 0.0
      %801 = vmatpush1.msra.mxu0 0.0
      %802 = vmatprep.subr.mxu0 0.0
      %803 = vmatpush1.msra.mxu0 0.0
      %804 = vmatprep.subr.mxu0 0.0
      %805 = vmatpush1.msra.mxu0 0.0
      %806 = vmatprep.subr.mxu0 0.0
      %807 = vmatpush1.msra.mxu0 0.0
      %808 = vmatprep.subr.mxu0 0.0
      %809 = vmatpush1.msra.mxu0 0.0
      %810 = vmatprep.subr.mxu0 0.0
      %811 = vmatpush1.msra.mxu0 0.0
      %812 = vmatprep.subr.mxu0 0.0
      %813 = vmatpush1.msra.mxu0 0.0
      %814 = vmatprep.subr.mxu0 0.0
      %815 = vmatpush1.msra.mxu0 0.0
      %816 = vmatprep.subr.mxu0 0.0
      %817 = vmatpush1.msra.mxu0 0.0
      %818 = vmatprep.subr.mxu0 0.0
      %819 = vmatpush1.msra.mxu0 0.0
      %820 = vmatprep.subr.mxu0 0.0
      %821 = vmatpush1.msra.mxu0 0.0
      %822 = vmatprep.subr.mxu0 0.0
      %823 = vmatpush1.msra.mxu0 0.0
      %824 = vmatprep.subr.mxu0 0.0
      %825 = vmatpush1.msra.mxu0 0.0
      %826 = vmatprep.subr.mxu0 0.0
      %827 = vmatpush1.msra.mxu0 0.0
      %828 = vmatprep.subr.mxu0 0.0
      %829 = vmatpush1.msra.mxu0 0.0
      %830 = vmatprep.subr.mxu0 0.0
      %831 = vmatpush1.msra.mxu0 0.0
      %832 = vmatprep.subr.mxu0 0.0
      %833 = vmatpush1.msra.mxu0 0.0
      %834 = vmatprep.subr.mxu0 0.0
      %835 = vmatpush1.msra.mxu0 0.0
      %836 = vmatprep.subr.mxu0 0.0
      %837 = vmatpush1.msra.mxu0 0.0
      %838 = vmatprep.subr.mxu0 0.0
      %839 = vmatpush1.msra.mxu0 0.0
      %840 = vmatprep.subr.mxu0 0.0
      %841 = vmatpush1.msra.mxu0 0.0
      %842 = vmatprep.subr.mxu0 0.0
      %843 = vmatpush1.msra.mxu0 0.0
      %844 = vmatprep.subr.mxu0 0.0
      %845 = vmatpush1.msra.mxu0 0.0
      %846 = vmatprep.subr.mxu0 0.0
      %847 = vmatpush1.msra.mxu0 0.0
      %848 = vmatprep.subr.mxu0 0.0
      %849 = vmatpush1.msra.mxu0 0.0
      %850 = vmatprep.subr.mxu0 0.0
      %851 = vmatpush1.msra.mxu0 0.0
      %852 = vmatprep.subr.mxu0 0.0
      %853 = vmatpush1.msra.mxu0 0.0
      %854 = vmatprep.subr.mxu0 0.0
      %855 = vmatpush1.msra.mxu0 0.0
      %856 = vmatprep.subr.mxu0 0.0
      %857 = vmatpush1.msra.mxu0 0.0
      %858 = vmatprep.subr.mxu0 0.0
      %859 = vmatpush1.msra.mxu0 0.0
      %860 = vmatprep.mubr.f32.mxu0 0.0
      %861 = vmatmul.mubr.f32.gmra.mrb[0].mxu0 %v785
      %v862 = vpop.f32.mrb[0].mxu0
      %v863 = vadd.f32 0.0, %v862
      %v864 = vpop.f32.mrb[0].mxu0
      %v865 = vadd.f32 0.0, %v864
      %866 = vdwg.mxu0
      %867 = vmatprep.subr.mxu0 0.0
      %868 = vmatpush1.msra.mxu0 %v794
      %869 = vmatprep.subr.mxu0 0.0
      %870 = vmatpush1.msra.mxu0 0.0
      %871 = vmatprep.subr.mxu0 0.0
      %872 = vmatpush1.msra.mxu0 0.0
      %873 = vmatprep.subr.mxu0 0.0
      %874 = vmatpush1.msra.mxu0 0.0
      %875 = vmatprep.subr.mxu0 0.0
      %876 = vmatpush1.msra.mxu0 0.0
      %877 = vmatprep.subr.mxu0 0.0
      %878 = vmatpush1.msra.mxu0 0.0
      %879 = vmatprep.subr.mxu0 0.0
      %880 = vmatpush1.msra.mxu0 0.0
      %881 = vmatprep.subr.mxu0 0.0
      %882 = vmatpush1.msra.mxu0 0.0
      %883 = vmatprep.subr.mxu0 0.0
      %884 = vmatpush1.msra.mxu0 0.0
      %885 = vmatprep.subr.mxu0 0.0
      %886 = vmatpush1.msra.mxu0 0.0
      %887 = vmatprep.subr.mxu0 0.0
      %888 = vmatpush1.msra.mxu0 0.0
      %889 = vmatprep.subr.mxu0 0.0
      %890 = vmatpush1.msra.mxu0 0.0
      %891 = vmatprep.subr.mxu0 0.0
      %892 = vmatpush1.msra.mxu0 0.0
      %893 = vmatprep.subr.mxu0 0.0
      %894 = vmatpush1.msra.mxu0 0.0
      %895 = vmatprep.subr.mxu0 0.0
      %896 = vmatpush1.msra.mxu0 0.0
      %897 = vmatprep.subr.mxu0 0.0
      %898 = vmatpush1.msra.mxu0 0.0
      %899 = vmatprep.subr.mxu0 0.0
      %900 = vmatpush1.msra.mxu0 0.0
      %901 = vmatprep.subr.mxu0 0.0
      %902 = vmatpush1.msra.mxu0 0.0
      %903 = vmatprep.subr.mxu0 0.0
      %904 = vmatpush1.msra.mxu0 0.0
      %905 = vmatprep.subr.mxu0 0.0
      %906 = vmatpush1.msra.mxu0 0.0
      %907 = vmatprep.subr.mxu0 0.0
      %908 = vmatpush1.msra.mxu0 0.0
      %909 = vmatprep.subr.mxu0 0.0
      %910 = vmatpush1.msra.mxu0 0.0
      %911 = vmatprep.subr.mxu0 0.0
      %912 = vmatpush1.msra.mxu0 0.0
      %913 = vmatprep.subr.mxu0 0.0
      %914 = vmatpush1.msra.mxu0 0.0
      %915 = vmatprep.subr.mxu0 0.0
      %916 = vmatpush1.msra.mxu0 0.0
      %917 = vmatprep.subr.mxu0 0.0
      %918 = vmatpush1.msra.mxu0 0.0
      %919 = vmatprep.subr.mxu0 0.0
      %920 = vmatpush1.msra.mxu0 0.0
      %921 = vmatprep.subr.mxu0 0.0
      %922 = vmatpush1.msra.mxu0 0.0
      %923 = vmatprep.subr.mxu0 0.0
      %924 = vmatpush1.msra.mxu0 0.0
      %925 = vmatprep.subr.mxu0 0.0
      %926 = vmatpush1.msra.mxu0 0.0
      %927 = vmatprep.subr.mxu0 0.0
      %928 = vmatpush1.msra.mxu0 0.0
      %929 = vmatprep.subr.mxu0 0.0
      %930 = vmatpush1.msra.mxu0 0.0
      %931 = vmatprep.mubr.f32.mxu0 0.0
      %932 = vmatmul.mubr.f32.gmra.mrb[0].mxu0 %v785
      %v933 = vpop.f32.mrb[0].mxu0
      %v934 = vadd.f32 0.0, %v933
      %v935 = vpop.f32.mrb[0].mxu0
      %936 = vdwg.mxu0
      %v937 = vadd.f32 %v769, %v863
      %v938 = vadd.f32 %v770, %v865
      %v939 = vadd.f32 %v771, %v934
      %s940 = scalar_lea.vmem %s1, 16
      %v941 = vld [vmem:[%s940] sm:$0xf]
      %v943 = vsel %vm278, %v941, 0
      %v945 = vsel %vm282, %v252, 0
      %v947 = vsel %vm282, %v264, 0
      %v949 = vsel %vm282, %v253, 0
      %951 = vmatprep.subr.mxu0 %v947
      %952 = vmatpush1.msra.mxu0 %v945
      %953 = vmatprep.subr.mxu0 0.0
      %954 = vmatpush1.msra.mxu0 0.0
      %955 = vmatprep.subr.mxu0 0.0
      %956 = vmatpush1.msra.mxu0 0.0
      %957 = vmatprep.subr.mxu0 0.0
      %958 = vmatpush1.msra.mxu0 0.0
      %959 = vmatprep.subr.mxu0 0.0
      %960 = vmatpush1.msra.mxu0 0.0
      %961 = vmatprep.subr.mxu0 0.0
      %962 = vmatpush1.msra.mxu0 0.0
      %963 = vmatprep.subr.mxu0 0.0
      %964 = vmatpush1.msra.mxu0 0.0
      %965 = vmatprep.subr.mxu0 0.0
      %966 = vmatpush1.msra.mxu0 0.0
      %967 = vmatprep.subr.mxu0 0.0
      %968 = vmatpush1.msra.mxu0 0.0
      %969 = vmatprep.subr.mxu0 0.0
      %970 = vmatpush1.msra.mxu0 0.0
      %971 = vmatprep.subr.mxu0 0.0
      %972 = vmatpush1.msra.mxu0 0.0
      %973 = vmatprep.subr.mxu0 0.0
      %974 = vmatpush1.msra.mxu0 0.0
      %975 = vmatprep.subr.mxu0 0.0
      %976 = vmatpush1.msra.mxu0 0.0
      %977 = vmatprep.subr.mxu0 0.0
      %978 = vmatpush1.msra.mxu0 0.0
      %979 = vmatprep.subr.mxu0 0.0
      %980 = vmatpush1.msra.mxu0 0.0
      %981 = vmatprep.subr.mxu0 0.0
      %982 = vmatpush1.msra.mxu0 0.0
      %983 = vmatprep.subr.mxu0 0.0
      %984 = vmatpush1.msra.mxu0 0.0
      %985 = vmatprep.subr.mxu0 0.0
      %986 = vmatpush1.msra.mxu0 0.0
      %987 = vmatprep.subr.mxu0 0.0
      %988 = vmatpush1.msra.mxu0 0.0
      %989 = vmatprep.subr.mxu0 0.0
      %990 = vmatpush1.msra.mxu0 0.0
      %991 = vmatprep.subr.mxu0 0.0
      %992 = vmatpush1.msra.mxu0 0.0
      %993 = vmatprep.subr.mxu0 0.0
      %994 = vmatpush1.msra.mxu0 0.0
      %995 = vmatprep.subr.mxu0 0.0
      %996 = vmatpush1.msra.mxu0 0.0
      %997 = vmatprep.subr.mxu0 0.0
      %998 = vmatpush1.msra.mxu0 0.0
      %999 = vmatprep.subr.mxu0 0.0
      %1000 = vmatpush1.msra.mxu0 0.0
      %1001 = vmatprep.subr.mxu0 0.0
      %1002 = vmatpush1.msra.mxu0 0.0
      %1003 = vmatprep.subr.mxu0 0.0
      %1004 = vmatpush1.msra.mxu0 0.0
      %1005 = vmatprep.subr.mxu0 0.0
      %1006 = vmatpush1.msra.mxu0 0.0
      %1007 = vmatprep.subr.mxu0 0.0
      %1008 = vmatpush1.msra.mxu0 0.0
      %1009 = vmatprep.subr.mxu0 0.0
      %1010 = vmatpush1.msra.mxu0 0.0
      %1011 = vmatprep.subr.mxu0 0.0
      %1012 = vmatpush1.msra.mxu0 0.0
      %1013 = vmatprep.subr.mxu0 0.0
      %1014 = vmatpush1.msra.mxu0 0.0
      %1015 = vmatprep.mubr.f32.mxu0 0.0
      %1016 = vmatmul.mubr.f32.gmra.mrb[0].mxu0 %v943
      %v1017 = vpop.f32.mrb[0].mxu0
      %v1018 = vadd.f32 0.0, %v1017
      %v1019 = vpop.f32.mrb[0].mxu0
      %v1020 = vadd.f32 0.0, %v1019
      %1021 = vdwg.mxu0
      %1022 = vmatprep.subr.mxu0 0.0
      %1023 = vmatpush1.msra.mxu0 %v949
      %1024 = vmatprep.subr.mxu0 0.0
      %1025 = vmatpush1.msra.mxu0 0.0
      %1026 = vmatprep.subr.mxu0 0.0
      %1027 = vmatpush1.msra.mxu0 0.0
      %1028 = vmatprep.subr.mxu0 0.0
      %1029 = vmatpush1.msra.mxu0 0.0
      %1030 = vmatprep.subr.mxu0 0.0
      %1031 = vmatpush1.msra.mxu0 0.0
      %1032 = vmatprep.subr.mxu0 0.0
      %1033 = vmatpush1.msra.mxu0 0.0
      %1034 = vmatprep.subr.mxu0 0.0
      %1035 = vmatpush1.msra.mxu0 0.0
      %1036 = vmatprep.subr.mxu0 0.0
      %1037 = vmatpush1.msra.mxu0 0.0
      %1038 = vmatprep.subr.mxu0 0.0
      %1039 = vmatpush1.msra.mxu0 0.0
      %1040 = vmatprep.subr.mxu0 0.0
      %1041 = vmatpush1.msra.mxu0 0.0
      %1042 = vmatprep.subr.mxu0 0.0
      %1043 = vmatpush1.msra.mxu0 0.0
      %1044 = vmatprep.subr.mxu0 0.0
      %1045 = vmatpush1.msra.mxu0 0.0
      %1046 = vmatprep.subr.mxu0 0.0
      %1047 = vmatpush1.msra.mxu0 0.0
      %1048 = vmatprep.subr.mxu0 0.0
      %1049 = vmatpush1.msra.mxu0 0.0
      %1050 = vmatprep.subr.mxu0 0.0
      %1051 = vmatpush1.msra.mxu0 0.0
      %1052 = vmatprep.subr.mxu0 0.0
      %1053 = vmatpush1.msra.mxu0 0.0
      %1054 = vmatprep.subr.mxu0 0.0
      %1055 = vmatpush1.msra.mxu0 0.0
      %1056 = vmatprep.subr.mxu0 0.0
      %1057 = vmatpush1.msra.mxu0 0.0
      %1058 = vmatprep.subr.mxu0 0.0
      %1059 = vmatpush1.msra.mxu0 0.0
      %1060 = vmatprep.subr.mxu0 0.0
      %1061 = vmatpush1.msra.mxu0 0.0
      %1062 = vmatprep.subr.mxu0 0.0
      %1063 = vmatpush1.msra.mxu0 0.0
      %1064 = vmatprep.subr.mxu0 0.0
      %1065 = vmatpush1.msra.mxu0 0.0
      %1066 = vmatprep.subr.mxu0 0.0
      %1067 = vmatpush1.msra.mxu0 0.0
      %1068 = vmatprep.subr.mxu0 0.0
      %1069 = vmatpush1.msra.mxu0 0.0
      %1070 = vmatprep.subr.mxu0 0.0
      %1071 = vmatpush1.msra.mxu0 0.0
      %1072 = vmatprep.subr.mxu0 0.0
      %1073 = vmatpush1.msra.mxu0 0.0
      %1074 = vmatprep.subr.mxu0 0.0
      %1075 = vmatpush1.msra.mxu0 0.0
      %1076 = vmatprep.subr.mxu0 0.0
      %1077 = vmatpush1.msra.mxu0 0.0
      %1078 = vmatprep.subr.mxu0 0.0
      %1079 = vmatpush1.msra.mxu0 0.0
      %1080 = vmatprep.subr.mxu0 0.0
      %1081 = vmatpush1.msra.mxu0 0.0
      %1082 = vmatprep.subr.mxu0 0.0
      %1083 = vmatpush1.msra.mxu0 0.0
      %1084 = vmatprep.subr.mxu0 0.0
      %1085 = vmatpush1.msra.mxu0 0.0
      %1086 = vmatprep.mubr.f32.mxu0 0.0
      %1087 = vmatmul.mubr.f32.gmra.mrb[0].mxu0 %v943
      %v1088 = vpop.f32.mrb[0].mxu0
      %v1089 = vadd.f32 0.0, %v1088
      %v1090 = vpop.f32.mrb[0].mxu0
      %1091 = vdwg.mxu0
      %v1092 = vadd.f32 %v937, %v1018
      %v1093 = vadd.f32 %v938, %v1020
      %v1094 = vadd.f32 %v939, %v1089
      %s1095 = scalar_lea.vmem %s1, 20
      %v1096 = vld [vmem:[%s1095] sm:$0xf]
      %1097 = vrot.lane.b32.xlu0 %v252, 127
      %v1098 = vpop.permute.xlu0 %1097
      %1099 = vrot.lane.b32.xlu0 %v264, 127
      %v1100 = vpop.permute.xlu0 %1099
      %1101 = vrot.lane.b32.xlu0 %v253, 127
      %v1102 = vpop.permute.xlu0 %1101
      %vm1103 = vcmp.lt.s32.totalorder %v273, 127
      %v1104 = vsel %vm1103, %v1100, %v1102
      %v1105 = vsel %vm1103, %v1098, %v1100
      %v1106 = vsel %vm1103, %v1102, %v1098
      %v1108 = vsel %vm278, %v1096, 0
      %v1111 = vsel %vm282, %v1105, 0
      %v1114 = vsel %vm282, %v1104, 0
      %v1117 = vsel %vm282, %v1106, 0
      %1119 = vmatprep.subr.mxu0 %v1114
      %1120 = vmatpush1.msra.mxu0 %v1111
      %1121 = vmatprep.subr.mxu0 0.0
      %1122 = vmatpush1.msra.mxu0 0.0
      %1123 = vmatprep.subr.mxu0 0.0
      %1124 = vmatpush1.msra.mxu0 0.0
      %1125 = vmatprep.subr.mxu0 0.0
      %1126 = vmatpush1.msra.mxu0 0.0
      %1127 = vmatprep.subr.mxu0 0.0
      %1128 = vmatpush1.msra.mxu0 0.0
      %1129 = vmatprep.subr.mxu0 0.0
      %1130 = vmatpush1.msra.mxu0 0.0
      %1131 = vmatprep.subr.mxu0 0.0
      %1132 = vmatpush1.msra.mxu0 0.0
      %1133 = vmatprep.subr.mxu0 0.0
      %1134 = vmatpush1.msra.mxu0 0.0
      %1135 = vmatprep.subr.mxu0 0.0
      %1136 = vmatpush1.msra.mxu0 0.0
      %1137 = vmatprep.subr.mxu0 0.0
      %1138 = vmatpush1.msra.mxu0 0.0
      %1139 = vmatprep.subr.mxu0 0.0
      %1140 = vmatpush1.msra.mxu0 0.0
      %1141 = vmatprep.subr.mxu0 0.0
      %1142 = vmatpush1.msra.mxu0 0.0
      %1143 = vmatprep.subr.mxu0 0.0
      %1144 = vmatpush1.msra.mxu0 0.0
      %1145 = vmatprep.subr.mxu0 0.0
      %1146 = vmatpush1.msra.mxu0 0.0
      %1147 = vmatprep.subr.mxu0 0.0
      %1148 = vmatpush1.msra.mxu0 0.0
      %1149 = vmatprep.subr.mxu0 0.0
      %1150 = vmatpush1.msra.mxu0 0.0
      %1151 = vmatprep.subr.mxu0 0.0
      %1152 = vmatpush1.msra.mxu0 0.0
      %1153 = vmatprep.subr.mxu0 0.0
      %1154 = vmatpush1.msra.mxu0 0.0
      %1155 = vmatprep.subr.mxu0 0.0
      %1156 = vmatpush1.msra.mxu0 0.0
      %1157 = vmatprep.subr.mxu0 0.0
      %1158 = vmatpush1.msra.mxu0 0.0
      %1159 = vmatprep.subr.mxu0 0.0
      %1160 = vmatpush1.msra.mxu0 0.0
      %1161 = vmatprep.subr.mxu0 0.0
      %1162 = vmatpush1.msra.mxu0 0.0
      %1163 = vmatprep.subr.mxu0 0.0
      %1164 = vmatpush1.msra.mxu0 0.0
      %1165 = vmatprep.subr.mxu0 0.0
      %1166 = vmatpush1.msra.mxu0 0.0
      %1167 = vmatprep.subr.mxu0 0.0
      %1168 = vmatpush1.msra.mxu0 0.0
      %1169 = vmatprep.subr.mxu0 0.0
      %1170 = vmatpush1.msra.mxu0 0.0
      %1171 = vmatprep.subr.mxu0 0.0
      %1172 = vmatpush1.msra.mxu0 0.0
      %1173 = vmatprep.subr.mxu0 0.0
      %1174 = vmatpush1.msra.mxu0 0.0
      %1175 = vmatprep.subr.mxu0 0.0
      %1176 = vmatpush1.msra.mxu0 0.0
      %1177 = vmatprep.subr.mxu0 0.0
      %1178 = vmatpush1.msra.mxu0 0.0
      %1179 = vmatprep.subr.mxu0 0.0
      %1180 = vmatpush1.msra.mxu0 0.0
      %1181 = vmatprep.subr.mxu0 0.0
      %1182 = vmatpush1.msra.mxu0 0.0
      %1183 = vmatprep.mubr.f32.mxu0 0.0
      %1184 = vmatmul.mubr.f32.gmra.mrb[0].mxu0 %v1108
      %v1185 = vpop.f32.mrb[0].mxu0
      %v1186 = vadd.f32 0.0, %v1185
      %v1187 = vpop.f32.mrb[0].mxu0
      %v1188 = vadd.f32 0.0, %v1187
      %1189 = vdwg.mxu0
      %1190 = vmatprep.subr.mxu0 0.0
      %1191 = vmatpush1.msra.mxu0 %v1117
      %1192 = vmatprep.subr.mxu0 0.0
      %1193 = vmatpush1.msra.mxu0 0.0
      %1194 = vmatprep.subr.mxu0 0.0
      %1195 = vmatpush1.msra.mxu0 0.0
      %1196 = vmatprep.subr.mxu0 0.0
      %1197 = vmatpush1.msra.mxu0 0.0
      %1198 = vmatprep.subr.mxu0 0.0
      %1199 = vmatpush1.msra.mxu0 0.0
      %1200 = vmatprep.subr.mxu0 0.0
      %1201 = vmatpush1.msra.mxu0 0.0
      %1202 = vmatprep.subr.mxu0 0.0
      %1203 = vmatpush1.msra.mxu0 0.0
      %1204 = vmatprep.subr.mxu0 0.0
      %1205 = vmatpush1.msra.mxu0 0.0
      %1206 = vmatprep.subr.mxu0 0.0
      %1207 = vmatpush1.msra.mxu0 0.0
      %1208 = vmatprep.subr.mxu0 0.0
      %1209 = vmatpush1.msra.mxu0 0.0
      %1210 = vmatprep.subr.mxu0 0.0
      %1211 = vmatpush1.msra.mxu0 0.0
      %1212 = vmatprep.subr.mxu0 0.0
      %1213 = vmatpush1.msra.mxu0 0.0
      %1214 = vmatprep.subr.mxu0 0.0
      %1215 = vmatpush1.msra.mxu0 0.0
      %1216 = vmatprep.subr.mxu0 0.0
      %1217 = vmatpush1.msra.mxu0 0.0
      %1218 = vmatprep.subr.mxu0 0.0
      %1219 = vmatpush1.msra.mxu0 0.0
      %1220 = vmatprep.subr.mxu0 0.0
      %1221 = vmatpush1.msra.mxu0 0.0
      %1222 = vmatprep.subr.mxu0 0.0
      %1223 = vmatpush1.msra.mxu0 0.0
      %1224 = vmatprep.subr.mxu0 0.0
      %1225 = vmatpush1.msra.mxu0 0.0
      %1226 = vmatprep.subr.mxu0 0.0
      %1227 = vmatpush1.msra.mxu0 0.0
      %1228 = vmatprep.subr.mxu0 0.0
      %1229 = vmatpush1.msra.mxu0 0.0
      %1230 = vmatprep.subr.mxu0 0.0
      %1231 = vmatpush1.msra.mxu0 0.0
      %1232 = vmatprep.subr.mxu0 0.0
      %1233 = vmatpush1.msra.mxu0 0.0
      %1234 = vmatprep.subr.mxu0 0.0
      %1235 = vmatpush1.msra.mxu0 0.0
      %1236 = vmatprep.subr.mxu0 0.0
      %1237 = vmatpush1.msra.mxu0 0.0
      %1238 = vmatprep.subr.mxu0 0.0
      %1239 = vmatpush1.msra.mxu0 0.0
      %1240 = vmatprep.subr.mxu0 0.0
      %1241 = vmatpush1.msra.mxu0 0.0
      %1242 = vmatprep.subr.mxu0 0.0
      %1243 = vmatpush1.msra.mxu0 0.0
      %1244 = vmatprep.subr.mxu0 0.0
      %1245 = vmatpush1.msra.mxu0 0.0
      %1246 = vmatprep.subr.mxu0 0.0
      %1247 = vmatpush1.msra.mxu0 0.0
      %1248 = vmatprep.subr.mxu0 0.0
      %1249 = vmatpush1.msra.mxu0 0.0
      %1250 = vmatprep.subr.mxu0 0.0
      %1251 = vmatpush1.msra.mxu0 0.0
      %1252 = vmatprep.subr.mxu0 0.0
      %1253 = vmatpush1.msra.mxu0 0.0
      %1254 = vmatprep.mubr.f32.mxu0 0.0
      %1255 = vmatmul.mubr.f32.gmra.mrb[0].mxu0 %v1108
      %v1256 = vpop.f32.mrb[0].mxu0
      %v1257 = vadd.f32 0.0, %v1256
      %v1258 = vpop.f32.mrb[0].mxu0
      %1259 = vdwg.mxu0
      %v1260 = vadd.f32 %v1092, %v1186
      %v1261 = vadd.f32 %v1093, %v1188
      %v1262 = vadd.f32 %v1094, %v1257
      %s1263 = scalar_lea.vmem %s1, 24
      %v1264 = vld [vmem:[%s1263] sm:$0xf]
      %1265 = vrot.lane.b32.xlu0 %v252, 111
      %v1266 = vpop.permute.xlu0 %1265
      %1267 = vrot.lane.b32.xlu0 %v264, 111
      %v1268 = vpop.permute.xlu0 %1267
      %1269 = vrot.lane.b32.xlu0 %v253, 111
      %v1270 = vpop.permute.xlu0 %1269
      %vm1271 = vcmp.lt.s32.totalorder %v273, 111
      %v1272 = vsel %vm1271, %v1268, %v1270
      %v1273 = vsel %vm1271, %v1266, %v1268
      %v1274 = vsel %vm1271, %v1270, %v1266
      %v1276 = vsel %vm278, %v1264, 0
      %v1279 = vsel %vm282, %v1273, 0
      %v1282 = vsel %vm282, %v1272, 0
      %v1285 = vsel %vm282, %v1274, 0
      %1287 = vmatprep.subr.mxu0 %v1282
      %1288 = vmatpush1.msra.mxu0 %v1279
      %1289 = vmatprep.subr.mxu0 0.0
      %1290 = vmatpush1.msra.mxu0 0.0
      %1291 = vmatprep.subr.mxu0 0.0
      %1292 = vmatpush1.msra.mxu0 0.0
      %1293 = vmatprep.subr.mxu0 0.0
      %1294 = vmatpush1.msra.mxu0 0.0
      %1295 = vmatprep.subr.mxu0 0.0
      %1296 = vmatpush1.msra.mxu0 0.0
      %1297 = vmatprep.subr.mxu0 0.0
      %1298 = vmatpush1.msra.mxu0 0.0
      %1299 = vmatprep.subr.mxu0 0.0
      %1300 = vmatpush1.msra.mxu0 0.0
      %1301 = vmatprep.subr.mxu0 0.0
      %1302 = vmatpush1.msra.mxu0 0.0
      %1303 = vmatprep.subr.mxu0 0.0
      %1304 = vmatpush1.msra.mxu0 0.0
      %1305 = vmatprep.subr.mxu0 0.0
      %1306 = vmatpush1.msra.mxu0 0.0
      %1307 = vmatprep.subr.mxu0 0.0
      %1308 = vmatpush1.msra.mxu0 0.0
      %1309 = vmatprep.subr.mxu0 0.0
      %1310 = vmatpush1.msra.mxu0 0.0
      %1311 = vmatprep.subr.mxu0 0.0
      %1312 = vmatpush1.msra.mxu0 0.0
      %1313 = vmatprep.subr.mxu0 0.0
      %1314 = vmatpush1.msra.mxu0 0.0
      %1315 = vmatprep.subr.mxu0 0.0
      %1316 = vmatpush1.msra.mxu0 0.0
      %1317 = vmatprep.subr.mxu0 0.0
      %1318 = vmatpush1.msra.mxu0 0.0
      %1319 = vmatprep.subr.mxu0 0.0
      %1320 = vmatpush1.msra.mxu0 0.0
      %1321 = vmatprep.subr.mxu0 0.0
      %1322 = vmatpush1.msra.mxu0 0.0
      %1323 = vmatprep.subr.mxu0 0.0
      %1324 = vmatpush1.msra.mxu0 0.0
      %1325 = vmatprep.subr.mxu0 0.0
      %1326 = vmatpush1.msra.mxu0 0.0
      %1327 = vmatprep.subr.mxu0 0.0
      %1328 = vmatpush1.msra.mxu0 0.0
      %1329 = vmatprep.subr.mxu0 0.0
      %1330 = vmatpush1.msra.mxu0 0.0
      %1331 = vmatprep.subr.mxu0 0.0
      %1332 = vmatpush1.msra.mxu0 0.0
      %1333 = vmatprep.subr.mxu0 0.0
      %1334 = vmatpush1.msra.mxu0 0.0
      %1335 = vmatprep.subr.mxu0 0.0
      %1336 = vmatpush1.msra.mxu0 0.0
      %1337 = vmatprep.subr.mxu0 0.0
      %1338 = vmatpush1.msra.mxu0 0.0
      %1339 = vmatprep.subr.mxu0 0.0
      %1340 = vmatpush1.msra.mxu0 0.0
      %1341 = vmatprep.subr.mxu0 0.0
      %1342 = vmatpush1.msra.mxu0 0.0
      %1343 = vmatprep.subr.mxu0 0.0
      %1344 = vmatpush1.msra.mxu0 0.0
      %1345 = vmatprep.subr.mxu0 0.0
      %1346 = vmatpush1.msra.mxu0 0.0
      %1347 = vmatprep.subr.mxu0 0.0
      %1348 = vmatpush1.msra.mxu0 0.0
      %1349 = vmatprep.subr.mxu0 0.0
      %1350 = vmatpush1.msra.mxu0 0.0
      %1351 = vmatprep.mubr.f32.mxu0 0.0
      %1352 = vmatmul.mubr.f32.gmra.mrb[0].mxu0 %v1276
      %v1353 = vpop.f32.mrb[0].mxu0
      %v1354 = vadd.f32 0.0, %v1353
      %v1355 = vpop.f32.mrb[0].mxu0
      %v1356 = vadd.f32 0.0, %v1355
      %1357 = vdwg.mxu0
      %1358 = vmatprep.subr.mxu0 0.0
      %1359 = vmatpush1.msra.mxu0 %v1285
      %1360 = vmatprep.subr.mxu0 0.0
      %1361 = vmatpush1.msra.mxu0 0.0
      %1362 = vmatprep.subr.mxu0 0.0
      %1363 = vmatpush1.msra.mxu0 0.0
      %1364 = vmatprep.subr.mxu0 0.0
      %1365 = vmatpush1.msra.mxu0 0.0
      %1366 = vmatprep.subr.mxu0 0.0
      %1367 = vmatpush1.msra.mxu0 0.0
      %1368 = vmatprep.subr.mxu0 0.0
      %1369 = vmatpush1.msra.mxu0 0.0
      %1370 = vmatprep.subr.mxu0 0.0
      %1371 = vmatpush1.msra.mxu0 0.0
      %1372 = vmatprep.subr.mxu0 0.0
      %1373 = vmatpush1.msra.mxu0 0.0
      %1374 = vmatprep.subr.mxu0 0.0
      %1375 = vmatpush1.msra.mxu0 0.0
      %1376 = vmatprep.subr.mxu0 0.0
      %1377 = vmatpush1.msra.mxu0 0.0
      %1378 = vmatprep.subr.mxu0 0.0
      %1379 = vmatpush1.msra.mxu0 0.0
      %1380 = vmatprep.subr.mxu0 0.0
      %1381 = vmatpush1.msra.mxu0 0.0
      %1382 = vmatprep.subr.mxu0 0.0
      %1383 = vmatpush1.msra.mxu0 0.0
      %1384 = vmatprep.subr.mxu0 0.0
      %1385 = vmatpush1.msra.mxu0 0.0
      %1386 = vmatprep.subr.mxu0 0.0
      %1387 = vmatpush1.msra.mxu0 0.0
      %1388 = vmatprep.subr.mxu0 0.0
      %1389 = vmatpush1.msra.mxu0 0.0
      %1390 = vmatprep.subr.mxu0 0.0
      %1391 = vmatpush1.msra.mxu0 0.0
      %1392 = vmatprep.subr.mxu0 0.0
      %1393 = vmatpush1.msra.mxu0 0.0
      %1394 = vmatprep.subr.mxu0 0.0
      %1395 = vmatpush1.msra.mxu0 0.0
      %1396 = vmatprep.subr.mxu0 0.0
      %1397 = vmatpush1.msra.mxu0 0.0
      %1398 = vmatprep.subr.mxu0 0.0
      %1399 = vmatpush1.msra.mxu0 0.0
      %1400 = vmatprep.subr.mxu0 0.0
      %1401 = vmatpush1.msra.mxu0 0.0
      %1402 = vmatprep.subr.mxu0 0.0
      %1403 = vmatpush1.msra.mxu0 0.0
      %1404 = vmatprep.subr.mxu0 0.0
      %1405 = vmatpush1.msra.mxu0 0.0
      %1406 = vmatprep.subr.mxu0 0.0
      %1407 = vmatpush1.msra.mxu0 0.0
      %1408 = vmatprep.subr.mxu0 0.0
      %1409 = vmatpush1.msra.mxu0 0.0
      %1410 = vmatprep.subr.mxu0 0.0
      %1411 = vmatpush1.msra.mxu0 0.0
      %1412 = vmatprep.subr.mxu0 0.0
      %1413 = vmatpush1.msra.mxu0 0.0
      %1414 = vmatprep.subr.mxu0 0.0
      %1415 = vmatpush1.msra.mxu0 0.0
      %1416 = vmatprep.subr.mxu0 0.0
      %1417 = vmatpush1.msra.mxu0 0.0
      %1418 = vmatprep.subr.mxu0 0.0
      %1419 = vmatpush1.msra.mxu0 0.0
      %1420 = vmatprep.subr.mxu0 0.0
      %1421 = vmatpush1.msra.mxu0 0.0
      %1422 = vmatprep.mubr.f32.mxu0 0.0
      %1423 = vmatmul.mubr.f32.gmra.mrb[0].mxu0 %v1276
      %v1424 = vpop.f32.mrb[0].mxu0
      %v1425 = vadd.f32 0.0, %v1424
      %v1426 = vpop.f32.mrb[0].mxu0
      %1427 = vdwg.mxu0
      %v1428 = vadd.f32 %v1260, %v1354
      %v1429 = vadd.f32 %v1261, %v1356
      %v1430 = vadd.f32 %v1262, %v1425
      %s1431 = scalar_lea.vmem %s1, 28
      %v1432 = vld [vmem:[%s1431] sm:$0xf]
      %1433 = vrot.lane.b32.xlu0 %v252, 110
      %v1434 = vpop.permute.xlu0 %1433
      %1435 = vrot.lane.b32.xlu0 %v264, 110
      %v1436 = vpop.permute.xlu0 %1435
      %1437 = vrot.lane.b32.xlu0 %v253, 110
      %v1438 = vpop.permute.xlu0 %1437
      %vm1439 = vcmp.lt.s32.totalorder %v273, 110
      %v1440 = vsel %vm1439, %v1436, %v1438
      %v1441 = vsel %vm1439, %v1434, %v1436
      %v1442 = vsel %vm1439, %v1438, %v1434
      %v1444 = vsel %vm278, %v1432, 0
      %v1447 = vsel %vm282, %v1441, 0
      %v1450 = vsel %vm282, %v1440, 0
      %v1453 = vsel %vm282, %v1442, 0
      %1455 = vmatprep.subr.mxu0 %v1450
      %1456 = vmatpush1.msra.mxu0 %v1447
      %1457 = vmatprep.subr.mxu0 0.0
      %1458 = vmatpush1.msra.mxu0 0.0
      %1459 = vmatprep.subr.mxu0 0.0
      %1460 = vmatpush1.msra.mxu0 0.0
      %1461 = vmatprep.subr.mxu0 0.0
      %1462 = vmatpush1.msra.mxu0 0.0
      %1463 = vmatprep.subr.mxu0 0.0
      %1464 = vmatpush1.msra.mxu0 0.0
      %1465 = vmatprep.subr.mxu0 0.0
      %1466 = vmatpush1.msra.mxu0 0.0
      %1467 = vmatprep.subr.mxu0 0.0
      %1468 = vmatpush1.msra.mxu0 0.0
      %1469 = vmatprep.subr.mxu0 0.0
      %1470 = vmatpush1.msra.mxu0 0.0
      %1471 = vmatprep.subr.mxu0 0.0
      %1472 = vmatpush1.msra.mxu0 0.0
      %1473 = vmatprep.subr.mxu0 0.0
      %1474 = vmatpush1.msra.mxu0 0.0
      %1475 = vmatprep.subr.mxu0 0.0
      %1476 = vmatpush1.msra.mxu0 0.0
      %1477 = vmatprep.subr.mxu0 0.0
      %1478 = vmatpush1.msra.mxu0 0.0
      %1479 = vmatprep.subr.mxu0 0.0
      %1480 = vmatpush1.msra.mxu0 0.0
      %1481 = vmatprep.subr.mxu0 0.0
      %1482 = vmatpush1.msra.mxu0 0.0
      %1483 = vmatprep.subr.mxu0 0.0
      %1484 = vmatpush1.msra.mxu0 0.0
      %1485 = vmatprep.subr.mxu0 0.0
      %1486 = vmatpush1.msra.mxu0 0.0
      %1487 = vmatprep.subr.mxu0 0.0
      %1488 = vmatpush1.msra.mxu0 0.0
      %1489 = vmatprep.subr.mxu0 0.0
      %1490 = vmatpush1.msra.mxu0 0.0
      %1491 = vmatprep.subr.mxu0 0.0
      %1492 = vmatpush1.msra.mxu0 0.0
      %1493 = vmatprep.subr.mxu0 0.0
      %1494 = vmatpush1.msra.mxu0 0.0
      %1495 = vmatprep.subr.mxu0 0.0
      %1496 = vmatpush1.msra.mxu0 0.0
      %1497 = vmatprep.subr.mxu0 0.0
      %1498 = vmatpush1.msra.mxu0 0.0
      %1499 = vmatprep.subr.mxu0 0.0
      %1500 = vmatpush1.msra.mxu0 0.0
      %1501 = vmatprep.subr.mxu0 0.0
      %1502 = vmatpush1.msra.mxu0 0.0
      %1503 = vmatprep.subr.mxu0 0.0
      %1504 = vmatpush1.msra.mxu0 0.0
      %1505 = vmatprep.subr.mxu0 0.0
      %1506 = vmatpush1.msra.mxu0 0.0
      %1507 = vmatprep.subr.mxu0 0.0
      %1508 = vmatpush1.msra.mxu0 0.0
      %1509 = vmatprep.subr.mxu0 0.0
      %1510 = vmatpush1.msra.mxu0 0.0
      %1511 = vmatprep.subr.mxu0 0.0
      %1512 = vmatpush1.msra.mxu0 0.0
      %1513 = vmatprep.subr.mxu0 0.0
      %1514 = vmatpush1.msra.mxu0 0.0
      %1515 = vmatprep.subr.mxu0 0.0
      %1516 = vmatpush1.msra.mxu0 0.0
      %1517 = vmatprep.subr.mxu0 0.0
      %1518 = vmatpush1.msra.mxu0 0.0
      %1519 = vmatprep.mubr.f32.mxu0 0.0
      %1520 = vmatmul.mubr.f32.gmra.mrb[0].mxu0 %v1444
      %v1521 = vpop.f32.mrb[0].mxu0
      %v1522 = vadd.f32 0.0, %v1521
      %v1523 = vpop.f32.mrb[0].mxu0
      %v1524 = vadd.f32 0.0, %v1523
      %1525 = vdwg.mxu0
      %1526 = vmatprep.subr.mxu0 0.0
      %1527 = vmatpush1.msra.mxu0 %v1453
      %1528 = vmatprep.subr.mxu0 0.0
      %1529 = vmatpush1.msra.mxu0 0.0
      %1530 = vmatprep.subr.mxu0 0.0
      %1531 = vmatpush1.msra.mxu0 0.0
      %1532 = vmatprep.subr.mxu0 0.0
      %1533 = vmatpush1.msra.mxu0 0.0
      %1534 = vmatprep.subr.mxu0 0.0
      %1535 = vmatpush1.msra.mxu0 0.0
      %1536 = vmatprep.subr.mxu0 0.0
      %1537 = vmatpush1.msra.mxu0 0.0
      %1538 = vmatprep.subr.mxu0 0.0
      %1539 = vmatpush1.msra.mxu0 0.0
      %1540 = vmatprep.subr.mxu0 0.0
      %1541 = vmatpush1.msra.mxu0 0.0
      %1542 = vmatprep.subr.mxu0 0.0
      %1543 = vmatpush1.msra.mxu0 0.0
      %1544 = vmatprep.subr.mxu0 0.0
      %1545 = vmatpush1.msra.mxu0 0.0
      %1546 = vmatprep.subr.mxu0 0.0
      %1547 = vmatpush1.msra.mxu0 0.0
      %1548 = vmatprep.subr.mxu0 0.0
      %1549 = vmatpush1.msra.mxu0 0.0
      %1550 = vmatprep.subr.mxu0 0.0
      %1551 = vmatpush1.msra.mxu0 0.0
      %1552 = vmatprep.subr.mxu0 0.0
      %1553 = vmatpush1.msra.mxu0 0.0
      %1554 = vmatprep.subr.mxu0 0.0
      %1555 = vmatpush1.msra.mxu0 0.0
      %1556 = vmatprep.subr.mxu0 0.0
      %1557 = vmatpush1.msra.mxu0 0.0
      %1558 = vmatprep.subr.mxu0 0.0
      %1559 = vmatpush1.msra.mxu0 0.0
      %1560 = vmatprep.subr.mxu0 0.0
      %1561 = vmatpush1.msra.mxu0 0.0
      %1562 = vmatprep.subr.mxu0 0.0
      %1563 = vmatpush1.msra.mxu0 0.0
      %1564 = vmatprep.subr.mxu0 0.0
      %1565 = vmatpush1.msra.mxu0 0.0
      %1566 = vmatprep.subr.mxu0 0.0
      %1567 = vmatpush1.msra.mxu0 0.0
      %1568 = vmatprep.subr.mxu0 0.0
      %1569 = vmatpush1.msra.mxu0 0.0
      %1570 = vmatprep.subr.mxu0 0.0
      %1571 = vmatpush1.msra.mxu0 0.0
      %1572 = vmatprep.subr.mxu0 0.0
      %1573 = vmatpush1.msra.mxu0 0.0
      %1574 = vmatprep.subr.mxu0 0.0
      %1575 = vmatpush1.msra.mxu0 0.0
      %1576 = vmatprep.subr.mxu0 0.0
      %1577 = vmatpush1.msra.mxu0 0.0
      %1578 = vmatprep.subr.mxu0 0.0
      %1579 = vmatpush1.msra.mxu0 0.0
      %1580 = vmatprep.subr.mxu0 0.0
      %1581 = vmatpush1.msra.mxu0 0.0
      %1582 = vmatprep.subr.mxu0 0.0
      %1583 = vmatpush1.msra.mxu0 0.0
      %1584 = vmatprep.subr.mxu0 0.0
      %1585 = vmatpush1.msra.mxu0 0.0
      %1586 = vmatprep.subr.mxu0 0.0
      %1587 = vmatpush1.msra.mxu0 0.0
      %1588 = vmatprep.subr.mxu0 0.0
      %1589 = vmatpush1.msra.mxu0 0.0
      %1590 = vmatprep.mubr.f32.mxu0 0.0
      %1591 = vmatmul.mubr.f32.gmra.mrb[0].mxu0 %v1444
      %v1592 = vpop.f32.mrb[0].mxu0
      %v1593 = vadd.f32 0.0, %v1592
      %v1594 = vpop.f32.mrb[0].mxu0
      %1595 = vdwg.mxu0
      %v1596 = vadd.f32 %v1428, %v1522
      %v1597 = vadd.f32 %v1429, %v1524
      %v1598 = vadd.f32 %v1430, %v1593
      %s1599 = scalar_lea.vmem %s1, 32
      %v1600 = vld [vmem:[%s1599] sm:$0xf]
      %1601 = vrot.lane.b32.xlu0 %v252, 109
      %v1602 = vpop.permute.xlu0 %1601
      %1603 = vrot.lane.b32.xlu0 %v264, 109
      %v1604 = vpop.permute.xlu0 %1603
      %1605 = vrot.lane.b32.xlu0 %v253, 109
      %v1606 = vpop.permute.xlu0 %1605
      %vm1607 = vcmp.lt.s32.totalorder %v273, 109
      %v1608 = vsel %vm1607, %v1604, %v1606
      %v1609 = vsel %vm1607, %v1602, %v1604
      %v1610 = vsel %vm1607, %v1606, %v1602
      %v1612 = vsel %vm278, %v1600, 0
      %v1615 = vsel %vm282, %v1609, 0
      %v1618 = vsel %vm282, %v1608, 0
      %v1621 = vsel %vm282, %v1610, 0
      %1623 = vmatprep.subr.mxu0 %v1618
      %1624 = vmatpush1.msra.mxu0 %v1615
      %1625 = vmatprep.subr.mxu0 0.0
      %1626 = vmatpush1.msra.mxu0 0.0
      %1627 = vmatprep.subr.mxu0 0.0
      %1628 = vmatpush1.msra.mxu0 0.0
      %1629 = vmatprep.subr.mxu0 0.0
      %1630 = vmatpush1.msra.mxu0 0.0
      %1631 = vmatprep.subr.mxu0 0.0
      %1632 = vmatpush1.msra.mxu0 0.0
      %1633 = vmatprep.subr.mxu0 0.0
      %1634 = vmatpush1.msra.mxu0 0.0
      %1635 = vmatprep.subr.mxu0 0.0
      %1636 = vmatpush1.msra.mxu0 0.0
      %1637 = vmatprep.subr.mxu0 0.0
      %1638 = vmatpush1.msra.mxu0 0.0
      %1639 = vmatprep.subr.mxu0 0.0
      %1640 = vmatpush1.msra.mxu0 0.0
      %1641 = vmatprep.subr.mxu0 0.0
      %1642 = vmatpush1.msra.mxu0 0.0
      %1643 = vmatprep.subr.mxu0 0.0
      %1644 = vmatpush1.msra.mxu0 0.0
      %1645 = vmatprep.subr.mxu0 0.0
      %1646 = vmatpush1.msra.mxu0 0.0
      %1647 = vmatprep.subr.mxu0 0.0
      %1648 = vmatpush1.msra.mxu0 0.0
      %1649 = vmatprep.subr.mxu0 0.0
      %1650 = vmatpush1.msra.mxu0 0.0
      %1651 = vmatprep.subr.mxu0 0.0
      %1652 = vmatpush1.msra.mxu0 0.0
      %1653 = vmatprep.subr.mxu0 0.0
      %1654 = vmatpush1.msra.mxu0 0.0
      %1655 = vmatprep.subr.mxu0 0.0
      %1656 = vmatpush1.msra.mxu0 0.0
      %1657 = vmatprep.subr.mxu0 0.0
      %1658 = vmatpush1.msra.mxu0 0.0
      %1659 = vmatprep.subr.mxu0 0.0
      %1660 = vmatpush1.msra.mxu0 0.0
      %1661 = vmatprep.subr.mxu0 0.0
      %1662 = vmatpush1.msra.mxu0 0.0
      %1663 = vmatprep.subr.mxu0 0.0
      %1664 = vmatpush1.msra.mxu0 0.0
      %1665 = vmatprep.subr.mxu0 0.0
      %1666 = vmatpush1.msra.mxu0 0.0
      %1667 = vmatprep.subr.mxu0 0.0
      %1668 = vmatpush1.msra.mxu0 0.0
      %1669 = vmatprep.subr.mxu0 0.0
      %1670 = vmatpush1.msra.mxu0 0.0
      %1671 = vmatprep.subr.mxu0 0.0
      %1672 = vmatpush1.msra.mxu0 0.0
      %1673 = vmatprep.subr.mxu0 0.0
      %1674 = vmatpush1.msra.mxu0 0.0
      %1675 = vmatprep.subr.mxu0 0.0
      %1676 = vmatpush1.msra.mxu0 0.0
      %1677 = vmatprep.subr.mxu0 0.0
      %1678 = vmatpush1.msra.mxu0 0.0
      %1679 = vmatprep.subr.mxu0 0.0
      %1680 = vmatpush1.msra.mxu0 0.0
      %1681 = vmatprep.subr.mxu0 0.0
      %1682 = vmatpush1.msra.mxu0 0.0
      %1683 = vmatprep.subr.mxu0 0.0
      %1684 = vmatpush1.msra.mxu0 0.0
      %1685 = vmatprep.subr.mxu0 0.0
      %1686 = vmatpush1.msra.mxu0 0.0
      %1687 = vmatprep.mubr.f32.mxu0 0.0
      %1688 = vmatmul.mubr.f32.gmra.mrb[0].mxu0 %v1612
      %v1689 = vpop.f32.mrb[0].mxu0
      %v1690 = vadd.f32 0.0, %v1689
      %v1691 = vpop.f32.mrb[0].mxu0
      %v1692 = vadd.f32 0.0, %v1691
      %1693 = vdwg.mxu0
      %1694 = vmatprep.subr.mxu0 0.0
      %1695 = vmatpush1.msra.mxu0 %v1621
      %1696 = vmatprep.subr.mxu0 0.0
      %1697 = vmatpush1.msra.mxu0 0.0
      %1698 = vmatprep.subr.mxu0 0.0
      %1699 = vmatpush1.msra.mxu0 0.0
      %1700 = vmatprep.subr.mxu0 0.0
      %1701 = vmatpush1.msra.mxu0 0.0
      %1702 = vmatprep.subr.mxu0 0.0
      %1703 = vmatpush1.msra.mxu0 0.0
      %1704 = vmatprep.subr.mxu0 0.0
      %1705 = vmatpush1.msra.mxu0 0.0
      %1706 = vmatprep.subr.mxu0 0.0
      %1707 = vmatpush1.msra.mxu0 0.0
      %1708 = vmatprep.subr.mxu0 0.0
      %1709 = vmatpush1.msra.mxu0 0.0
      %1710 = vmatprep.subr.mxu0 0.0
      %1711 = vmatpush1.msra.mxu0 0.0
      %1712 = vmatprep.subr.mxu0 0.0
      %1713 = vmatpush1.msra.mxu0 0.0
      %1714 = vmatprep.subr.mxu0 0.0
      %1715 = vmatpush1.msra.mxu0 0.0
      %1716 = vmatprep.subr.mxu0 0.0
      %1717 = vmatpush1.msra.mxu0 0.0
      %1718 = vmatprep.subr.mxu0 0.0
      %1719 = vmatpush1.msra.mxu0 0.0
      %1720 = vmatprep.subr.mxu0 0.0
      %1721 = vmatpush1.msra.mxu0 0.0
      %1722 = vmatprep.subr.mxu0 0.0
      %1723 = vmatpush1.msra.mxu0 0.0
      %1724 = vmatprep.subr.mxu0 0.0
      %1725 = vmatpush1.msra.mxu0 0.0
      %1726 = vmatprep.subr.mxu0 0.0
      %1727 = vmatpush1.msra.mxu0 0.0
      %1728 = vmatprep.subr.mxu0 0.0
      %1729 = vmatpush1.msra.mxu0 0.0
      %1730 = vmatprep.subr.mxu0 0.0
      %1731 = vmatpush1.msra.mxu0 0.0
      %1732 = vmatprep.subr.mxu0 0.0
      %1733 = vmatpush1.msra.mxu0 0.0
      %1734 = vmatprep.subr.mxu0 0.0
      %1735 = vmatpush1.msra.mxu0 0.0
      %1736 = vmatprep.subr.mxu0 0.0
      %1737 = vmatpush1.msra.mxu0 0.0
      %1738 = vmatprep.subr.mxu0 0.0
      %1739 = vmatpush1.msra.mxu0 0.0
      %1740 = vmatprep.subr.mxu0 0.0
      %1741 = vmatpush1.msra.mxu0 0.0
      %1742 = vmatprep.subr.mxu0 0.0
      %1743 = vmatpush1.msra.mxu0 0.0
      %1744 = vmatprep.subr.mxu0 0.0
      %1745 = vmatpush1.msra.mxu0 0.0
      %1746 = vmatprep.subr.mxu0 0.0
      %1747 = vmatpush1.msra.mxu0 0.0
      %1748 = vmatprep.subr.mxu0 0.0
      %1749 = vmatpush1.msra.mxu0 0.0
      %1750 = vmatprep.subr.mxu0 0.0
      %1751 = vmatpush1.msra.mxu0 0.0
      %1752 = vmatprep.subr.mxu0 0.0
      %1753 = vmatpush1.msra.mxu0 0.0
      %1754 = vmatprep.subr.mxu0 0.0
      %1755 = vmatpush1.msra.mxu0 0.0
      %1756 = vmatprep.subr.mxu0 0.0
      %1757 = vmatpush1.msra.mxu0 0.0
      %1758 = vmatprep.mubr.f32.mxu0 0.0
      %1759 = vmatmul.mubr.f32.gmra.mrb[0].mxu0 %v1612
      %v1760 = vpop.f32.mrb[0].mxu0
      %v1761 = vadd.f32 0.0, %v1760
      %v1762 = vpop.f32.mrb[0].mxu0
      %1763 = vdwg.mxu0
      %v1764 = vadd.f32 %v1596, %v1690
      %v1765 = vadd.f32 %v1597, %v1692
      %v1766 = vadd.f32 %v1598, %v1761
      %v1767 = vmax.f32 %v1764, 0.0
      %v1768 = vmax.f32 %v1765, 0.0
      %v1769 = vmax.f32 %v1766, 0.0
      %v1771 = vlaneseq
      %v1772 = vshrl.u32 %v1771, 7
      %v1773 = vsub.s32 0, %v1772
      %v1774 = vrot.slane %v254, %v1773
      %v1775 = vlaneseq
      %v1776 = vshrl.u32 %v1775, 7
      %v1777 = vsub.s32 1, %v1776
      %v1778 = vrot.slane %v254, %v1777
      %v1779 = vlaneseq
      %v1780 = vshrl.u32 %v1779, 7
      %v1781 = vsub.s32 2, %v1780
      %v1782 = vrot.slane %v254, %v1781
      %v1786 = vmul.f32 %v1767, %v1774
      %v1787 = vmul.f32 %v1768, %v1778
      %v1788 = vmul.f32 %v1769, %v1782
      %v1789 = vld [vmem:[%s4] sm:$0xf]
      %1791 = vset.pattern.permute.xlu0 0
      %1792 = vperm.xlu0 %1791, %v1789
      %v1793 = vpop.permute.xlu0 %1792
      %v1795 = vadd.f32 %v1793, %v252
      %v1796 = vadd.f32 %v1793, %v264
      %v1797 = vadd.f32 %v1793, %v253
      %v1798 = vld [vmem:[%s3] sm:$0xf]
      %1799 = vrot.lane.b32.xlu0 %v1786, 19
      %v1800 = vpop.permute.xlu0 %1799
      %1801 = vrot.lane.b32.xlu0 %v1787, 19
      %v1802 = vpop.permute.xlu0 %1801
      %1803 = vrot.lane.b32.xlu0 %v1788, 19
      %v1804 = vpop.permute.xlu0 %1803
      %v1805 = vsel %vm274, %v1802, %v1804
      %v1806 = vsel %vm274, %v1800, %v1802
      %v1807 = vsel %vm274, %v1804, %v1800
      %v1809 = vsel %vm278, %v1798, 0
      %v1812 = vsel %vm282, %v1807, 0
      %v1815 = vsel %vm282, %v1806, 0
      %v1818 = vsel %vm282, %v1805, 0
      %1820 = vmatprep.subr.mxu0 %v1815
      %1821 = vmatpush1.msra.mxu0 %v1812
      %1822 = vmatprep.subr.mxu0 0.0
      %1823 = vmatpush1.msra.mxu0 0.0
      %1824 = vmatprep.subr.mxu0 0.0
      %1825 = vmatpush1.msra.mxu0 0.0
      %1826 = vmatprep.subr.mxu0 0.0
      %1827 = vmatpush1.msra.mxu0 0.0
      %1828 = vmatprep.subr.mxu0 0.0
      %1829 = vmatpush1.msra.mxu0 0.0
      %1830 = vmatprep.subr.mxu0 0.0
      %1831 = vmatpush1.msra.mxu0 0.0
      %1832 = vmatprep.subr.mxu0 0.0
      %1833 = vmatpush1.msra.mxu0 0.0
      %1834 = vmatprep.subr.mxu0 0.0
      %1835 = vmatpush1.msra.mxu0 0.0
      %1836 = vmatprep.subr.mxu0 0.0
      %1837 = vmatpush1.msra.mxu0 0.0
      %1838 = vmatprep.subr.mxu0 0.0
      %1839 = vmatpush1.msra.mxu0 0.0
      %1840 = vmatprep.subr.mxu0 0.0
      %1841 = vmatpush1.msra.mxu0 0.0
      %1842 = vmatprep.subr.mxu0 0.0
      %1843 = vmatpush1.msra.mxu0 0.0
      %1844 = vmatprep.subr.mxu0 0.0
      %1845 = vmatpush1.msra.mxu0 0.0
      %1846 = vmatprep.subr.mxu0 0.0
      %1847 = vmatpush1.msra.mxu0 0.0
      %1848 = vmatprep.subr.mxu0 0.0
      %1849 = vmatpush1.msra.mxu0 0.0
      %1850 = vmatprep.subr.mxu0 0.0
      %1851 = vmatpush1.msra.mxu0 0.0
      %1852 = vmatprep.subr.mxu0 0.0
      %1853 = vmatpush1.msra.mxu0 0.0
      %1854 = vmatprep.subr.mxu0 0.0
      %1855 = vmatpush1.msra.mxu0 0.0
      %1856 = vmatprep.subr.mxu0 0.0
      %1857 = vmatpush1.msra.mxu0 0.0
      %1858 = vmatprep.subr.mxu0 0.0
      %1859 = vmatpush1.msra.mxu0 0.0
      %1860 = vmatprep.subr.mxu0 0.0
      %1861 = vmatpush1.msra.mxu0 0.0
      %1862 = vmatprep.subr.mxu0 0.0
      %1863 = vmatpush1.msra.mxu0 0.0
      %1864 = vmatprep.subr.mxu0 0.0
      %1865 = vmatpush1.msra.mxu0 0.0
      %1866 = vmatprep.subr.mxu0 0.0
      %1867 = vmatpush1.msra.mxu0 0.0
      %1868 = vmatprep.subr.mxu0 0.0
      %1869 = vmatpush1.msra.mxu0 0.0
      %1870 = vmatprep.subr.mxu0 0.0
      %1871 = vmatpush1.msra.mxu0 0.0
      %1872 = vmatprep.subr.mxu0 0.0
      %1873 = vmatpush1.msra.mxu0 0.0
      %1874 = vmatprep.subr.mxu0 0.0
      %1875 = vmatpush1.msra.mxu0 0.0
      %1876 = vmatprep.subr.mxu0 0.0
      %1877 = vmatpush1.msra.mxu0 0.0
      %1878 = vmatprep.subr.mxu0 0.0
      %1879 = vmatpush1.msra.mxu0 0.0
      %1880 = vmatprep.subr.mxu0 0.0
      %1881 = vmatpush1.msra.mxu0 0.0
      %1882 = vmatprep.subr.mxu0 0.0
      %1883 = vmatpush1.msra.mxu0 0.0
      %1884 = vmatprep.mubr.f32.mxu0 0.0
      %1885 = vmatmul.mubr.f32.gmra.mrb[0].mxu0 %v1809
      %v1886 = vpop.f32.mrb[0].mxu0
      %v1887 = vadd.f32 0.0, %v1886
      %v1888 = vpop.f32.mrb[0].mxu0
      %v1889 = vadd.f32 0.0, %v1888
      %1890 = vdwg.mxu0
      %1891 = vmatprep.subr.mxu0 0.0
      %1892 = vmatpush1.msra.mxu0 %v1818
      %1893 = vmatprep.subr.mxu0 0.0
      %1894 = vmatpush1.msra.mxu0 0.0
      %1895 = vmatprep.subr.mxu0 0.0
      %1896 = vmatpush1.msra.mxu0 0.0
      %1897 = vmatprep.subr.mxu0 0.0
      %1898 = vmatpush1.msra.mxu0 0.0
      %1899 = vmatprep.subr.mxu0 0.0
      %1900 = vmatpush1.msra.mxu0 0.0
      %1901 = vmatprep.subr.mxu0 0.0
      %1902 = vmatpush1.msra.mxu0 0.0
      %1903 = vmatprep.subr.mxu0 0.0
      %1904 = vmatpush1.msra.mxu0 0.0
      %1905 = vmatprep.subr.mxu0 0.0
      %1906 = vmatpush1.msra.mxu0 0.0
      %1907 = vmatprep.subr.mxu0 0.0
      %1908 = vmatpush1.msra.mxu0 0.0
      %1909 = vmatprep.subr.mxu0 0.0
      %1910 = vmatpush1.msra.mxu0 0.0
      %1911 = vmatprep.subr.mxu0 0.0
      %1912 = vmatpush1.msra.mxu0 0.0
      %1913 = vmatprep.subr.mxu0 0.0
      %1914 = vmatpush1.msra.mxu0 0.0
      %1915 = vmatprep.subr.mxu0 0.0
      %1916 = vmatpush1.msra.mxu0 0.0
      %1917 = vmatprep.subr.mxu0 0.0
      %1918 = vmatpush1.msra.mxu0 0.0
      %1919 = vmatprep.subr.mxu0 0.0
      %1920 = vmatpush1.msra.mxu0 0.0
      %1921 = vmatprep.subr.mxu0 0.0
      %1922 = vmatpush1.msra.mxu0 0.0
      %1923 = vmatprep.subr.mxu0 0.0
      %1924 = vmatpush1.msra.mxu0 0.0
      %1925 = vmatprep.subr.mxu0 0.0
      %1926 = vmatpush1.msra.mxu0 0.0
      %1927 = vmatprep.subr.mxu0 0.0
      %1928 = vmatpush1.msra.mxu0 0.0
      %1929 = vmatprep.subr.mxu0 0.0
      %1930 = vmatpush1.msra.mxu0 0.0
      %1931 = vmatprep.subr.mxu0 0.0
      %1932 = vmatpush1.msra.mxu0 0.0
      %1933 = vmatprep.subr.mxu0 0.0
      %1934 = vmatpush1.msra.mxu0 0.0
      %1935 = vmatprep.subr.mxu0 0.0
      %1936 = vmatpush1.msra.mxu0 0.0
      %1937 = vmatprep.subr.mxu0 0.0
      %1938 = vmatpush1.msra.mxu0 0.0
      %1939 = vmatprep.subr.mxu0 0.0
      %1940 = vmatpush1.msra.mxu0 0.0
      %1941 = vmatprep.subr.mxu0 0.0
      %1942 = vmatpush1.msra.mxu0 0.0
      %1943 = vmatprep.subr.mxu0 0.0
      %1944 = vmatpush1.msra.mxu0 0.0
      %1945 = vmatprep.subr.mxu0 0.0
      %1946 = vmatpush1.msra.mxu0 0.0
      %1947 = vmatprep.subr.mxu0 0.0
      %1948 = vmatpush1.msra.mxu0 0.0
      %1949 = vmatprep.subr.mxu0 0.0
      %1950 = vmatpush1.msra.mxu0 0.0
      %1951 = vmatprep.subr.mxu0 0.0
      %1952 = vmatpush1.msra.mxu0 0.0
      %1953 = vmatprep.subr.mxu0 0.0
      %1954 = vmatpush1.msra.mxu0 0.0
      %1955 = vmatprep.mubr.f32.mxu0 0.0
      %1956 = vmatmul.mubr.f32.gmra.mrb[0].mxu0 %v1809
      %v1957 = vpop.f32.mrb[0].mxu0
      %v1958 = vadd.f32 0.0, %v1957
      %v1959 = vpop.f32.mrb[0].mxu0
      %1960 = vdwg.mxu0
      %v1961 = vadd.f32 %v1795, %v1887
      %v1962 = vadd.f32 %v1796, %v1889
      %v1963 = vadd.f32 %v1797, %v1958
      %s1964 = scalar_lea.vmem %s3, 4
      %v1965 = vld [vmem:[%s1964] sm:$0xf]
      %1966 = vrot.lane.b32.xlu0 %v1786, 18
      %v1967 = vpop.permute.xlu0 %1966
      %1968 = vrot.lane.b32.xlu0 %v1787, 18
      %v1969 = vpop.permute.xlu0 %1968
      %1970 = vrot.lane.b32.xlu0 %v1788, 18
      %v1971 = vpop.permute.xlu0 %1970
      %v1972 = vsel %vm444, %v1969, %v1971
      %v1973 = vsel %vm444, %v1967, %v1969
      %v1974 = vsel %vm444, %v1971, %v1967
      %v1976 = vsel %vm278, %v1965, 0
      %v1979 = vsel %vm282, %v1974, 0
      %v1982 = vsel %vm282, %v1973, 0
      %v1985 = vsel %vm282, %v1972, 0
      %1987 = vmatprep.subr.mxu0 %v1982
      %1988 = vmatpush1.msra.mxu0 %v1979
      %1989 = vmatprep.subr.mxu0 0.0
      %1990 = vmatpush1.msra.mxu0 0.0
      %1991 = vmatprep.subr.mxu0 0.0
      %1992 = vmatpush1.msra.mxu0 0.0
      %1993 = vmatprep.subr.mxu0 0.0
      %1994 = vmatpush1.msra.mxu0 0.0
      %1995 = vmatprep.subr.mxu0 0.0
      %1996 = vmatpush1.msra.mxu0 0.0
      %1997 = vmatprep.subr.mxu0 0.0
      %1998 = vmatpush1.msra.mxu0 0.0
      %1999 = vmatprep.subr.mxu0 0.0
      %2000 = vmatpush1.msra.mxu0 0.0
      %2001 = vmatprep.subr.mxu0 0.0
      %2002 = vmatpush1.msra.mxu0 0.0
      %2003 = vmatprep.subr.mxu0 0.0
      %2004 = vmatpush1.msra.mxu0 0.0
      %2005 = vmatprep.subr.mxu0 0.0
      %2006 = vmatpush1.msra.mxu0 0.0
      %2007 = vmatprep.subr.mxu0 0.0
      %2008 = vmatpush1.msra.mxu0 0.0
      %2009 = vmatprep.subr.mxu0 0.0
      %2010 = vmatpush1.msra.mxu0 0.0
      %2011 = vmatprep.subr.mxu0 0.0
      %2012 = vmatpush1.msra.mxu0 0.0
      %2013 = vmatprep.subr.mxu0 0.0
      %2014 = vmatpush1.msra.mxu0 0.0
      %2015 = vmatprep.subr.mxu0 0.0
      %2016 = vmatpush1.msra.mxu0 0.0
      %2017 = vmatprep.subr.mxu0 0.0
      %2018 = vmatpush1.msra.mxu0 0.0
      %2019 = vmatprep.subr.mxu0 0.0
      %2020 = vmatpush1.msra.mxu0 0.0
      %2021 = vmatprep.subr.mxu0 0.0
      %2022 = vmatpush1.msra.mxu0 0.0
      %2023 = vmatprep.subr.mxu0 0.0
      %2024 = vmatpush1.msra.mxu0 0.0
      %2025 = vmatprep.subr.mxu0 0.0
      %2026 = vmatpush1.msra.mxu0 0.0
      %2027 = vmatprep.subr.mxu0 0.0
      %2028 = vmatpush1.msra.mxu0 0.0
      %2029 = vmatprep.subr.mxu0 0.0
      %2030 = vmatpush1.msra.mxu0 0.0
      %2031 = vmatprep.subr.mxu0 0.0
      %2032 = vmatpush1.msra.mxu0 0.0
      %2033 = vmatprep.subr.mxu0 0.0
      %2034 = vmatpush1.msra.mxu0 0.0
      %2035 = vmatprep.subr.mxu0 0.0
      %2036 = vmatpush1.msra.mxu0 0.0
      %2037 = vmatprep.subr.mxu0 0.0
      %2038 = vmatpush1.msra.mxu0 0.0
      %2039 = vmatprep.subr.mxu0 0.0
      %2040 = vmatpush1.msra.mxu0 0.0
      %2041 = vmatprep.subr.mxu0 0.0
      %2042 = vmatpush1.msra.mxu0 0.0
      %2043 = vmatprep.subr.mxu0 0.0
      %2044 = vmatpush1.msra.mxu0 0.0
      %2045 = vmatprep.subr.mxu0 0.0
      %2046 = vmatpush1.msra.mxu0 0.0
      %2047 = vmatprep.subr.mxu0 0.0
      %2048 = vmatpush1.msra.mxu0 0.0
      %2049 = vmatprep.subr.mxu0 0.0
      %2050 = vmatpush1.msra.mxu0 0.0
      %2051 = vmatprep.mubr.f32.mxu0 0.0
      %2052 = vmatmul.mubr.f32.gmra.mrb[0].mxu0 %v1976
      %v2053 = vpop.f32.mrb[0].mxu0
      %v2054 = vadd.f32 0.0, %v2053
      %v2055 = vpop.f32.mrb[0].mxu0
      %v2056 = vadd.f32 0.0, %v2055
      %2057 = vdwg.mxu0
      %2058 = vmatprep.subr.mxu0 0.0
      %2059 = vmatpush1.msra.mxu0 %v1985
      %2060 = vmatprep.subr.mxu0 0.0
      %2061 = vmatpush1.msra.mxu0 0.0
      %2062 = vmatprep.subr.mxu0 0.0
      %2063 = vmatpush1.msra.mxu0 0.0
      %2064 = vmatprep.subr.mxu0 0.0
      %2065 = vmatpush1.msra.mxu0 0.0
      %2066 = vmatprep.subr.mxu0 0.0
      %2067 = vmatpush1.msra.mxu0 0.0
      %2068 = vmatprep.subr.mxu0 0.0
      %2069 = vmatpush1.msra.mxu0 0.0
      %2070 = vmatprep.subr.mxu0 0.0
      %2071 = vmatpush1.msra.mxu0 0.0
      %2072 = vmatprep.subr.mxu0 0.0
      %2073 = vmatpush1.msra.mxu0 0.0
      %2074 = vmatprep.subr.mxu0 0.0
      %2075 = vmatpush1.msra.mxu0 0.0
      %2076 = vmatprep.subr.mxu0 0.0
      %2077 = vmatpush1.msra.mxu0 0.0
      %2078 = vmatprep.subr.mxu0 0.0
      %2079 = vmatpush1.msra.mxu0 0.0
      %2080 = vmatprep.subr.mxu0 0.0
      %2081 = vmatpush1.msra.mxu0 0.0
      %2082 = vmatprep.subr.mxu0 0.0
      %2083 = vmatpush1.msra.mxu0 0.0
      %2084 = vmatprep.subr.mxu0 0.0
      %2085 = vmatpush1.msra.mxu0 0.0
      %2086 = vmatprep.subr.mxu0 0.0
      %2087 = vmatpush1.msra.mxu0 0.0
      %2088 = vmatprep.subr.mxu0 0.0
      %2089 = vmatpush1.msra.mxu0 0.0
      %2090 = vmatprep.subr.mxu0 0.0
      %2091 = vmatpush1.msra.mxu0 0.0
      %2092 = vmatprep.subr.mxu0 0.0
      %2093 = vmatpush1.msra.mxu0 0.0
      %2094 = vmatprep.subr.mxu0 0.0
      %2095 = vmatpush1.msra.mxu0 0.0
      %2096 = vmatprep.subr.mxu0 0.0
      %2097 = vmatpush1.msra.mxu0 0.0
      %2098 = vmatprep.subr.mxu0 0.0
      %2099 = vmatpush1.msra.mxu0 0.0
      %2100 = vmatprep.subr.mxu0 0.0
      %2101 = vmatpush1.msra.mxu0 0.0
      %2102 = vmatprep.subr.mxu0 0.0
      %2103 = vmatpush1.msra.mxu0 0.0
      %2104 = vmatprep.subr.mxu0 0.0
      %2105 = vmatpush1.msra.mxu0 0.0
      %2106 = vmatprep.subr.mxu0 0.0
      %2107 = vmatpush1.msra.mxu0 0.0
      %2108 = vmatprep.subr.mxu0 0.0
      %2109 = vmatpush1.msra.mxu0 0.0
      %2110 = vmatprep.subr.mxu0 0.0
      %2111 = vmatpush1.msra.mxu0 0.0
      %2112 = vmatprep.subr.mxu0 0.0
      %2113 = vmatpush1.msra.mxu0 0.0
      %2114 = vmatprep.subr.mxu0 0.0
      %2115 = vmatpush1.msra.mxu0 0.0
      %2116 = vmatprep.subr.mxu0 0.0
      %2117 = vmatpush1.msra.mxu0 0.0
      %2118 = vmatprep.subr.mxu0 0.0
      %2119 = vmatpush1.msra.mxu0 0.0
      %2120 = vmatprep.subr.mxu0 0.0
      %2121 = vmatpush1.msra.mxu0 0.0
      %2122 = vmatprep.mubr.f32.mxu0 0.0
      %2123 = vmatmul.mubr.f32.gmra.mrb[0].mxu0 %v1976
      %v2124 = vpop.f32.mrb[0].mxu0
      %v2125 = vadd.f32 0.0, %v2124
      %v2126 = vpop.f32.mrb[0].mxu0
      %2127 = vdwg.mxu0
      %v2128 = vadd.f32 %v1961, %v2054
      %v2129 = vadd.f32 %v1962, %v2056
      %v2130 = vadd.f32 %v1963, %v2125
      %s2131 = scalar_lea.vmem %s3, 8
      %v2132 = vld [vmem:[%s2131] sm:$0xf]
      %2133 = vrot.lane.b32.xlu0 %v1786, 17
      %v2134 = vpop.permute.xlu0 %2133
      %2135 = vrot.lane.b32.xlu0 %v1787, 17
      %v2136 = vpop.permute.xlu0 %2135
      %2137 = vrot.lane.b32.xlu0 %v1788, 17
      %v2138 = vpop.permute.xlu0 %2137
      %v2139 = vsel %vm612, %v2136, %v2138
      %v2140 = vsel %vm612, %v2134, %v2136
      %v2141 = vsel %vm612, %v2138, %v2134
      %v2143 = vsel %vm278, %v2132, 0
      %v2146 = vsel %vm282, %v2141, 0
      %v2149 = vsel %vm282, %v2140, 0
      %v2152 = vsel %vm282, %v2139, 0
      %2154 = vmatprep.subr.mxu0 %v2149
      %2155 = vmatpush1.msra.mxu0 %v2146
      %2156 = vmatprep.subr.mxu0 0.0
      %2157 = vmatpush1.msra.mxu0 0.0
      %2158 = vmatprep.subr.mxu0 0.0
      %2159 = vmatpush1.msra.mxu0 0.0
      %2160 = vmatprep.subr.mxu0 0.0
      %2161 = vmatpush1.msra.mxu0 0.0
      %2162 = vmatprep.subr.mxu0 0.0
      %2163 = vmatpush1.msra.mxu0 0.0
      %2164 = vmatprep.subr.mxu0 0.0
      %2165 = vmatpush1.msra.mxu0 0.0
      %2166 = vmatprep.subr.mxu0 0.0
      %2167 = vmatpush1.msra.mxu0 0.0
      %2168 = vmatprep.subr.mxu0 0.0
      %2169 = vmatpush1.msra.mxu0 0.0
      %2170 = vmatprep.subr.mxu0 0.0
      %2171 = vmatpush1.msra.mxu0 0.0
      %2172 = vmatprep.subr.mxu0 0.0
      %2173 = vmatpush1.msra.mxu0 0.0
      %2174 = vmatprep.subr.mxu0 0.0
      %2175 = vmatpush1.msra.mxu0 0.0
      %2176 = vmatprep.subr.mxu0 0.0
      %2177 = vmatpush1.msra.mxu0 0.0
      %2178 = vmatprep.subr.mxu0 0.0
      %2179 = vmatpush1.msra.mxu0 0.0
      %2180 = vmatprep.subr.mxu0 0.0
      %2181 = vmatpush1.msra.mxu0 0.0
      %2182 = vmatprep.subr.mxu0 0.0
      %2183 = vmatpush1.msra.mxu0 0.0
      %2184 = vmatprep.subr.mxu0 0.0
      %2185 = vmatpush1.msra.mxu0 0.0
      %2186 = vmatprep.subr.mxu0 0.0
      %2187 = vmatpush1.msra.mxu0 0.0
      %2188 = vmatprep.subr.mxu0 0.0
      %2189 = vmatpush1.msra.mxu0 0.0
      %2190 = vmatprep.subr.mxu0 0.0
      %2191 = vmatpush1.msra.mxu0 0.0
      %2192 = vmatprep.subr.mxu0 0.0
      %2193 = vmatpush1.msra.mxu0 0.0
      %2194 = vmatprep.subr.mxu0 0.0
      %2195 = vmatpush1.msra.mxu0 0.0
      %2196 = vmatprep.subr.mxu0 0.0
      %2197 = vmatpush1.msra.mxu0 0.0
      %2198 = vmatprep.subr.mxu0 0.0
      %2199 = vmatpush1.msra.mxu0 0.0
      %2200 = vmatprep.subr.mxu0 0.0
      %2201 = vmatpush1.msra.mxu0 0.0
      %2202 = vmatprep.subr.mxu0 0.0
      %2203 = vmatpush1.msra.mxu0 0.0
      %2204 = vmatprep.subr.mxu0 0.0
      %2205 = vmatpush1.msra.mxu0 0.0
      %2206 = vmatprep.subr.mxu0 0.0
      %2207 = vmatpush1.msra.mxu0 0.0
      %2208 = vmatprep.subr.mxu0 0.0
      %2209 = vmatpush1.msra.mxu0 0.0
      %2210 = vmatprep.subr.mxu0 0.0
      %2211 = vmatpush1.msra.mxu0 0.0
      %2212 = vmatprep.subr.mxu0 0.0
      %2213 = vmatpush1.msra.mxu0 0.0
      %2214 = vmatprep.subr.mxu0 0.0
      %2215 = vmatpush1.msra.mxu0 0.0
      %2216 = vmatprep.subr.mxu0 0.0
      %2217 = vmatpush1.msra.mxu0 0.0
      %2218 = vmatprep.mubr.f32.mxu0 0.0
      %2219 = vmatmul.mubr.f32.gmra.mrb[0].mxu0 %v2143
      %v2220 = vpop.f32.mrb[0].mxu0
      %v2221 = vadd.f32 0.0, %v2220
      %v2222 = vpop.f32.mrb[0].mxu0
      %v2223 = vadd.f32 0.0, %v2222
      %2224 = vdwg.mxu0
      %2225 = vmatprep.subr.mxu0 0.0
      %2226 = vmatpush1.msra.mxu0 %v2152
      %2227 = vmatprep.subr.mxu0 0.0
      %2228 = vmatpush1.msra.mxu0 0.0
      %2229 = vmatprep.subr.mxu0 0.0
      %2230 = vmatpush1.msra.mxu0 0.0
      %2231 = vmatprep.subr.mxu0 0.0
      %2232 = vmatpush1.msra.mxu0 0.0
      %2233 = vmatprep.subr.mxu0 0.0
      %2234 = vmatpush1.msra.mxu0 0.0
      %2235 = vmatprep.subr.mxu0 0.0
      %2236 = vmatpush1.msra.mxu0 0.0
      %2237 = vmatprep.subr.mxu0 0.0
      %2238 = vmatpush1.msra.mxu0 0.0
      %2239 = vmatprep.subr.mxu0 0.0
      %2240 = vmatpush1.msra.mxu0 0.0
      %2241 = vmatprep.subr.mxu0 0.0
      %2242 = vmatpush1.msra.mxu0 0.0
      %2243 = vmatprep.subr.mxu0 0.0
      %2244 = vmatpush1.msra.mxu0 0.0
      %2245 = vmatprep.subr.mxu0 0.0
      %2246 = vmatpush1.msra.mxu0 0.0
      %2247 = vmatprep.subr.mxu0 0.0
      %2248 = vmatpush1.msra.mxu0 0.0
      %2249 = vmatprep.subr.mxu0 0.0
      %2250 = vmatpush1.msra.mxu0 0.0
      %2251 = vmatprep.subr.mxu0 0.0
      %2252 = vmatpush1.msra.mxu0 0.0
      %2253 = vmatprep.subr.mxu0 0.0
      %2254 = vmatpush1.msra.mxu0 0.0
      %2255 = vmatprep.subr.mxu0 0.0
      %2256 = vmatpush1.msra.mxu0 0.0
      %2257 = vmatprep.subr.mxu0 0.0
      %2258 = vmatpush1.msra.mxu0 0.0
      %2259 = vmatprep.subr.mxu0 0.0
      %2260 = vmatpush1.msra.mxu0 0.0
      %2261 = vmatprep.subr.mxu0 0.0
      %2262 = vmatpush1.msra.mxu0 0.0
      %2263 = vmatprep.subr.mxu0 0.0
      %2264 = vmatpush1.msra.mxu0 0.0
      %2265 = vmatprep.subr.mxu0 0.0
      %2266 = vmatpush1.msra.mxu0 0.0
      %2267 = vmatprep.subr.mxu0 0.0
      %2268 = vmatpush1.msra.mxu0 0.0
      %2269 = vmatprep.subr.mxu0 0.0
      %2270 = vmatpush1.msra.mxu0 0.0
      %2271 = vmatprep.subr.mxu0 0.0
      %2272 = vmatpush1.msra.mxu0 0.0
      %2273 = vmatprep.subr.mxu0 0.0
      %2274 = vmatpush1.msra.mxu0 0.0
      %2275 = vmatprep.subr.mxu0 0.0
      %2276 = vmatpush1.msra.mxu0 0.0
      %2277 = vmatprep.subr.mxu0 0.0
      %2278 = vmatpush1.msra.mxu0 0.0
      %2279 = vmatprep.subr.mxu0 0.0
      %2280 = vmatpush1.msra.mxu0 0.0
      %2281 = vmatprep.subr.mxu0 0.0
      %2282 = vmatpush1.msra.mxu0 0.0
      %2283 = vmatprep.subr.mxu0 0.0
      %2284 = vmatpush1.msra.mxu0 0.0
      %2285 = vmatprep.subr.mxu0 0.0
      %2286 = vmatpush1.msra.mxu0 0.0
      %2287 = vmatprep.subr.mxu0 0.0
      %2288 = vmatpush1.msra.mxu0 0.0
      %2289 = vmatprep.mubr.f32.mxu0 0.0
      %2290 = vmatmul.mubr.f32.gmra.mrb[0].mxu0 %v2143
      %v2291 = vpop.f32.mrb[0].mxu0
      %v2292 = vadd.f32 0.0, %v2291
      %v2293 = vpop.f32.mrb[0].mxu0
      %2294 = vdwg.mxu0
      %v2295 = vadd.f32 %v2128, %v2221
      %v2296 = vadd.f32 %v2129, %v2223
      %v2297 = vadd.f32 %v2130, %v2292
      %s2298 = scalar_lea.vmem %s3, 12
      %v2299 = vld [vmem:[%s2298] sm:$0xf]
      %2300 = vrot.lane.b32.xlu0 %v1786, 1
      %v2301 = vpop.permute.xlu0 %2300
      %2302 = vrot.lane.b32.xlu0 %v1787, 1
      %v2303 = vpop.permute.xlu0 %2302
      %2304 = vrot.lane.b32.xlu0 %v1788, 1
      %v2305 = vpop.permute.xlu0 %2304
      %v2306 = vsel %vm780, %v2303, %v2305
      %v2307 = vsel %vm780, %v2301, %v2303
      %v2308 = vsel %vm780, %v2305, %v2301
      %v2310 = vsel %vm278, %v2299, 0
      %v2313 = vsel %vm282, %v2308, 0
      %v2316 = vsel %vm282, %v2307, 0
      %v2319 = vsel %vm282, %v2306, 0
      %2321 = vmatprep.subr.mxu0 %v2316
      %2322 = vmatpush1.msra.mxu0 %v2313
      %2323 = vmatprep.subr.mxu0 0.0
      %2324 = vmatpush1.msra.mxu0 0.0
      %2325 = vmatprep.subr.mxu0 0.0
      %2326 = vmatpush1.msra.mxu0 0.0
      %2327 = vmatprep.subr.mxu0 0.0
      %2328 = vmatpush1.msra.mxu0 0.0
      %2329 = vmatprep.subr.mxu0 0.0
      %2330 = vmatpush1.msra.mxu0 0.0
      %2331 = vmatprep.subr.mxu0 0.0
      %2332 = vmatpush1.msra.mxu0 0.0
      %2333 = vmatprep.subr.mxu0 0.0
      %2334 = vmatpush1.msra.mxu0 0.0
      %2335 = vmatprep.subr.mxu0 0.0
      %2336 = vmatpush1.msra.mxu0 0.0
      %2337 = vmatprep.subr.mxu0 0.0
      %2338 = vmatpush1.msra.mxu0 0.0
      %2339 = vmatprep.subr.mxu0 0.0
      %2340 = vmatpush1.msra.mxu0 0.0
      %2341 = vmatprep.subr.mxu0 0.0
      %2342 = vmatpush1.msra.mxu0 0.0
      %2343 = vmatprep.subr.mxu0 0.0
      %2344 = vmatpush1.msra.mxu0 0.0
      %2345 = vmatprep.subr.mxu0 0.0
      %2346 = vmatpush1.msra.mxu0 0.0
      %2347 = vmatprep.subr.mxu0 0.0
      %2348 = vmatpush1.msra.mxu0 0.0
      %2349 = vmatprep.subr.mxu0 0.0
      %2350 = vmatpush1.msra.mxu0 0.0
      %2351 = vmatprep.subr.mxu0 0.0
      %2352 = vmatpush1.msra.mxu0 0.0
      %2353 = vmatprep.subr.mxu0 0.0
      %2354 = vmatpush1.msra.mxu0 0.0
      %2355 = vmatprep.subr.mxu0 0.0
      %2356 = vmatpush1.msra.mxu0 0.0
      %2357 = vmatprep.subr.mxu0 0.0
      %2358 = vmatpush1.msra.mxu0 0.0
      %2359 = vmatprep.subr.mxu0 0.0
      %2360 = vmatpush1.msra.mxu0 0.0
      %2361 = vmatprep.subr.mxu0 0.0
      %2362 = vmatpush1.msra.mxu0 0.0
      %2363 = vmatprep.subr.mxu0 0.0
      %2364 = vmatpush1.msra.mxu0 0.0
      %2365 = vmatprep.subr.mxu0 0.0
      %2366 = vmatpush1.msra.mxu0 0.0
      %2367 = vmatprep.subr.mxu0 0.0
      %2368 = vmatpush1.msra.mxu0 0.0
      %2369 = vmatprep.subr.mxu0 0.0
      %2370 = vmatpush1.msra.mxu0 0.0
      %2371 = vmatprep.subr.mxu0 0.0
      %2372 = vmatpush1.msra.mxu0 0.0
      %2373 = vmatprep.subr.mxu0 0.0
      %2374 = vmatpush1.msra.mxu0 0.0
      %2375 = vmatprep.subr.mxu0 0.0
      %2376 = vmatpush1.msra.mxu0 0.0
      %2377 = vmatprep.subr.mxu0 0.0
      %2378 = vmatpush1.msra.mxu0 0.0
      %2379 = vmatprep.subr.mxu0 0.0
      %2380 = vmatpush1.msra.mxu0 0.0
      %2381 = vmatprep.subr.mxu0 0.0
      %2382 = vmatpush1.msra.mxu0 0.0
      %2383 = vmatprep.subr.mxu0 0.0
      %2384 = vmatpush1.msra.mxu0 0.0
      %2385 = vmatprep.mubr.f32.mxu0 0.0
      %2386 = vmatmul.mubr.f32.gmra.mrb[0].mxu0 %v2310
      %v2387 = vpop.f32.mrb[0].mxu0
      %v2388 = vadd.f32 0.0, %v2387
      %v2389 = vpop.f32.mrb[0].mxu0
      %v2390 = vadd.f32 0.0, %v2389
      %2391 = vdwg.mxu0
      %2392 = vmatprep.subr.mxu0 0.0
      %2393 = vmatpush1.msra.mxu0 %v2319
      %2394 = vmatprep.subr.mxu0 0.0
      %2395 = vmatpush1.msra.mxu0 0.0
      %2396 = vmatprep.subr.mxu0 0.0
      %2397 = vmatpush1.msra.mxu0 0.0
      %2398 = vmatprep.subr.mxu0 0.0
      %2399 = vmatpush1.msra.mxu0 0.0
      %2400 = vmatprep.subr.mxu0 0.0
      %2401 = vmatpush1.msra.mxu0 0.0
      %2402 = vmatprep.subr.mxu0 0.0
      %2403 = vmatpush1.msra.mxu0 0.0
      %2404 = vmatprep.subr.mxu0 0.0
      %2405 = vmatpush1.msra.mxu0 0.0
      %2406 = vmatprep.subr.mxu0 0.0
      %2407 = vmatpush1.msra.mxu0 0.0
      %2408 = vmatprep.subr.mxu0 0.0
      %2409 = vmatpush1.msra.mxu0 0.0
      %2410 = vmatprep.subr.mxu0 0.0
      %2411 = vmatpush1.msra.mxu0 0.0
      %2412 = vmatprep.subr.mxu0 0.0
      %2413 = vmatpush1.msra.mxu0 0.0
      %2414 = vmatprep.subr.mxu0 0.0
      %2415 = vmatpush1.msra.mxu0 0.0
      %2416 = vmatprep.subr.mxu0 0.0
      %2417 = vmatpush1.msra.mxu0 0.0
      %2418 = vmatprep.subr.mxu0 0.0
      %2419 = vmatpush1.msra.mxu0 0.0
      %2420 = vmatprep.subr.mxu0 0.0
      %2421 = vmatpush1.msra.mxu0 0.0
      %2422 = vmatprep.subr.mxu0 0.0
      %2423 = vmatpush1.msra.mxu0 0.0
      %2424 = vmatprep.subr.mxu0 0.0
      %2425 = vmatpush1.msra.mxu0 0.0
      %2426 = vmatprep.subr.mxu0 0.0
      %2427 = vmatpush1.msra.mxu0 0.0
      %2428 = vmatprep.subr.mxu0 0.0
      %2429 = vmatpush1.msra.mxu0 0.0
      %2430 = vmatprep.subr.mxu0 0.0
      %2431 = vmatpush1.msra.mxu0 0.0
      %2432 = vmatprep.subr.mxu0 0.0
      %2433 = vmatpush1.msra.mxu0 0.0
      %2434 = vmatprep.subr.mxu0 0.0
      %2435 = vmatpush1.msra.mxu0 0.0
      %2436 = vmatprep.subr.mxu0 0.0
      %2437 = vmatpush1.msra.mxu0 0.0
      %2438 = vmatprep.subr.mxu0 0.0
      %2439 = vmatpush1.msra.mxu0 0.0
      %2440 = vmatprep.subr.mxu0 0.0
      %2441 = vmatpush1.msra.mxu0 0.0
      %2442 = vmatprep.subr.mxu0 0.0
      %2443 = vmatpush1.msra.mxu0 0.0
      %2444 = vmatprep.subr.mxu0 0.0
      %2445 = vmatpush1.msra.mxu0 0.0
      %2446 = vmatprep.subr.mxu0 0.0
      %2447 = vmatpush1.msra.mxu0 0.0
      %2448 = vmatprep.subr.mxu0 0.0
      %2449 = vmatpush1.msra.mxu0 0.0
      %2450 = vmatprep.subr.mxu0 0.0
      %2451 = vmatpush1.msra.mxu0 0.0
      %2452 = vmatprep.subr.mxu0 0.0
      %2453 = vmatpush1.msra.mxu0 0.0
      %2454 = vmatprep.subr.mxu0 0.0
      %2455 = vmatpush1.msra.mxu0 0.0
      %2456 = vmatprep.mubr.f32.mxu0 0.0
      %2457 = vmatmul.mubr.f32.gmra.mrb[0].mxu0 %v2310
      %v2458 = vpop.f32.mrb[0].mxu0
      %v2459 = vadd.f32 0.0, %v2458
      %v2460 = vpop.f32.mrb[0].mxu0
      %2461 = vdwg.mxu0
      %v2462 = vadd.f32 %v2295, %v2388
      %v2463 = vadd.f32 %v2296, %v2390
      %v2464 = vadd.f32 %v2297, %v2459
      %s2465 = scalar_lea.vmem %s3, 16
      %v2466 = vld [vmem:[%s2465] sm:$0xf]
      %v2468 = vsel %vm278, %v2466, 0
      %v2471 = vsel %vm282, %v1786, 0
      %v2474 = vsel %vm282, %v1787, 0
      %v2477 = vsel %vm282, %v1788, 0
      %2479 = vmatprep.subr.mxu0 %v2474
      %2480 = vmatpush1.msra.mxu0 %v2471
      %2481 = vmatprep.subr.mxu0 0.0
      %2482 = vmatpush1.msra.mxu0 0.0
      %2483 = vmatprep.subr.mxu0 0.0
      %2484 = vmatpush1.msra.mxu0 0.0
      %2485 = vmatprep.subr.mxu0 0.0
      %2486 = vmatpush1.msra.mxu0 0.0
      %2487 = vmatprep.subr.mxu0 0.0
      %2488 = vmatpush1.msra.mxu0 0.0
      %2489 = vmatprep.subr.mxu0 0.0
      %2490 = vmatpush1.msra.mxu0 0.0
      %2491 = vmatprep.subr.mxu0 0.0
      %2492 = vmatpush1.msra.mxu0 0.0
      %2493 = vmatprep.subr.mxu0 0.0
      %2494 = vmatpush1.msra.mxu0 0.0
      %2495 = vmatprep.subr.mxu0 0.0
      %2496 = vmatpush1.msra.mxu0 0.0
      %2497 = vmatprep.subr.mxu0 0.0
      %2498 = vmatpush1.msra.mxu0 0.0
      %2499 = vmatprep.subr.mxu0 0.0
      %2500 = vmatpush1.msra.mxu0 0.0
      %2501 = vmatprep.subr.mxu0 0.0
      %2502 = vmatpush1.msra.mxu0 0.0
      %2503 = vmatprep.subr.mxu0 0.0
      %2504 = vmatpush1.msra.mxu0 0.0
      %2505 = vmatprep.subr.mxu0 0.0
      %2506 = vmatpush1.msra.mxu0 0.0
      %2507 = vmatprep.subr.mxu0 0.0
      %2508 = vmatpush1.msra.mxu0 0.0
      %2509 = vmatprep.subr.mxu0 0.0
      %2510 = vmatpush1.msra.mxu0 0.0
      %2511 = vmatprep.subr.mxu0 0.0
      %2512 = vmatpush1.msra.mxu0 0.0
      %2513 = vmatprep.subr.mxu0 0.0
      %2514 = vmatpush1.msra.mxu0 0.0
      %2515 = vmatprep.subr.mxu0 0.0
      %2516 = vmatpush1.msra.mxu0 0.0
      %2517 = vmatprep.subr.mxu0 0.0
      %2518 = vmatpush1.msra.mxu0 0.0
      %2519 = vmatprep.subr.mxu0 0.0
      %2520 = vmatpush1.msra.mxu0 0.0
      %2521 = vmatprep.subr.mxu0 0.0
      %2522 = vmatpush1.msra.mxu0 0.0
      %2523 = vmatprep.subr.mxu0 0.0
      %2524 = vmatpush1.msra.mxu0 0.0
      %2525 = vmatprep.subr.mxu0 0.0
      %2526 = vmatpush1.msra.mxu0 0.0
      %2527 = vmatprep.subr.mxu0 0.0
      %2528 = vmatpush1.msra.mxu0 0.0
      %2529 = vmatprep.subr.mxu0 0.0
      %2530 = vmatpush1.msra.mxu0 0.0
      %2531 = vmatprep.subr.mxu0 0.0
      %2532 = vmatpush1.msra.mxu0 0.0
      %2533 = vmatprep.subr.mxu0 0.0
      %2534 = vmatpush1.msra.mxu0 0.0
      %2535 = vmatprep.subr.mxu0 0.0
      %2536 = vmatpush1.msra.mxu0 0.0
      %2537 = vmatprep.subr.mxu0 0.0
      %2538 = vmatpush1.msra.mxu0 0.0
      %2539 = vmatprep.subr.mxu0 0.0
      %2540 = vmatpush1.msra.mxu0 0.0
      %2541 = vmatprep.subr.mxu0 0.0
      %2542 = vmatpush1.msra.mxu0 0.0
      %2543 = vmatprep.mubr.f32.mxu0 0.0
      %2544 = vmatmul.mubr.f32.gmra.mrb[0].mxu0 %v2468
      %v2545 = vpop.f32.mrb[0].mxu0
      %v2546 = vadd.f32 0.0, %v2545
      %v2547 = vpop.f32.mrb[0].mxu0
      %v2548 = vadd.f32 0.0, %v2547
      %2549 = vdwg.mxu0
      %2550 = vmatprep.subr.mxu0 0.0
      %2551 = vmatpush1.msra.mxu0 %v2477
      %2552 = vmatprep.subr.mxu0 0.0
      %2553 = vmatpush1.msra.mxu0 0.0
      %2554 = vmatprep.subr.mxu0 0.0
      %2555 = vmatpush1.msra.mxu0 0.0
      %2556 = vmatprep.subr.mxu0 0.0
      %2557 = vmatpush1.msra.mxu0 0.0
      %2558 = vmatprep.subr.mxu0 0.0
      %2559 = vmatpush1.msra.mxu0 0.0
      %2560 = vmatprep.subr.mxu0 0.0
      %2561 = vmatpush1.msra.mxu0 0.0
      %2562 = vmatprep.subr.mxu0 0.0
      %2563 = vmatpush1.msra.mxu0 0.0
      %2564 = vmatprep.subr.mxu0 0.0
      %2565 = vmatpush1.msra.mxu0 0.0
      %2566 = vmatprep.subr.mxu0 0.0
      %2567 = vmatpush1.msra.mxu0 0.0
      %2568 = vmatprep.subr.mxu0 0.0
      %2569 = vmatpush1.msra.mxu0 0.0
      %2570 = vmatprep.subr.mxu0 0.0
      %2571 = vmatpush1.msra.mxu0 0.0
      %2572 = vmatprep.subr.mxu0 0.0
      %2573 = vmatpush1.msra.mxu0 0.0
      %2574 = vmatprep.subr.mxu0 0.0
      %2575 = vmatpush1.msra.mxu0 0.0
      %2576 = vmatprep.subr.mxu0 0.0
      %2577 = vmatpush1.msra.mxu0 0.0
      %2578 = vmatprep.subr.mxu0 0.0
      %2579 = vmatpush1.msra.mxu0 0.0
      %2580 = vmatprep.subr.mxu0 0.0
      %2581 = vmatpush1.msra.mxu0 0.0
      %2582 = vmatprep.subr.mxu0 0.0
      %2583 = vmatpush1.msra.mxu0 0.0
      %2584 = vmatprep.subr.mxu0 0.0
      %2585 = vmatpush1.msra.mxu0 0.0
      %2586 = vmatprep.subr.mxu0 0.0
      %2587 = vmatpush1.msra.mxu0 0.0
      %2588 = vmatprep.subr.mxu0 0.0
      %2589 = vmatpush1.msra.mxu0 0.0
      %2590 = vmatprep.subr.mxu0 0.0
      %2591 = vmatpush1.msra.mxu0 0.0
      %2592 = vmatprep.subr.mxu0 0.0
      %2593 = vmatpush1.msra.mxu0 0.0
      %2594 = vmatprep.subr.mxu0 0.0
      %2595 = vmatpush1.msra.mxu0 0.0
      %2596 = vmatprep.subr.mxu0 0.0
      %2597 = vmatpush1.msra.mxu0 0.0
      %2598 = vmatprep.subr.mxu0 0.0
      %2599 = vmatpush1.msra.mxu0 0.0
      %2600 = vmatprep.subr.mxu0 0.0
      %2601 = vmatpush1.msra.mxu0 0.0
      %2602 = vmatprep.subr.mxu0 0.0
      %2603 = vmatpush1.msra.mxu0 0.0
      %2604 = vmatprep.subr.mxu0 0.0
      %2605 = vmatpush1.msra.mxu0 0.0
      %2606 = vmatprep.subr.mxu0 0.0
      %2607 = vmatpush1.msra.mxu0 0.0
      %2608 = vmatprep.subr.mxu0 0.0
      %2609 = vmatpush1.msra.mxu0 0.0
      %2610 = vmatprep.subr.mxu0 0.0
      %2611 = vmatpush1.msra.mxu0 0.0
      %2612 = vmatprep.subr.mxu0 0.0
      %2613 = vmatpush1.msra.mxu0 0.0
      %2614 = vmatprep.mubr.f32.mxu0 0.0
      %2615 = vmatmul.mubr.f32.gmra.mrb[0].mxu0 %v2468
      %v2616 = vpop.f32.mrb[0].mxu0
      %v2617 = vadd.f32 0.0, %v2616
      %v2618 = vpop.f32.mrb[0].mxu0
      %2619 = vdwg.mxu0
      %v2620 = vadd.f32 %v2462, %v2546
      %v2621 = vadd.f32 %v2463, %v2548
      %v2622 = vadd.f32 %v2464, %v2617
      %s2623 = scalar_lea.vmem %s3, 20
      %v2624 = vld [vmem:[%s2623] sm:$0xf]
      %2625 = vrot.lane.b32.xlu0 %v1786, 127
      %v2626 = vpop.permute.xlu0 %2625
      %2627 = vrot.lane.b32.xlu0 %v1787, 127
      %v2628 = vpop.permute.xlu0 %2627
      %2629 = vrot.lane.b32.xlu0 %v1788, 127
      %v2630 = vpop.permute.xlu0 %2629
      %v2631 = vsel %vm1103, %v2628, %v2630
      %v2632 = vsel %vm1103, %v2626, %v2628
      %v2633 = vsel %vm1103, %v2630, %v2626
      %v2635 = vsel %vm278, %v2624, 0
      %v2638 = vsel %vm282, %v2632, 0
      %v2641 = vsel %vm282, %v2631, 0
      %v2644 = vsel %vm282, %v2633, 0
      %2646 = vmatprep.subr.mxu0 %v2641
      %2647 = vmatpush1.msra.mxu0 %v2638
      %2648 = vmatprep.subr.mxu0 0.0
      %2649 = vmatpush1.msra.mxu0 0.0
      %2650 = vmatprep.subr.mxu0 0.0
      %2651 = vmatpush1.msra.mxu0 0.0
      %2652 = vmatprep.subr.mxu0 0.0
      %2653 = vmatpush1.msra.mxu0 0.0
      %2654 = vmatprep.subr.mxu0 0.0
      %2655 = vmatpush1.msra.mxu0 0.0
      %2656 = vmatprep.subr.mxu0 0.0
      %2657 = vmatpush1.msra.mxu0 0.0
      %2658 = vmatprep.subr.mxu0 0.0
      %2659 = vmatpush1.msra.mxu0 0.0
      %2660 = vmatprep.subr.mxu0 0.0
      %2661 = vmatpush1.msra.mxu0 0.0
      %2662 = vmatprep.subr.mxu0 0.0
      %2663 = vmatpush1.msra.mxu0 0.0
      %2664 = vmatprep.subr.mxu0 0.0
      %2665 = vmatpush1.msra.mxu0 0.0
      %2666 = vmatprep.subr.mxu0 0.0
      %2667 = vmatpush1.msra.mxu0 0.0
      %2668 = vmatprep.subr.mxu0 0.0
      %2669 = vmatpush1.msra.mxu0 0.0
      %2670 = vmatprep.subr.mxu0 0.0
      %2671 = vmatpush1.msra.mxu0 0.0
      %2672 = vmatprep.subr.mxu0 0.0
      %2673 = vmatpush1.msra.mxu0 0.0
      %2674 = vmatprep.subr.mxu0 0.0
      %2675 = vmatpush1.msra.mxu0 0.0
      %2676 = vmatprep.subr.mxu0 0.0
      %2677 = vmatpush1.msra.mxu0 0.0
      %2678 = vmatprep.subr.mxu0 0.0
      %2679 = vmatpush1.msra.mxu0 0.0
      %2680 = vmatprep.subr.mxu0 0.0
      %2681 = vmatpush1.msra.mxu0 0.0
      %2682 = vmatprep.subr.mxu0 0.0
      %2683 = vmatpush1.msra.mxu0 0.0
      %2684 = vmatprep.subr.mxu0 0.0
      %2685 = vmatpush1.msra.mxu0 0.0
      %2686 = vmatprep.subr.mxu0 0.0
      %2687 = vmatpush1.msra.mxu0 0.0
      %2688 = vmatprep.subr.mxu0 0.0
      %2689 = vmatpush1.msra.mxu0 0.0
      %2690 = vmatprep.subr.mxu0 0.0
      %2691 = vmatpush1.msra.mxu0 0.0
      %2692 = vmatprep.subr.mxu0 0.0
      %2693 = vmatpush1.msra.mxu0 0.0
      %2694 = vmatprep.subr.mxu0 0.0
      %2695 = vmatpush1.msra.mxu0 0.0
      %2696 = vmatprep.subr.mxu0 0.0
      %2697 = vmatpush1.msra.mxu0 0.0
      %2698 = vmatprep.subr.mxu0 0.0
      %2699 = vmatpush1.msra.mxu0 0.0
      %2700 = vmatprep.subr.mxu0 0.0
      %2701 = vmatpush1.msra.mxu0 0.0
      %2702 = vmatprep.subr.mxu0 0.0
      %2703 = vmatpush1.msra.mxu0 0.0
      %2704 = vmatprep.subr.mxu0 0.0
      %2705 = vmatpush1.msra.mxu0 0.0
      %2706 = vmatprep.subr.mxu0 0.0
      %2707 = vmatpush1.msra.mxu0 0.0
      %2708 = vmatprep.subr.mxu0 0.0
      %2709 = vmatpush1.msra.mxu0 0.0
      %2710 = vmatprep.mubr.f32.mxu0 0.0
      %2711 = vmatmul.mubr.f32.gmra.mrb[0].mxu0 %v2635
      %v2712 = vpop.f32.mrb[0].mxu0
      %v2713 = vadd.f32 0.0, %v2712
      %v2714 = vpop.f32.mrb[0].mxu0
      %v2715 = vadd.f32 0.0, %v2714
      %2716 = vdwg.mxu0
      %2717 = vmatprep.subr.mxu0 0.0
      %2718 = vmatpush1.msra.mxu0 %v2644
      %2719 = vmatprep.subr.mxu0 0.0
      %2720 = vmatpush1.msra.mxu0 0.0
      %2721 = vmatprep.subr.mxu0 0.0
      %2722 = vmatpush1.msra.mxu0 0.0
      %2723 = vmatprep.subr.mxu0 0.0
      %2724 = vmatpush1.msra.mxu0 0.0
      %2725 = vmatprep.subr.mxu0 0.0
      %2726 = vmatpush1.msra.mxu0 0.0
      %2727 = vmatprep.subr.mxu0 0.0
      %2728 = vmatpush1.msra.mxu0 0.0
      %2729 = vmatprep.subr.mxu0 0.0
      %2730 = vmatpush1.msra.mxu0 0.0
      %2731 = vmatprep.subr.mxu0 0.0
      %2732 = vmatpush1.msra.mxu0 0.0
      %2733 = vmatprep.subr.mxu0 0.0
      %2734 = vmatpush1.msra.mxu0 0.0
      %2735 = vmatprep.subr.mxu0 0.0
      %2736 = vmatpush1.msra.mxu0 0.0
      %2737 = vmatprep.subr.mxu0 0.0
      %2738 = vmatpush1.msra.mxu0 0.0
      %2739 = vmatprep.subr.mxu0 0.0
      %2740 = vmatpush1.msra.mxu0 0.0
      %2741 = vmatprep.subr.mxu0 0.0
      %2742 = vmatpush1.msra.mxu0 0.0
      %2743 = vmatprep.subr.mxu0 0.0
      %2744 = vmatpush1.msra.mxu0 0.0
      %2745 = vmatprep.subr.mxu0 0.0
      %2746 = vmatpush1.msra.mxu0 0.0
      %2747 = vmatprep.subr.mxu0 0.0
      %2748 = vmatpush1.msra.mxu0 0.0
      %2749 = vmatprep.subr.mxu0 0.0
      %2750 = vmatpush1.msra.mxu0 0.0
      %2751 = vmatprep.subr.mxu0 0.0
      %2752 = vmatpush1.msra.mxu0 0.0
      %2753 = vmatprep.subr.mxu0 0.0
      %2754 = vmatpush1.msra.mxu0 0.0
      %2755 = vmatprep.subr.mxu0 0.0
      %2756 = vmatpush1.msra.mxu0 0.0
      %2757 = vmatprep.subr.mxu0 0.0
      %2758 = vmatpush1.msra.mxu0 0.0
      %2759 = vmatprep.subr.mxu0 0.0
      %2760 = vmatpush1.msra.mxu0 0.0
      %2761 = vmatprep.subr.mxu0 0.0
      %2762 = vmatpush1.msra.mxu0 0.0
      %2763 = vmatprep.subr.mxu0 0.0
      %2764 = vmatpush1.msra.mxu0 0.0
      %2765 = vmatprep.subr.mxu0 0.0
      %2766 = vmatpush1.msra.mxu0 0.0
      %2767 = vmatprep.subr.mxu0 0.0
      %2768 = vmatpush1.msra.mxu0 0.0
      %2769 = vmatprep.subr.mxu0 0.0
      %2770 = vmatpush1.msra.mxu0 0.0
      %2771 = vmatprep.subr.mxu0 0.0
      %2772 = vmatpush1.msra.mxu0 0.0
      %2773 = vmatprep.subr.mxu0 0.0
      %2774 = vmatpush1.msra.mxu0 0.0
      %2775 = vmatprep.subr.mxu0 0.0
      %2776 = vmatpush1.msra.mxu0 0.0
      %2777 = vmatprep.subr.mxu0 0.0
      %2778 = vmatpush1.msra.mxu0 0.0
      %2779 = vmatprep.subr.mxu0 0.0
      %2780 = vmatpush1.msra.mxu0 0.0
      %2781 = vmatprep.mubr.f32.mxu0 0.0
      %2782 = vmatmul.mubr.f32.gmra.mrb[0].mxu0 %v2635
      %v2783 = vpop.f32.mrb[0].mxu0
      %v2784 = vadd.f32 0.0, %v2783
      %v2785 = vpop.f32.mrb[0].mxu0
      %2786 = vdwg.mxu0
      %v2787 = vadd.f32 %v2620, %v2713
      %v2788 = vadd.f32 %v2621, %v2715
      %v2789 = vadd.f32 %v2622, %v2784
      %s2790 = scalar_lea.vmem %s3, 24
      %v2791 = vld [vmem:[%s2790] sm:$0xf]
      %2792 = vrot.lane.b32.xlu0 %v1786, 111
      %v2793 = vpop.permute.xlu0 %2792
      %2794 = vrot.lane.b32.xlu0 %v1787, 111
      %v2795 = vpop.permute.xlu0 %2794
      %2796 = vrot.lane.b32.xlu0 %v1788, 111
      %v2797 = vpop.permute.xlu0 %2796
      %v2798 = vsel %vm1271, %v2795, %v2797
      %v2799 = vsel %vm1271, %v2793, %v2795
      %v2800 = vsel %vm1271, %v2797, %v2793
      %v2802 = vsel %vm278, %v2791, 0
      %v2805 = vsel %vm282, %v2799, 0
      %v2808 = vsel %vm282, %v2798, 0
      %v2811 = vsel %vm282, %v2800, 0
      %2813 = vmatprep.subr.mxu0 %v2808
      %2814 = vmatpush1.msra.mxu0 %v2805
      %2815 = vmatprep.subr.mxu0 0.0
      %2816 = vmatpush1.msra.mxu0 0.0
      %2817 = vmatprep.subr.mxu0 0.0
      %2818 = vmatpush1.msra.mxu0 0.0
      %2819 = vmatprep.subr.mxu0 0.0
      %2820 = vmatpush1.msra.mxu0 0.0
      %2821 = vmatprep.subr.mxu0 0.0
      %2822 = vmatpush1.msra.mxu0 0.0
      %2823 = vmatprep.subr.mxu0 0.0
      %2824 = vmatpush1.msra.mxu0 0.0
      %2825 = vmatprep.subr.mxu0 0.0
      %2826 = vmatpush1.msra.mxu0 0.0
      %2827 = vmatprep.subr.mxu0 0.0
      %2828 = vmatpush1.msra.mxu0 0.0
      %2829 = vmatprep.subr.mxu0 0.0
      %2830 = vmatpush1.msra.mxu0 0.0
      %2831 = vmatprep.subr.mxu0 0.0
      %2832 = vmatpush1.msra.mxu0 0.0
      %2833 = vmatprep.subr.mxu0 0.0
      %2834 = vmatpush1.msra.mxu0 0.0
      %2835 = vmatprep.subr.mxu0 0.0
      %2836 = vmatpush1.msra.mxu0 0.0
      %2837 = vmatprep.subr.mxu0 0.0
      %2838 = vmatpush1.msra.mxu0 0.0
      %2839 = vmatprep.subr.mxu0 0.0
      %2840 = vmatpush1.msra.mxu0 0.0
      %2841 = vmatprep.subr.mxu0 0.0
      %2842 = vmatpush1.msra.mxu0 0.0
      %2843 = vmatprep.subr.mxu0 0.0
      %2844 = vmatpush1.msra.mxu0 0.0
      %2845 = vmatprep.subr.mxu0 0.0
      %2846 = vmatpush1.msra.mxu0 0.0
      %2847 = vmatprep.subr.mxu0 0.0
      %2848 = vmatpush1.msra.mxu0 0.0
      %2849 = vmatprep.subr.mxu0 0.0
      %2850 = vmatpush1.msra.mxu0 0.0
      %2851 = vmatprep.subr.mxu0 0.0
      %2852 = vmatpush1.msra.mxu0 0.0
      %2853 = vmatprep.subr.mxu0 0.0
      %2854 = vmatpush1.msra.mxu0 0.0
      %2855 = vmatprep.subr.mxu0 0.0
      %2856 = vmatpush1.msra.mxu0 0.0
      %2857 = vmatprep.subr.mxu0 0.0
      %2858 = vmatpush1.msra.mxu0 0.0
      %2859 = vmatprep.subr.mxu0 0.0
      %2860 = vmatpush1.msra.mxu0 0.0
      %2861 = vmatprep.subr.mxu0 0.0
      %2862 = vmatpush1.msra.mxu0 0.0
      %2863 = vmatprep.subr.mxu0 0.0
      %2864 = vmatpush1.msra.mxu0 0.0
      %2865 = vmatprep.subr.mxu0 0.0
      %2866 = vmatpush1.msra.mxu0 0.0
      %2867 = vmatprep.subr.mxu0 0.0
      %2868 = vmatpush1.msra.mxu0 0.0
      %2869 = vmatprep.subr.mxu0 0.0
      %2870 = vmatpush1.msra.mxu0 0.0
      %2871 = vmatprep.subr.mxu0 0.0
      %2872 = vmatpush1.msra.mxu0 0.0
      %2873 = vmatprep.subr.mxu0 0.0
      %2874 = vmatpush1.msra.mxu0 0.0
      %2875 = vmatprep.subr.mxu0 0.0
      %2876 = vmatpush1.msra.mxu0 0.0
      %2877 = vmatprep.mubr.f32.mxu0 0.0
      %2878 = vmatmul.mubr.f32.gmra.mrb[0].mxu0 %v2802
      %v2879 = vpop.f32.mrb[0].mxu0
      %v2880 = vadd.f32 0.0, %v2879
      %v2881 = vpop.f32.mrb[0].mxu0
      %v2882 = vadd.f32 0.0, %v2881
      %2883 = vdwg.mxu0
      %2884 = vmatprep.subr.mxu0 0.0
      %2885 = vmatpush1.msra.mxu0 %v2811
      %2886 = vmatprep.subr.mxu0 0.0
      %2887 = vmatpush1.msra.mxu0 0.0
      %2888 = vmatprep.subr.mxu0 0.0
      %2889 = vmatpush1.msra.mxu0 0.0
      %2890 = vmatprep.subr.mxu0 0.0
      %2891 = vmatpush1.msra.mxu0 0.0
      %2892 = vmatprep.subr.mxu0 0.0
      %2893 = vmatpush1.msra.mxu0 0.0
      %2894 = vmatprep.subr.mxu0 0.0
      %2895 = vmatpush1.msra.mxu0 0.0
      %2896 = vmatprep.subr.mxu0 0.0
      %2897 = vmatpush1.msra.mxu0 0.0
      %2898 = vmatprep.subr.mxu0 0.0
      %2899 = vmatpush1.msra.mxu0 0.0
      %2900 = vmatprep.subr.mxu0 0.0
      %2901 = vmatpush1.msra.mxu0 0.0
      %2902 = vmatprep.subr.mxu0 0.0
      %2903 = vmatpush1.msra.mxu0 0.0
      %2904 = vmatprep.subr.mxu0 0.0
      %2905 = vmatpush1.msra.mxu0 0.0
      %2906 = vmatprep.subr.mxu0 0.0
      %2907 = vmatpush1.msra.mxu0 0.0
      %2908 = vmatprep.subr.mxu0 0.0
      %2909 = vmatpush1.msra.mxu0 0.0
      %2910 = vmatprep.subr.mxu0 0.0
      %2911 = vmatpush1.msra.mxu0 0.0
      %2912 = vmatprep.subr.mxu0 0.0
      %2913 = vmatpush1.msra.mxu0 0.0
      %2914 = vmatprep.subr.mxu0 0.0
      %2915 = vmatpush1.msra.mxu0 0.0
      %2916 = vmatprep.subr.mxu0 0.0
      %2917 = vmatpush1.msra.mxu0 0.0
      %2918 = vmatprep.subr.mxu0 0.0
      %2919 = vmatpush1.msra.mxu0 0.0
      %2920 = vmatprep.subr.mxu0 0.0
      %2921 = vmatpush1.msra.mxu0 0.0
      %2922 = vmatprep.subr.mxu0 0.0
      %2923 = vmatpush1.msra.mxu0 0.0
      %2924 = vmatprep.subr.mxu0 0.0
      %2925 = vmatpush1.msra.mxu0 0.0
      %2926 = vmatprep.subr.mxu0 0.0
      %2927 = vmatpush1.msra.mxu0 0.0
      %2928 = vmatprep.subr.mxu0 0.0
      %2929 = vmatpush1.msra.mxu0 0.0
      %2930 = vmatprep.subr.mxu0 0.0
      %2931 = vmatpush1.msra.mxu0 0.0
      %2932 = vmatprep.subr.mxu0 0.0
      %2933 = vmatpush1.msra.mxu0 0.0
      %2934 = vmatprep.subr.mxu0 0.0
      %2935 = vmatpush1.msra.mxu0 0.0
      %2936 = vmatprep.subr.mxu0 0.0
      %2937 = vmatpush1.msra.mxu0 0.0
      %2938 = vmatprep.subr.mxu0 0.0
      %2939 = vmatpush1.msra.mxu0 0.0
      %2940 = vmatprep.subr.mxu0 0.0
      %2941 = vmatpush1.msra.mxu0 0.0
      %2942 = vmatprep.subr.mxu0 0.0
      %2943 = vmatpush1.msra.mxu0 0.0
      %2944 = vmatprep.subr.mxu0 0.0
      %2945 = vmatpush1.msra.mxu0 0.0
      %2946 = vmatprep.subr.mxu0 0.0
      %2947 = vmatpush1.msra.mxu0 0.0
      %2948 = vmatprep.mubr.f32.mxu0 0.0
      %2949 = vmatmul.mubr.f32.gmra.mrb[0].mxu0 %v2802
      %v2950 = vpop.f32.mrb[0].mxu0
      %v2951 = vadd.f32 0.0, %v2950
      %v2952 = vpop.f32.mrb[0].mxu0
      %2953 = vdwg.mxu0
      %v2954 = vadd.f32 %v2787, %v2880
      %v2955 = vadd.f32 %v2788, %v2882
      %v2956 = vadd.f32 %v2789, %v2951
      %s2957 = scalar_lea.vmem %s3, 28
      %v2958 = vld [vmem:[%s2957] sm:$0xf]
      %2959 = vrot.lane.b32.xlu0 %v1786, 110
      %v2960 = vpop.permute.xlu0 %2959
      %2961 = vrot.lane.b32.xlu0 %v1787, 110
      %v2962 = vpop.permute.xlu0 %2961
      %2963 = vrot.lane.b32.xlu0 %v1788, 110
      %v2964 = vpop.permute.xlu0 %2963
      %v2965 = vsel %vm1439, %v2962, %v2964
      %v2966 = vsel %vm1439, %v2960, %v2962
      %v2967 = vsel %vm1439, %v2964, %v2960
      %v2969 = vsel %vm278, %v2958, 0
      %v2972 = vsel %vm282, %v2966, 0
      %v2975 = vsel %vm282, %v2965, 0
      %v2978 = vsel %vm282, %v2967, 0
      %2980 = vmatprep.subr.mxu0 %v2975
      %2981 = vmatpush1.msra.mxu0 %v2972
      %2982 = vmatprep.subr.mxu0 0.0
      %2983 = vmatpush1.msra.mxu0 0.0
      %2984 = vmatprep.subr.mxu0 0.0
      %2985 = vmatpush1.msra.mxu0 0.0
      %2986 = vmatprep.subr.mxu0 0.0
      %2987 = vmatpush1.msra.mxu0 0.0
      %2988 = vmatprep.subr.mxu0 0.0
      %2989 = vmatpush1.msra.mxu0 0.0
      %2990 = vmatprep.subr.mxu0 0.0
      %2991 = vmatpush1.msra.mxu0 0.0
      %2992 = vmatprep.subr.mxu0 0.0
      %2993 = vmatpush1.msra.mxu0 0.0
      %2994 = vmatprep.subr.mxu0 0.0
      %2995 = vmatpush1.msra.mxu0 0.0
      %2996 = vmatprep.subr.mxu0 0.0
      %2997 = vmatpush1.msra.mxu0 0.0
      %2998 = vmatprep.subr.mxu0 0.0
      %2999 = vmatpush1.msra.mxu0 0.0
      %3000 = vmatprep.subr.mxu0 0.0
      %3001 = vmatpush1.msra.mxu0 0.0
      %3002 = vmatprep.subr.mxu0 0.0
      %3003 = vmatpush1.msra.mxu0 0.0
      %3004 = vmatprep.subr.mxu0 0.0
      %3005 = vmatpush1.msra.mxu0 0.0
      %3006 = vmatprep.subr.mxu0 0.0
      %3007 = vmatpush1.msra.mxu0 0.0
      %3008 = vmatprep.subr.mxu0 0.0
      %3009 = vmatpush1.msra.mxu0 0.0
      %3010 = vmatprep.subr.mxu0 0.0
      %3011 = vmatpush1.msra.mxu0 0.0
      %3012 = vmatprep.subr.mxu0 0.0
      %3013 = vmatpush1.msra.mxu0 0.0
      %3014 = vmatprep.subr.mxu0 0.0
      %3015 = vmatpush1.msra.mxu0 0.0
      %3016 = vmatprep.subr.mxu0 0.0
      %3017 = vmatpush1.msra.mxu0 0.0
      %3018 = vmatprep.subr.mxu0 0.0
      %3019 = vmatpush1.msra.mxu0 0.0
      %3020 = vmatprep.subr.mxu0 0.0
      %3021 = vmatpush1.msra.mxu0 0.0
      %3022 = vmatprep.subr.mxu0 0.0
      %3023 = vmatpush1.msra.mxu0 0.0
      %3024 = vmatprep.subr.mxu0 0.0
      %3025 = vmatpush1.msra.mxu0 0.0
      %3026 = vmatprep.subr.mxu0 0.0
      %3027 = vmatpush1.msra.mxu0 0.0
      %3028 = vmatprep.subr.mxu0 0.0
      %3029 = vmatpush1.msra.mxu0 0.0
      %3030 = vmatprep.subr.mxu0 0.0
      %3031 = vmatpush1.msra.mxu0 0.0
      %3032 = vmatprep.subr.mxu0 0.0
      %3033 = vmatpush1.msra.mxu0 0.0
      %3034 = vmatprep.subr.mxu0 0.0
      %3035 = vmatpush1.msra.mxu0 0.0
      %3036 = vmatprep.subr.mxu0 0.0
      %3037 = vmatpush1.msra.mxu0 0.0
      %3038 = vmatprep.subr.mxu0 0.0
      %3039 = vmatpush1.msra.mxu0 0.0
      %3040 = vmatprep.subr.mxu0 0.0
      %3041 = vmatpush1.msra.mxu0 0.0
      %3042 = vmatprep.subr.mxu0 0.0
      %3043 = vmatpush1.msra.mxu0 0.0
      %3044 = vmatprep.mubr.f32.mxu0 0.0
      %3045 = vmatmul.mubr.f32.gmra.mrb[0].mxu0 %v2969
      %v3046 = vpop.f32.mrb[0].mxu0
      %v3047 = vadd.f32 0.0, %v3046
      %v3048 = vpop.f32.mrb[0].mxu0
      %v3049 = vadd.f32 0.0, %v3048
      %3050 = vdwg.mxu0
      %3051 = vmatprep.subr.mxu0 0.0
      %3052 = vmatpush1.msra.mxu0 %v2978
      %3053 = vmatprep.subr.mxu0 0.0
      %3054 = vmatpush1.msra.mxu0 0.0
      %3055 = vmatprep.subr.mxu0 0.0
      %3056 = vmatpush1.msra.mxu0 0.0
      %3057 = vmatprep.subr.mxu0 0.0
      %3058 = vmatpush1.msra.mxu0 0.0
      %3059 = vmatprep.subr.mxu0 0.0
      %3060 = vmatpush1.msra.mxu0 0.0
      %3061 = vmatprep.subr.mxu0 0.0
      %3062 = vmatpush1.msra.mxu0 0.0
      %3063 = vmatprep.subr.mxu0 0.0
      %3064 = vmatpush1.msra.mxu0 0.0
      %3065 = vmatprep.subr.mxu0 0.0
      %3066 = vmatpush1.msra.mxu0 0.0
      %3067 = vmatprep.subr.mxu0 0.0
      %3068 = vmatpush1.msra.mxu0 0.0
      %3069 = vmatprep.subr.mxu0 0.0
      %3070 = vmatpush1.msra.mxu0 0.0
      %3071 = vmatprep.subr.mxu0 0.0
      %3072 = vmatpush1.msra.mxu0 0.0
      %3073 = vmatprep.subr.mxu0 0.0
      %3074 = vmatpush1.msra.mxu0 0.0
      %3075 = vmatprep.subr.mxu0 0.0
      %3076 = vmatpush1.msra.mxu0 0.0
      %3077 = vmatprep.subr.mxu0 0.0
      %3078 = vmatpush1.msra.mxu0 0.0
      %3079 = vmatprep.subr.mxu0 0.0
      %3080 = vmatpush1.msra.mxu0 0.0
      %3081 = vmatprep.subr.mxu0 0.0
      %3082 = vmatpush1.msra.mxu0 0.0
      %3083 = vmatprep.subr.mxu0 0.0
      %3084 = vmatpush1.msra.mxu0 0.0
      %3085 = vmatprep.subr.mxu0 0.0
      %3086 = vmatpush1.msra.mxu0 0.0
      %3087 = vmatprep.subr.mxu0 0.0
      %3088 = vmatpush1.msra.mxu0 0.0
      %3089 = vmatprep.subr.mxu0 0.0
      %3090 = vmatpush1.msra.mxu0 0.0
      %3091 = vmatprep.subr.mxu0 0.0
      %3092 = vmatpush1.msra.mxu0 0.0
      %3093 = vmatprep.subr.mxu0 0.0
      %3094 = vmatpush1.msra.mxu0 0.0
      %3095 = vmatprep.subr.mxu0 0.0
      %3096 = vmatpush1.msra.mxu0 0.0
      %3097 = vmatprep.subr.mxu0 0.0
      %3098 = vmatpush1.msra.mxu0 0.0
      %3099 = vmatprep.subr.mxu0 0.0
      %3100 = vmatpush1.msra.mxu0 0.0
      %3101 = vmatprep.subr.mxu0 0.0
      %3102 = vmatpush1.msra.mxu0 0.0
      %3103 = vmatprep.subr.mxu0 0.0
      %3104 = vmatpush1.msra.mxu0 0.0
      %3105 = vmatprep.subr.mxu0 0.0
      %3106 = vmatpush1.msra.mxu0 0.0
      %3107 = vmatprep.subr.mxu0 0.0
      %3108 = vmatpush1.msra.mxu0 0.0
      %3109 = vmatprep.subr.mxu0 0.0
      %3110 = vmatpush1.msra.mxu0 0.0
      %3111 = vmatprep.subr.mxu0 0.0
      %3112 = vmatpush1.msra.mxu0 0.0
      %3113 = vmatprep.subr.mxu0 0.0
      %3114 = vmatpush1.msra.mxu0 0.0
      %3115 = vmatprep.mubr.f32.mxu0 0.0
      %3116 = vmatmul.mubr.f32.gmra.mrb[0].mxu0 %v2969
      %v3117 = vpop.f32.mrb[0].mxu0
      %v3118 = vadd.f32 0.0, %v3117
      %v3119 = vpop.f32.mrb[0].mxu0
      %3120 = vdwg.mxu0
      %v3121 = vadd.f32 %v2954, %v3047
      %v3122 = vadd.f32 %v2955, %v3049
      %v3123 = vadd.f32 %v2956, %v3118
      %s3124 = scalar_lea.vmem %s3, 32
      %v3125 = vld [vmem:[%s3124] sm:$0xf]
      %3126 = vrot.lane.b32.xlu0 %v1786, 109
      %v3127 = vpop.permute.xlu0 %3126
      %3128 = vrot.lane.b32.xlu0 %v1787, 109
      %v3129 = vpop.permute.xlu0 %3128
      %3130 = vrot.lane.b32.xlu0 %v1788, 109
      %v3131 = vpop.permute.xlu0 %3130
      %v3132 = vsel %vm1607, %v3129, %v3131
      %v3133 = vsel %vm1607, %v3127, %v3129
      %v3134 = vsel %vm1607, %v3131, %v3127
      %v3136 = vsel %vm278, %v3125, 0
      %v3139 = vsel %vm282, %v3133, 0
      %v3142 = vsel %vm282, %v3132, 0
      %v3145 = vsel %vm282, %v3134, 0
      %3147 = vmatprep.subr.mxu0 %v3142
      %3148 = vmatpush1.msra.mxu0 %v3139
      %3149 = vmatprep.subr.mxu0 0.0
      %3150 = vmatpush1.msra.mxu0 0.0
      %3151 = vmatprep.subr.mxu0 0.0
      %3152 = vmatpush1.msra.mxu0 0.0
      %3153 = vmatprep.subr.mxu0 0.0
      %3154 = vmatpush1.msra.mxu0 0.0
      %3155 = vmatprep.subr.mxu0 0.0
      %3156 = vmatpush1.msra.mxu0 0.0
      %3157 = vmatprep.subr.mxu0 0.0
      %3158 = vmatpush1.msra.mxu0 0.0
      %3159 = vmatprep.subr.mxu0 0.0
      %3160 = vmatpush1.msra.mxu0 0.0
      %3161 = vmatprep.subr.mxu0 0.0
      %3162 = vmatpush1.msra.mxu0 0.0
      %3163 = vmatprep.subr.mxu0 0.0
      %3164 = vmatpush1.msra.mxu0 0.0
      %3165 = vmatprep.subr.mxu0 0.0
      %3166 = vmatpush1.msra.mxu0 0.0
      %3167 = vmatprep.subr.mxu0 0.0
      %3168 = vmatpush1.msra.mxu0 0.0
      %3169 = vmatprep.subr.mxu0 0.0
      %3170 = vmatpush1.msra.mxu0 0.0
      %3171 = vmatprep.subr.mxu0 0.0
      %3172 = vmatpush1.msra.mxu0 0.0
      %3173 = vmatprep.subr.mxu0 0.0
      %3174 = vmatpush1.msra.mxu0 0.0
      %3175 = vmatprep.subr.mxu0 0.0
      %3176 = vmatpush1.msra.mxu0 0.0
      %3177 = vmatprep.subr.mxu0 0.0
      %3178 = vmatpush1.msra.mxu0 0.0
      %3179 = vmatprep.subr.mxu0 0.0
      %3180 = vmatpush1.msra.mxu0 0.0
      %3181 = vmatprep.subr.mxu0 0.0
      %3182 = vmatpush1.msra.mxu0 0.0
      %3183 = vmatprep.subr.mxu0 0.0
      %3184 = vmatpush1.msra.mxu0 0.0
      %3185 = vmatprep.subr.mxu0 0.0
      %3186 = vmatpush1.msra.mxu0 0.0
      %3187 = vmatprep.subr.mxu0 0.0
      %3188 = vmatpush1.msra.mxu0 0.0
      %3189 = vmatprep.subr.mxu0 0.0
      %3190 = vmatpush1.msra.mxu0 0.0
      %3191 = vmatprep.subr.mxu0 0.0
      %3192 = vmatpush1.msra.mxu0 0.0
      %3193 = vmatprep.subr.mxu0 0.0
      %3194 = vmatpush1.msra.mxu0 0.0
      %3195 = vmatprep.subr.mxu0 0.0
      %3196 = vmatpush1.msra.mxu0 0.0
      %3197 = vmatprep.subr.mxu0 0.0
      %3198 = vmatpush1.msra.mxu0 0.0
      %3199 = vmatprep.subr.mxu0 0.0
      %3200 = vmatpush1.msra.mxu0 0.0
      %3201 = vmatprep.subr.mxu0 0.0
      %3202 = vmatpush1.msra.mxu0 0.0
      %3203 = vmatprep.subr.mxu0 0.0
      %3204 = vmatpush1.msra.mxu0 0.0
      %3205 = vmatprep.subr.mxu0 0.0
      %3206 = vmatpush1.msra.mxu0 0.0
      %3207 = vmatprep.subr.mxu0 0.0
      %3208 = vmatpush1.msra.mxu0 0.0
      %3209 = vmatprep.subr.mxu0 0.0
      %3210 = vmatpush1.msra.mxu0 0.0
      %3211 = vmatprep.mubr.f32.mxu0 0.0
      %3212 = vmatmul.mubr.f32.gmra.mrb[0].mxu0 %v3136
      %v3213 = vpop.f32.mrb[0].mxu0
      %v3214 = vadd.f32 0.0, %v3213
      %v3215 = vpop.f32.mrb[0].mxu0
      %v3216 = vadd.f32 0.0, %v3215
      %3217 = vdwg.mxu0
      %3218 = vmatprep.subr.mxu0 0.0
      %3219 = vmatpush1.msra.mxu0 %v3145
      %3220 = vmatprep.subr.mxu0 0.0
      %3221 = vmatpush1.msra.mxu0 0.0
      %3222 = vmatprep.subr.mxu0 0.0
      %3223 = vmatpush1.msra.mxu0 0.0
      %3224 = vmatprep.subr.mxu0 0.0
      %3225 = vmatpush1.msra.mxu0 0.0
      %3226 = vmatprep.subr.mxu0 0.0
      %3227 = vmatpush1.msra.mxu0 0.0
      %3228 = vmatprep.subr.mxu0 0.0
      %3229 = vmatpush1.msra.mxu0 0.0
      %3230 = vmatprep.subr.mxu0 0.0
      %3231 = vmatpush1.msra.mxu0 0.0
      %3232 = vmatprep.subr.mxu0 0.0
      %3233 = vmatpush1.msra.mxu0 0.0
      %3234 = vmatprep.subr.mxu0 0.0
      %3235 = vmatpush1.msra.mxu0 0.0
      %3236 = vmatprep.subr.mxu0 0.0
      %3237 = vmatpush1.msra.mxu0 0.0
      %3238 = vmatprep.subr.mxu0 0.0
      %3239 = vmatpush1.msra.mxu0 0.0
      %3240 = vmatprep.subr.mxu0 0.0
      %3241 = vmatpush1.msra.mxu0 0.0
      %3242 = vmatprep.subr.mxu0 0.0
      %3243 = vmatpush1.msra.mxu0 0.0
      %3244 = vmatprep.subr.mxu0 0.0
      %3245 = vmatpush1.msra.mxu0 0.0
      %3246 = vmatprep.subr.mxu0 0.0
      %3247 = vmatpush1.msra.mxu0 0.0
      %3248 = vmatprep.subr.mxu0 0.0
      %3249 = vmatpush1.msra.mxu0 0.0
      %3250 = vmatprep.subr.mxu0 0.0
      %3251 = vmatpush1.msra.mxu0 0.0
      %3252 = vmatprep.subr.mxu0 0.0
      %3253 = vmatpush1.msra.mxu0 0.0
      %3254 = vmatprep.subr.mxu0 0.0
      %3255 = vmatpush1.msra.mxu0 0.0
      %3256 = vmatprep.subr.mxu0 0.0
      %3257 = vmatpush1.msra.mxu0 0.0
      %3258 = vmatprep.subr.mxu0 0.0
      %3259 = vmatpush1.msra.mxu0 0.0
      %3260 = vmatprep.subr.mxu0 0.0
      %3261 = vmatpush1.msra.mxu0 0.0
      %3262 = vmatprep.subr.mxu0 0.0
      %3263 = vmatpush1.msra.mxu0 0.0
      %3264 = vmatprep.subr.mxu0 0.0
      %3265 = vmatpush1.msra.mxu0 0.0
      %3266 = vmatprep.subr.mxu0 0.0
      %3267 = vmatpush1.msra.mxu0 0.0
      %3268 = vmatprep.subr.mxu0 0.0
      %3269 = vmatpush1.msra.mxu0 0.0
      %3270 = vmatprep.subr.mxu0 0.0
      %3271 = vmatpush1.msra.mxu0 0.0
      %3272 = vmatprep.subr.mxu0 0.0
      %3273 = vmatpush1.msra.mxu0 0.0
      %3274 = vmatprep.subr.mxu0 0.0
      %3275 = vmatpush1.msra.mxu0 0.0
      %3276 = vmatprep.subr.mxu0 0.0
      %3277 = vmatpush1.msra.mxu0 0.0
      %3278 = vmatprep.subr.mxu0 0.0
      %3279 = vmatpush1.msra.mxu0 0.0
      %3280 = vmatprep.subr.mxu0 0.0
      %3281 = vmatpush1.msra.mxu0 0.0
      %3282 = vmatprep.mubr.f32.mxu0 0.0
      %3283 = vmatmul.mubr.f32.gmra.mrb[0].mxu0 %v3136
      %v3284 = vpop.f32.mrb[0].mxu0
      %v3285 = vadd.f32 0.0, %v3284
      %v3286 = vpop.f32.mrb[0].mxu0
      %3287 = vdwg.mxu0
      %v3288 = vadd.f32 %v3121, %v3214
      %v3289 = vadd.f32 %v3122, %v3216
      %v3290 = vadd.f32 %v3123, %v3285
      %v3291 = vmax.f32 %v3288, 0.0
      %v3292 = vmax.f32 %v3289, 0.0
      %v3293 = vmax.f32 %v3290, 0.0
      %v3296 = vcombine.low %v3291, %v3292
      %3298 = vst [vmem:[%s251] sm:$0xff] %v3296
      %3299 = vst [vmem:[%s251 + $0x8] sm:$0xf] %v3293
      %p3300 = scmp.lt.s32.totalorder %s17, 1
      %s3301 = scalar_select %p3300, %s17, 1
      %s3302 = smul.addr %s3301, 3
      %s3303 = smul.addr %s3302, 4
      %s3304 = scalar_lea.vmem %s6, %s3303
      // Predicated region
      $region45: #{basic_block_forward.1} parent=43 // pred_check
        %p3305 = pneg %p166
      $region46: #{basic_block_forward.1} parent=43 // pred_check_branch
        %3307 = sbr.rel (%p3305) target = $region48
      $region47: #{basic_block_forward.1} parent=43 // pred_region
        _
      $region48: #{basic_block_forward.1} parent=43 // pred_fallthru
        _
    $region44: #{basic_block_forward.1} parent=5 // pred_fallthru
      _
    %p3308 = scmp.le.s32.totalorder 2, %s12
    // Predicated region
    $region49: #{basic_block_forward.1} parent=5 // pred_check
      %p3309 = pneg %p3308
    $region50: #{basic_block_forward.1} parent=5 // pred_check_branch
      %3311 = sbr.rel (%p3309) target = $region52
    $region51: #{basic_block_forward.1} parent=5 // pred_region
      %s3312 = ssub.s32 %s12, 2
      // Predicated region
      $region53: #{basic_block_forward.1} parent=51 // pred_check
        %p3313 = pneg %p172
      $region54: #{basic_block_forward.1} parent=51 // pred_check_branch
        %3315 = sbr.rel (%p3313) target = $region56
      $region55: #{basic_block_forward.1} parent=51 // pred_region
        %p3316 = scmp.lt.s32.totalorder %s18, 1
        %s3317 = scalar_select %p3316, %s18, 1
        %s3318 = smul.addr %s3317, 3
        %s3319 = smul.addr %s3318, 4
        %s3320 = scalar_lea.vmem %s6, %s3319
      $region56: #{basic_block_forward.1} parent=51 // pred_fallthru
        _
    $region52: #{basic_block_forward.1} parent=5 // pred_fallthru
      _
  $region6: #{basic_block_forward.1} parent=0 // loop_footer
    %s16 = sadd.s32 1, %s12
  $region7: #{basic_block_forward.1} parent=0 // loop_footer_branch
    %11 = sbr.rel target = $region3
  $region8: #{basic_block_forward.1} parent=0 // loop_exit
    _

</llo_original>
